<compile_context>
chip_gen: v7x
topology: tpu7x:2x2x1
jax: 0.10.0
libtpu: 0.0.40
codegen_flags: <defaults>
</compile_context>

<pallas_src>
import functools
import math

import jax
import jax.numpy as jnp
from jax import lax
from jax.experimental import pallas as pl
from jax.experimental.pallas import tpu as pltpu


# --------------------------------------------------------------------------
# Parameter packing (one-time, outside the hot path)
# --------------------------------------------------------------------------
def _conv_tap_matrices(conv_w, num_heads, kh, kw, ph):
    """conv_w: OIHW [dk, dk, kh, kw] -> block-banded [kw*D, D] tap matrix.

    A[j*D + hin*dk + ci, hout*dk + co] = conv_w[co, ci, hin - hout + ph, j]
    (zero when the head offset falls outside the kernel -> implicit zero pad
    along the "head" spatial axis of the conv).
    """
    dk = conv_w.shape[0]
    zeros = jnp.zeros((dk, dk), conv_w.dtype)
    taps = []
    for j in range(kw):
        rows = []
        for hin in range(num_heads):
            blocks = []
            for hout in range(num_heads):
                i = hin - hout + ph
                blocks.append(conv_w[:, :, i, j].T if 0 <= i < kh else zeros)
            rows.append(jnp.concatenate(blocks, axis=1))
        taps.append(jnp.concatenate(rows, axis=0))
    return jnp.concatenate(taps, axis=0)                      # [kw*D, D]


def pack_params(params, num_heads, kernel_size):
    kernel_size = kernel_size if isinstance(kernel_size, tuple) else (1, kernel_size)
    kh, kw = kernel_size
    ph = (kh - 1) // 2
    D = params["fa_wq"].shape[0]
    dk = D // num_heads
    scale = 1.0 / math.sqrt(dk)
    return {
        "conv_A": _conv_tap_matrices(params["conv_w"], num_heads, kh, kw, ph),
        "conv_b": jnp.tile(params["conv_b"], num_heads).reshape(1, D),
        "factor_embeds": params["factor_embeds"],              # [F, D] (no B bcast)
        # x2 -> [fa_k | fa_v | oa_q * 1/sqrt(dk)]
        "x_proj_w": jnp.concatenate(
            [params["fa_wk"], params["fa_wv"], params["oa_wq"] * scale], axis=1),
        # e  -> [fa_q * 1/sqrt(dk) | oa_k]
        "e_proj_w": jnp.concatenate(
            [params["fa_wq"] * scale, params["oa_wk"]], axis=1),
        "fa_wo": params["fa_wo"],
        "fa_bo": params["fa_bo"].reshape(1, D),
        "oa_wv": params["oa_wv"],
        "oa_wo": params["oa_wo"],
        "oa_bo": params["oa_bo"].reshape(1, D),
    }


# --------------------------------------------------------------------------
# Fused kernel: conv + factor attention + output attention
# --------------------------------------------------------------------------
def _fused_kernel(xt_ref, e_ref, convA_ref, convb_ref, xw_ref, ew_ref,
                  fa_wo_ref, fa_bo_ref, oa_wv_ref, oa_wo_ref, oa_bo_ref,
                  o_ref, *, B, L, D, H, dk, F, query_factors):
    f32 = jnp.float32

    # ---- Conv2d as one im2col matmul with block-banded tap weights ----
    x2 = (jnp.dot(xt_ref[...].astype(f32), convA_ref[...].astype(f32),
                  preferred_element_type=f32)
          + convb_ref[...].astype(f32))                        # [B*L, D]

    # ---- Packed projections (batch flattened into M) ----
    xP = jnp.dot(x2, xw_ref[...].astype(f32),
                 preferred_element_type=f32)                   # [B*L, 3D]
    eP = jnp.dot(e_ref[...].astype(f32), ew_ref[...].astype(f32),
                 preferred_element_type=f32)                   # [F, 2D]
    fa_k, fa_v, oa_q = xP[:, :D], xP[:, D:2 * D], xP[:, 2 * D:]
    fa_q = eP[:, :D]                                           # pre-scaled

    def _softmax_rows(s):
        # Exact softmax (max-subtract + true divide); the approximate EUP
        # reciprocal was dropped to stay within the verification tolerance.
        s = s - jnp.max(s, axis=-1, keepdims=True)
        p = jnp.exp(s)
        return p / jnp.sum(p, axis=-1, keepdims=True)

    # ---- MHA #1: ekv = Attn(q=factors, k=x2, v=x2) ----
    ctx1 = []
    for b in range(B):                                         # static unroll
        rows = slice(b * L, (b + 1) * L)
        heads = []
        for h in range(H):
            cols = slice(h * dk, (h + 1) * dk)
            s = lax.dot_general(fa_q[:, cols], fa_k[rows, cols],
                                (((1,), (1,)), ((), ())),
                                preferred_element_type=f32)    # [F, L]
            p = _softmax_rows(s)
            heads.append(jnp.dot(p, fa_v[rows, cols],
                                 preferred_element_type=f32))  # [F, dk]
        ctx1.append(jnp.concatenate(heads, axis=1))            # [F, D]
    ctx1 = jnp.concatenate(ctx1, axis=0)                       # [B*F, D]
    ekv = (jnp.dot(ctx1, fa_wo_ref[...].astype(f32), preferred_element_type=f32)
           + fa_bo_ref[...].astype(f32))                       # [B*F, D]

    # ---- MHA #2: out = Attn(q=x2, k=factors (or ekv), v=ekv) ----
    vp = jnp.dot(ekv, oa_wv_ref[...].astype(f32),
                 preferred_element_type=f32)                   # [B*F, D]
    if query_factors:
        k2 = eP[:, D:]                                         # [F, D] (shared)
    else:
        k2 = jnp.dot(ekv, ew_ref[...].astype(f32)[:, D:],
                     preferred_element_type=f32)               # [B*F, D]

    ctx2 = [[] for _ in range(B)]
    for h in range(H):
        cols = slice(h * dk, (h + 1) * dk)
        if query_factors:
            # keys are batch independent -> flatten batch into M
            s = lax.dot_general(oa_q[:, cols], k2[:, cols],
                                (((1,), (1,)), ((), ())),
                                preferred_element_type=f32)    # [B*L, F]
            p = _softmax_rows(s)
            for b in range(B):
                ctx2[b].append(jnp.dot(p[b * L:(b + 1) * L, :],
                                       vp[b * F:(b + 1) * F, cols],
                                       preferred_element_type=f32))   # [L, dk]
        else:
            for b in range(B):
                s = lax.dot_general(oa_q[b * L:(b + 1) * L, cols],
                                    k2[b * F:(b + 1) * F, cols],
                                    (((1,), (1,)), ((), ())),
                                    preferred_element_type=f32)       # [L, F]
                p = _softmax_rows(s)
                ctx2[b].append(jnp.dot(p, vp[b * F:(b + 1) * F, cols],
                                       preferred_element_type=f32))
    ctx2 = jnp.concatenate([jnp.concatenate(c, axis=1) for c in ctx2],
                           axis=0)                             # [B*L, D]
    out = (jnp.dot(ctx2, oa_wo_ref[...].astype(f32), preferred_element_type=f32)
           + oa_bo_ref[...].astype(f32))
    o_ref[...] = out.astype(o_ref.dtype)


# --------------------------------------------------------------------------
# Forward wrapper
# --------------------------------------------------------------------------
def conv_factor_self_attention(x, packed, num_heads, kernel_size,
                               query_factors=True):
    kernel_size = kernel_size if isinstance(kernel_size, tuple) else (1, kernel_size)
    kh, kw = kernel_size
    assert kh % 2 == 1 and kw % 2 == 1, "kernel_size must be odd numbers"
    B, L, D = x.shape
    dk = D // num_heads
    F = packed["factor_embeds"].shape[0]
    pw = (kw - 1) // 2

    # im2col along the length axis (layout plumbing only): [B*L, kw*D]
    xp = jnp.pad(x, ((0, 0), (pw, pw), (0, 0)))
    x_taps = jnp.concatenate(
        [xp[:, j:j + L, :].reshape(B * L, D) for j in range(kw)], axis=-1)

    kern = functools.partial(_fused_kernel, B=B, L=L, D=D, H=num_heads,
                             dk=dk, F=F, query_factors=query_factors)
    vmem = pl.BlockSpec(memory_space=pltpu.MemorySpace.VMEM)   # whole array in VMEM
    out_flat = pl.pallas_call(
        kern,
        out_shape=jax.ShapeDtypeStruct((B * L, D), x.dtype),
        in_specs=[vmem] * 11,
        out_specs=vmem,
    )(x_taps, packed["factor_embeds"], packed["conv_A"], packed["conv_b"],
      packed["x_proj_w"], packed["e_proj_w"], packed["fa_wo"], packed["fa_bo"],
      packed["oa_wv"], packed["oa_wo"], packed["oa_bo"])
    return out_flat.reshape(B, L, D)


# --------------------------------------------------------------------------
# Pure-JAX reference (mirrors the PyTorch forward) for verification
# --------------------------------------------------------------------------
def _mha_ref(q, k, v, wq, wk, wv, wo, bo, num_heads):
    B, Lq, _ = q.shape
    D = wq.shape[1]
    dk = D // num_heads
    qp, kp, vp = q @ wq, k @ wk, v @ wv
    qh = qp.reshape(B, Lq, num_heads, dk).transpose(0, 2, 1, 3)
    kh = kp.reshape(B, -1, num_heads, dk).transpose(0, 2, 1, 3)
    vh = vp.reshape(B, -1, num_heads, dk).transpose(0, 2, 1, 3)
    s = jnp.einsum("bhqd,bhkd->bhqk", qh, kh) / math.sqrt(dk)
    w = jax.nn.softmax(s, axis=-1)
    ctx = jnp.einsum("bhqk,bhkd->bhqd", w, vh)
    ctx = ctx.transpose(0, 2, 1, 3).reshape(B, Lq, D)
    return ctx @ wo + bo


def _model_ref(x, params, num_heads, kernel_size, query_factors=True):
    B, L, D = x.shape
    dk = D // num_heads
    xc = x.reshape(B, L, num_heads, dk).transpose(0, 3, 2, 1)        # NCHW
    yc = lax.conv_general_dilated(
        xc, params["conv_w"], (1, 1), "SAME",
        dimension_numbers=("NCHW", "OIHW", "NCHW"))
    yc = yc + params["conv_b"][None, :, None, None]
    x2 = yc.transpose(0, 3, 2, 1).reshape(B, L, D)
    e = jnp.broadcast_to(params["factor_embeds"][None],
                         (B,) + params["factor_embeds"].shape)
    ekv = _mha_ref(e, x2, x2, params["fa_wq"], params["fa_wk"],
                   params["fa_wv"], params["fa_wo"], params["fa_bo"], num_heads)
    k_in = e if query_factors else ekv
    return _mha_ref(x2, k_in, ekv, params["oa_wq"], params["oa_wk"],
                    params["oa_wv"], params["oa_wo"], params["oa_bo"], num_heads)


# --------------------------------------------------------------------------
if __name__ == "__main__":
    embed_dim = 32
    num_heads = 4
    kernel_size = (1, 3)        # torch int kernel_size=3 -> (1, 3)
    factor_num = 8
    B, L = 2, 16
    d_k = embed_dim // num_heads

    key = jax.random.PRNGKey(0)
    ks = jax.random.split(key, 13)

    def rnd(k, shape, fan_in):
        return jax.random.normal(k, shape, jnp.float32) / math.sqrt(fan_in)

    # Deterministic synthetic parameters (Linear weights stored as [in, out]).
    conv_w = rnd(ks[0], (d_k, d_k, kernel_size[0], kernel_size[1]),
                 d_k * kernel_size[0] * kernel_size[1])          # OIHW
    params = {
        "conv_w": conv_w,
        "conv_b": rnd(ks[1], (d_k,), d_k),
        "factor_embeds": rnd(ks[2], (factor_num, embed_dim), embed_dim),
        # factor_attn (MHA #1): biasless q/k/v projections, biased out_proj
        "fa_wq": rnd(ks[3], (embed_dim, embed_dim), embed_dim),
        "fa_wk": rnd(ks[4], (embed_dim, embed_dim), embed_dim),
        "fa_wv": rnd(ks[5], (embed_dim, embed_dim), embed_dim),
        "fa_wo": rnd(ks[6], (embed_dim, embed_dim), embed_dim),
        "fa_bo": rnd(ks[7], (embed_dim,), embed_dim),
        # output_attn (MHA #2)
        "oa_wq": rnd(ks[8], (embed_dim, embed_dim), embed_dim),
        "oa_wk": rnd(ks[9], (embed_dim, embed_dim), embed_dim),
        "oa_wv": rnd(ks[10], (embed_dim, embed_dim), embed_dim),
        "oa_wo": rnd(ks[11], (embed_dim, embed_dim), embed_dim),
        "oa_bo": rnd(ks[12], (embed_dim,), embed_dim),
    }

    x = jax.random.normal(jax.random.PRNGKey(1), (B, L, embed_dim), jnp.float32)

    packed = pack_params(params, num_heads, kernel_size)
    fwd = jax.jit(functools.partial(conv_factor_self_attention,
                                    num_heads=num_heads,
                                    kernel_size=kernel_size,
                                    query_factors=True))
    out = jax.block_until_ready(fwd(x, packed))

    ref = _model_ref(x, params, num_heads, kernel_size, query_factors=True)
    assert out.shape == (B, L, embed_dim)
    # Tolerance: with default TPU matmul precision the f32 dots (kernel and
    # XLA reference alike) are computed via bf16 MXU passes; the two graphs
    # round differently, so a few e-3 absolute divergence is expected on this
    # O(1)-magnitude output.  1.5e-2 gives >4x margin over the observed error
    # while still catching any real semantic bug (those are O(0.1+)).
    max_err = float(jnp.max(jnp.abs(out - ref)))
    assert max_err < 1.5e-2, max_err

    print("KERNEL_OK")
</pallas_src>

<mosaic_0001>
module attributes {stable_mosaic.version = 11 : i64} {
  func.func @_fused_kernel(%arg0: memref<32x96xf32, #tpu.memory_space<vmem>>, %arg1: memref<8x32xf32, #tpu.memory_space<vmem>>, %arg2: memref<96x32xf32, #tpu.memory_space<vmem>>, %arg3: memref<1x32xf32, #tpu.memory_space<vmem>>, %arg4: memref<32x96xf32, #tpu.memory_space<vmem>>, %arg5: memref<32x64xf32, #tpu.memory_space<vmem>>, %arg6: memref<32x32xf32, #tpu.memory_space<vmem>>, %arg7: memref<1x32xf32, #tpu.memory_space<vmem>>, %arg8: memref<32x32xf32, #tpu.memory_space<vmem>>, %arg9: memref<32x32xf32, #tpu.memory_space<vmem>>, %arg10: memref<1x32xf32, #tpu.memory_space<vmem>>, %arg11: memref<32x32xf32, #tpu.memory_space<vmem>>) attributes {dimension_semantics = [], scalar_prefetch = 0 : i64, scratch_operands = 0 : i64, tpu.core_type = #tpu.core_type<tc>} {
    %c0 = arith.constant 0 : index
    %c0_0 = arith.constant 0 : index
    %0 = vector.load %arg0[%c0, %c0_0] : memref<32x96xf32, #tpu.memory_space<vmem>>, vector<32x96xf32>
    %c0_1 = arith.constant 0 : index
    %c0_2 = arith.constant 0 : index
    %1 = vector.load %arg2[%c0_1, %c0_2] : memref<96x32xf32, #tpu.memory_space<vmem>>, vector<96x32xf32>
    %cst = arith.constant dense<0.000000e+00> : vector<32x32xf32>
    %2 = tpu.matmul %0, %1, %cst {dimension_numbers = #tpu.dot_dimension_numbers<[1], [0], [0], [1], [0, 0, 1, 1], [], []>} : vector<32x96xf32>, vector<96x32xf32>, vector<32x32xf32> -> vector<32x32xf32>
    %c0_3 = arith.constant 0 : index
    %c0_4 = arith.constant 0 : index
    %3 = vector.load %arg3[%c0_3, %c0_4] : memref<1x32xf32, #tpu.memory_space<vmem>>, vector<1x32xf32>
    %4 = vector.broadcast %3 : vector<1x32xf32> to vector<32x32xf32>
    %5 = arith.addf %2, %4 : vector<32x32xf32>
    %c0_5 = arith.constant 0 : index
    %c0_6 = arith.constant 0 : index
    %6 = vector.load %arg4[%c0_5, %c0_6] : memref<32x96xf32, #tpu.memory_space<vmem>>, vector<32x96xf32>
    %cst_7 = arith.constant dense<0.000000e+00> : vector<32x96xf32>
    %7 = tpu.matmul %5, %6, %cst_7 {dimension_numbers = #tpu.dot_dimension_numbers<[1], [0], [0], [1], [0, 0, 1, 1], [], []>} : vector<32x32xf32>, vector<32x96xf32>, vector<32x96xf32> -> vector<32x96xf32>
    %c0_8 = arith.constant 0 : index
    %c0_9 = arith.constant 0 : index
    %8 = vector.load %arg1[%c0_8, %c0_9] : memref<8x32xf32, #tpu.memory_space<vmem>>, vector<8x32xf32>
    %c0_10 = arith.constant 0 : index
    %c0_11 = arith.constant 0 : index
    %9 = vector.load %arg5[%c0_10, %c0_11] : memref<32x64xf32, #tpu.memory_space<vmem>>, vector<32x64xf32>
    %cst_12 = arith.constant dense<0.000000e+00> : vector<8x64xf32>
    %10 = tpu.matmul %8, %9, %cst_12 {dimension_numbers = #tpu.dot_dimension_numbers<[1], [0], [0], [1], [0, 0, 1, 1], [], []>} : vector<8x32xf32>, vector<32x64xf32>, vector<8x64xf32> -> vector<8x64xf32>
    %11 = vector.extract_strided_slice %7 {offsets = [0, 0], sizes = [32, 32], strides = [1, 1]} : vector<32x96xf32> to vector<32x32xf32>
    %12 = vector.extract_strided_slice %7 {offsets = [0, 32], sizes = [32, 32], strides = [1, 1]} : vector<32x96xf32> to vector<32x32xf32>
    %13 = vector.extract_strided_slice %7 {offsets = [0, 64], sizes = [32, 32], strides = [1, 1]} : vector<32x96xf32> to vector<32x32xf32>
    %14 = vector.extract_strided_slice %10 {offsets = [0, 0], sizes = [8, 32], strides = [1, 1]} : vector<8x64xf32> to vector<8x32xf32>
    %15 = vector.extract_strided_slice %14 {offsets = [0, 0], sizes = [8, 8], strides = [1, 1]} : vector<8x32xf32> to vector<8x8xf32>
    %16 = vector.extract_strided_slice %11 {offsets = [0, 0], sizes = [16, 8], strides = [1, 1]} : vector<32x32xf32> to vector<16x8xf32>
    %cst_13 = arith.constant dense<0.000000e+00> : vector<8x16xf32>
    %17 = tpu.matmul %15, %16, %cst_13 {dimension_numbers = #tpu.dot_dimension_numbers<[1], [1], [0], [0], [0, 0, 1, 0], [], []>} : vector<8x8xf32>, vector<16x8xf32>, vector<8x16xf32> -> vector<8x16xf32>
    %cst_14 = arith.constant dense<0xFF800000> : vector<8xf32>
    %18 = vector.multi_reduction <maximumf>, %17, %cst_14 [1] : vector<8x16xf32> to vector<8xf32>
    %19 = vector.shape_cast %18 : vector<8xf32> to vector<8x1xf32>
    %20 = vector.broadcast %19 : vector<8x1xf32> to vector<8x16xf32>
    %21 = arith.subf %17, %20 : vector<8x16xf32>
    %22 = math.exp %21 : vector<8x16xf32>
    %cst_15 = arith.constant dense<0.000000e+00> : vector<8xf32>
    %23 = vector.multi_reduction <add>, %22, %cst_15 [1] : vector<8x16xf32> to vector<8xf32>
    %24 = vector.shape_cast %23 : vector<8xf32> to vector<8x1xf32>
    %25 = vector.broadcast %24 : vector<8x1xf32> to vector<8x16xf32>
    %26 = arith.divf %22, %25 : vector<8x16xf32>
    %27 = vector.extract_strided_slice %12 {offsets = [0, 0], sizes = [16, 8], strides = [1, 1]} : vector<32x32xf32> to vector<16x8xf32>
    %cst_16 = arith.constant dense<0.000000e+00> : vector<8x8xf32>
    %28 = tpu.matmul %26, %27, %cst_16 {dimension_numbers = #tpu.dot_dimension_numbers<[1], [0], [0], [1], [0, 0, 1, 1], [], []>} : vector<8x16xf32>, vector<16x8xf32>, vector<8x8xf32> -> vector<8x8xf32>
    %29 = vector.extract_strided_slice %14 {offsets = [0, 8], sizes = [8, 8], strides = [1, 1]} : vector<8x32xf32> to vector<8x8xf32>
    %30 = vector.extract_strided_slice %11 {offsets = [0, 8], sizes = [16, 8], strides = [1, 1]} : vector<32x32xf32> to vector<16x8xf32>
    %cst_17 = arith.constant dense<0.000000e+00> : vector<8x16xf32>
    %31 = tpu.matmul %29, %30, %cst_17 {dimension_numbers = #tpu.dot_dimension_numbers<[1], [1], [0], [0], [0, 0, 1, 0], [], []>} : vector<8x8xf32>, vector<16x8xf32>, vector<8x16xf32> -> vector<8x16xf32>
    %cst_18 = arith.constant dense<0xFF800000> : vector<8xf32>
    %32 = vector.multi_reduction <maximumf>, %31, %cst_18 [1] : vector<8x16xf32> to vector<8xf32>
    %33 = vector.shape_cast %32 : vector<8xf32> to vector<8x1xf32>
    %34 = vector.broadcast %33 : vector<8x1xf32> to vector<8x16xf32>
    %35 = arith.subf %31, %34 : vector<8x16xf32>
    %36 = math.exp %35 : vector<8x16xf32>
    %cst_19 = arith.constant dense<0.000000e+00> : vector<8xf32>
    %37 = vector.multi_reduction <add>, %36, %cst_19 [1] : vector<8x16xf32> to vector<8xf32>
    %38 = vector.shape_cast %37 : vector<8xf32> to vector<8x1xf32>
    %39 = vector.broadcast %38 : vector<8x1xf32> to vector<8x16xf32>
    %40 = arith.divf %36, %39 : vector<8x16xf32>
    %41 = vector.extract_strided_slice %12 {offsets = [0, 8], sizes = [16, 8], strides = [1, 1]} : vector<32x32xf32> to vector<16x8xf32>
    %cst_20 = arith.constant dense<0.000000e+00> : vector<8x8xf32>
    %42 = tpu.matmul %40, %41, %cst_20 {dimension_numbers = #tpu.dot_dimension_numbers<[1], [0], [0], [1], [0, 0, 1, 1], [], []>} : vector<8x16xf32>, vector<16x8xf32>, vector<8x8xf32> -> vector<8x8xf32>
    %43 = vector.extract_strided_slice %14 {offsets = [0, 16], sizes = [8, 8], strides = [1, 1]} : vector<8x32xf32> to vector<8x8xf32>
    %44 = vector.extract_strided_slice %11 {offsets = [0, 16], sizes = [16, 8], strides = [1, 1]} : vector<32x32xf32> to vector<16x8xf32>
    %cst_21 = arith.constant dense<0.000000e+00> : vector<8x16xf32>
    %45 = tpu.matmul %43, %44, %cst_21 {dimension_numbers = #tpu.dot_dimension_numbers<[1], [1], [0], [0], [0, 0, 1, 0], [], []>} : vector<8x8xf32>, vector<16x8xf32>, vector<8x16xf32> -> vector<8x16xf32>
    %cst_22 = arith.constant dense<0xFF800000> : vector<8xf32>
    %46 = vector.multi_reduction <maximumf>, %45, %cst_22 [1] : vector<8x16xf32> to vector<8xf32>
    %47 = vector.shape_cast %46 : vector<8xf32> to vector<8x1xf32>
    %48 = vector.broadcast %47 : vector<8x1xf32> to vector<8x16xf32>
    %49 = arith.subf %45, %48 : vector<8x16xf32>
    %50 = math.exp %49 : vector<8x16xf32>
    %cst_23 = arith.constant dense<0.000000e+00> : vector<8xf32>
    %51 = vector.multi_reduction <add>, %50, %cst_23 [1] : vector<8x16xf32> to vector<8xf32>
    %52 = vector.shape_cast %51 : vector<8xf32> to vector<8x1xf32>
    %53 = vector.broadcast %52 : vector<8x1xf32> to vector<8x16xf32>
    %54 = arith.divf %50, %53 : vector<8x16xf32>
    %55 = vector.extract_strided_slice %12 {offsets = [0, 16], sizes = [16, 8], strides = [1, 1]} : vector<32x32xf32> to vector<16x8xf32>
    %cst_24 = arith.constant dense<0.000000e+00> : vector<8x8xf32>
    %56 = tpu.matmul %54, %55, %cst_24 {dimension_numbers = #tpu.dot_dimension_numbers<[1], [0], [0], [1], [0, 0, 1, 1], [], []>} : vector<8x16xf32>, vector<16x8xf32>, vector<8x8xf32> -> vector<8x8xf32>
    %57 = vector.extract_strided_slice %14 {offsets = [0, 24], sizes = [8, 8], strides = [1, 1]} : vector<8x32xf32> to vector<8x8xf32>
    %58 = vector.extract_strided_slice %11 {offsets = [0, 24], sizes = [16, 8], strides = [1, 1]} : vector<32x32xf32> to vector<16x8xf32>
    %cst_25 = arith.constant dense<0.000000e+00> : vector<8x16xf32>
    %59 = tpu.matmul %57, %58, %cst_25 {dimension_numbers = #tpu.dot_dimension_numbers<[1], [1], [0], [0], [0, 0, 1, 0], [], []>} : vector<8x8xf32>, vector<16x8xf32>, vector<8x16xf32> -> vector<8x16xf32>
    %cst_26 = arith.constant dense<0xFF800000> : vector<8xf32>
    %60 = vector.multi_reduction <maximumf>, %59, %cst_26 [1] : vector<8x16xf32> to vector<8xf32>
    %61 = vector.shape_cast %60 : vector<8xf32> to vector<8x1xf32>
    %62 = vector.broadcast %61 : vector<8x1xf32> to vector<8x16xf32>
    %63 = arith.subf %59, %62 : vector<8x16xf32>
    %64 = math.exp %63 : vector<8x16xf32>
    %cst_27 = arith.constant dense<0.000000e+00> : vector<8xf32>
    %65 = vector.multi_reduction <add>, %64, %cst_27 [1] : vector<8x16xf32> to vector<8xf32>
    %66 = vector.shape_cast %65 : vector<8xf32> to vector<8x1xf32>
    %67 = vector.broadcast %66 : vector<8x1xf32> to vector<8x16xf32>
    %68 = arith.divf %64, %67 : vector<8x16xf32>
    %69 = vector.extract_strided_slice %12 {offsets = [0, 24], sizes = [16, 8], strides = [1, 1]} : vector<32x32xf32> to vector<16x8xf32>
    %cst_28 = arith.constant dense<0.000000e+00> : vector<8x8xf32>
    %70 = tpu.matmul %68, %69, %cst_28 {dimension_numbers = #tpu.dot_dimension_numbers<[1], [0], [0], [1], [0, 0, 1, 1], [], []>} : vector<8x16xf32>, vector<16x8xf32>, vector<8x8xf32> -> vector<8x8xf32>
    %71 = tpu.concatenate %28, %42, %56, %70 in 1 : vector<8x8xf32>, vector<8x8xf32>, vector<8x8xf32>, vector<8x8xf32> -> vector<8x32xf32>
    %72 = vector.extract_strided_slice %14 {offsets = [0, 0], sizes = [8, 8], strides = [1, 1]} : vector<8x32xf32> to vector<8x8xf32>
    %73 = vector.extract_strided_slice %11 {offsets = [16, 0], sizes = [16, 8], strides = [1, 1]} : vector<32x32xf32> to vector<16x8xf32>
    %cst_29 = arith.constant dense<0.000000e+00> : vector<8x16xf32>
    %74 = tpu.matmul %72, %73, %cst_29 {dimension_numbers = #tpu.dot_dimension_numbers<[1], [1], [0], [0], [0, 0, 1, 0], [], []>} : vector<8x8xf32>, vector<16x8xf32>, vector<8x16xf32> -> vector<8x16xf32>
    %cst_30 = arith.constant dense<0xFF800000> : vector<8xf32>
    %75 = vector.multi_reduction <maximumf>, %74, %cst_30 [1] : vector<8x16xf32> to vector<8xf32>
    %76 = vector.shape_cast %75 : vector<8xf32> to vector<8x1xf32>
    %77 = vector.broadcast %76 : vector<8x1xf32> to vector<8x16xf32>
    %78 = arith.subf %74, %77 : vector<8x16xf32>
    %79 = math.exp %78 : vector<8x16xf32>
    %cst_31 = arith.constant dense<0.000000e+00> : vector<8xf32>
    %80 = vector.multi_reduction <add>, %79, %cst_31 [1] : vector<8x16xf32> to vector<8xf32>
    %81 = vector.shape_cast %80 : vector<8xf32> to vector<8x1xf32>
    %82 = vector.broadcast %81 : vector<8x1xf32> to vector<8x16xf32>
    %83 = arith.divf %79, %82 : vector<8x16xf32>
    %84 = vector.extract_strided_slice %12 {offsets = [16, 0], sizes = [16, 8], strides = [1, 1]} : vector<32x32xf32> to vector<16x8xf32>
    %cst_32 = arith.constant dense<0.000000e+00> : vector<8x8xf32>
    %85 = tpu.matmul %83, %84, %cst_32 {dimension_numbers = #tpu.dot_dimension_numbers<[1], [0], [0], [1], [0, 0, 1, 1], [], []>} : vector<8x16xf32>, vector<16x8xf32>, vector<8x8xf32> -> vector<8x8xf32>
    %86 = vector.extract_strided_slice %14 {offsets = [0, 8], sizes = [8, 8], strides = [1, 1]} : vector<8x32xf32> to vector<8x8xf32>
    %87 = vector.extract_strided_slice %11 {offsets = [16, 8], sizes = [16, 8], strides = [1, 1]} : vector<32x32xf32> to vector<16x8xf32>
    %cst_33 = arith.constant dense<0.000000e+00> : vector<8x16xf32>
    %88 = tpu.matmul %86, %87, %cst_33 {dimension_numbers = #tpu.dot_dimension_numbers<[1], [1], [0], [0], [0, 0, 1, 0], [], []>} : vector<8x8xf32>, vector<16x8xf32>, vector<8x16xf32> -> vector<8x16xf32>
    %cst_34 = arith.constant dense<0xFF800000> : vector<8xf32>
    %89 = vector.multi_reduction <maximumf>, %88, %cst_34 [1] : vector<8x16xf32> to vector<8xf32>
    %90 = vector.shape_cast %89 : vector<8xf32> to vector<8x1xf32>
    %91 = vector.broadcast %90 : vector<8x1xf32> to vector<8x16xf32>
    %92 = arith.subf %88, %91 : vector<8x16xf32>
    %93 = math.exp %92 : vector<8x16xf32>
    %cst_35 = arith.constant dense<0.000000e+00> : vector<8xf32>
    %94 = vector.multi_reduction <add>, %93, %cst_35 [1] : vector<8x16xf32> to vector<8xf32>
    %95 = vector.shape_cast %94 : vector<8xf32> to vector<8x1xf32>
    %96 = vector.broadcast %95 : vector<8x1xf32> to vector<8x16xf32>
    %97 = arith.divf %93, %96 : vector<8x16xf32>
    %98 = vector.extract_strided_slice %12 {offsets = [16, 8], sizes = [16, 8], strides = [1, 1]} : vector<32x32xf32> to vector<16x8xf32>
    %cst_36 = arith.constant dense<0.000000e+00> : vector<8x8xf32>
    %99 = tpu.matmul %97, %98, %cst_36 {dimension_numbers = #tpu.dot_dimension_numbers<[1], [0], [0], [1], [0, 0, 1, 1], [], []>} : vector<8x16xf32>, vector<16x8xf32>, vector<8x8xf32> -> vector<8x8xf32>
    %100 = vector.extract_strided_slice %14 {offsets = [0, 16], sizes = [8, 8], strides = [1, 1]} : vector<8x32xf32> to vector<8x8xf32>
    %101 = vector.extract_strided_slice %11 {offsets = [16, 16], sizes = [16, 8], strides = [1, 1]} : vector<32x32xf32> to vector<16x8xf32>
    %cst_37 = arith.constant dense<0.000000e+00> : vector<8x16xf32>
    %102 = tpu.matmul %100, %101, %cst_37 {dimension_numbers = #tpu.dot_dimension_numbers<[1], [1], [0], [0], [0, 0, 1, 0], [], []>} : vector<8x8xf32>, vector<16x8xf32>, vector<8x16xf32> -> vector<8x16xf32>
    %cst_38 = arith.constant dense<0xFF800000> : vector<8xf32>
    %103 = vector.multi_reduction <maximumf>, %102, %cst_38 [1] : vector<8x16xf32> to vector<8xf32>
    %104 = vector.shape_cast %103 : vector<8xf32> to vector<8x1xf32>
    %105 = vector.broadcast %104 : vector<8x1xf32> to vector<8x16xf32>
    %106 = arith.subf %102, %105 : vector<8x16xf32>
    %107 = math.exp %106 : vector<8x16xf32>
    %cst_39 = arith.constant dense<0.000000e+00> : vector<8xf32>
    %108 = vector.multi_reduction <add>, %107, %cst_39 [1] : vector<8x16xf32> to vector<8xf32>
    %109 = vector.shape_cast %108 : vector<8xf32> to vector<8x1xf32>
    %110 = vector.broadcast %109 : vector<8x1xf32> to vector<8x16xf32>
    %111 = arith.divf %107, %110 : vector<8x16xf32>
    %112 = vector.extract_strided_slice %12 {offsets = [16, 16], sizes = [16, 8], strides = [1, 1]} : vector<32x32xf32> to vector<16x8xf32>
    %cst_40 = arith.constant dense<0.000000e+00> : vector<8x8xf32>
    %113 = tpu.matmul %111, %112, %cst_40 {dimension_numbers = #tpu.dot_dimension_numbers<[1], [0], [0], [1], [0, 0, 1, 1], [], []>} : vector<8x16xf32>, vector<16x8xf32>, vector<8x8xf32> -> vector<8x8xf32>
    %114 = vector.extract_strided_slice %14 {offsets = [0, 24], sizes = [8, 8], strides = [1, 1]} : vector<8x32xf32> to vector<8x8xf32>
    %115 = vector.extract_strided_slice %11 {offsets = [16, 24], sizes = [16, 8], strides = [1, 1]} : vector<32x32xf32> to vector<16x8xf32>
    %cst_41 = arith.constant dense<0.000000e+00> : vector<8x16xf32>
    %116 = tpu.matmul %114, %115, %cst_41 {dimension_numbers = #tpu.dot_dimension_numbers<[1], [1], [0], [0], [0, 0, 1, 0], [], []>} : vector<8x8xf32>, vector<16x8xf32>, vector<8x16xf32> -> vector<8x16xf32>
    %cst_42 = arith.constant dense<0xFF800000> : vector<8xf32>
    %117 = vector.multi_reduction <maximumf>, %116, %cst_42 [1] : vector<8x16xf32> to vector<8xf32>
    %118 = vector.shape_cast %117 : vector<8xf32> to vector<8x1xf32>
    %119 = vector.broadcast %118 : vector<8x1xf32> to vector<8x16xf32>
    %120 = arith.subf %116, %119 : vector<8x16xf32>
    %121 = math.exp %120 : vector<8x16xf32>
    %cst_43 = arith.constant dense<0.000000e+00> : vector<8xf32>
    %122 = vector.multi_reduction <add>, %121, %cst_43 [1] : vector<8x16xf32> to vector<8xf32>
    %123 = vector.shape_cast %122 : vector<8xf32> to vector<8x1xf32>
    %124 = vector.broadcast %123 : vector<8x1xf32> to vector<8x16xf32>
    %125 = arith.divf %121, %124 : vector<8x16xf32>
    %126 = vector.extract_strided_slice %12 {offsets = [16, 24], sizes = [16, 8], strides = [1, 1]} : vector<32x32xf32> to vector<16x8xf32>
    %cst_44 = arith.constant dense<0.000000e+00> : vector<8x8xf32>
    %127 = tpu.matmul %125, %126, %cst_44 {dimension_numbers = #tpu.dot_dimension_numbers<[1], [0], [0], [1], [0, 0, 1, 1], [], []>} : vector<8x16xf32>, vector<16x8xf32>, vector<8x8xf32> -> vector<8x8xf32>
    %128 = tpu.concatenate %85, %99, %113, %127 in 1 : vector<8x8xf32>, vector<8x8xf32>, vector<8x8xf32>, vector<8x8xf32> -> vector<8x32xf32>
    %129 = tpu.concatenate %71, %128 in 0 : vector<8x32xf32>, vector<8x32xf32> -> vector<16x32xf32>
    %c0_45 = arith.constant 0 : index
    %c0_46 = arith.constant 0 : index
    %130 = vector.load %arg6[%c0_45, %c0_46] : memref<32x32xf32, #tpu.memory_space<vmem>>, vector<32x32xf32>
    %cst_47 = arith.constant dense<0.000000e+00> : vector<16x32xf32>
    %131 = tpu.matmul %129, %130, %cst_47 {dimension_numbers = #tpu.dot_dimension_numbers<[1], [0], [0], [1], [0, 0, 1, 1], [], []>} : vector<16x32xf32>, vector<32x32xf32>, vector<16x32xf32> -> vector<16x32xf32>
    %c0_48 = arith.constant 0 : index
    %c0_49 = arith.constant 0 : index
    %132 = vector.load %arg7[%c0_48, %c0_49] : memref<1x32xf32, #tpu.memory_space<vmem>>, vector<1x32xf32>
    %133 = vector.broadcast %132 : vector<1x32xf32> to vector<16x32xf32>
    %134 = arith.addf %131, %133 : vector<16x32xf32>
    %c0_50 = arith.constant 0 : index
    %c0_51 = arith.constant 0 : index
    %135 = vector.load %arg8[%c0_50, %c0_51] : memref<32x32xf32, #tpu.memory_space<vmem>>, vector<32x32xf32>
    %cst_52 = arith.constant dense<0.000000e+00> : vector<16x32xf32>
    %136 = tpu.matmul %134, %135, %cst_52 {dimension_numbers = #tpu.dot_dimension_numbers<[1], [0], [0], [1], [0, 0, 1, 1], [], []>} : vector<16x32xf32>, vector<32x32xf32>, vector<16x32xf32> -> vector<16x32xf32>
    %137 = vector.extract_strided_slice %10 {offsets = [0, 32], sizes = [8, 32], strides = [1, 1]} : vector<8x64xf32> to vector<8x32xf32>
    %138 = vector.extract_strided_slice %13 {offsets = [0, 0], sizes = [32, 8], strides = [1, 1]} : vector<32x32xf32> to vector<32x8xf32>
    %139 = vector.extract_strided_slice %137 {offsets = [0, 0], sizes = [8, 8], strides = [1, 1]} : vector<8x32xf32> to vector<8x8xf32>
    %cst_53 = arith.constant dense<0.000000e+00> : vector<32x8xf32>
    %140 = tpu.matmul %138, %139, %cst_53 {dimension_numbers = #tpu.dot_dimension_numbers<[1], [1], [0], [0], [0, 0, 1, 0], [], []>} : vector<32x8xf32>, vector<8x8xf32>, vector<32x8xf32> -> vector<32x8xf32>
    %cst_54 = arith.constant dense<0xFF800000> : vector<32xf32>
    %141 = vector.multi_reduction <maximumf>, %140, %cst_54 [1] : vector<32x8xf32> to vector<32xf32>
    %142 = vector.shape_cast %141 : vector<32xf32> to vector<32x1xf32>
    %143 = vector.broadcast %142 : vector<32x1xf32> to vector<32x8xf32>
    %144 = arith.subf %140, %143 : vector<32x8xf32>
    %145 = math.exp %144 : vector<32x8xf32>
    %cst_55 = arith.constant dense<0.000000e+00> : vector<32xf32>
    %146 = vector.multi_reduction <add>, %145, %cst_55 [1] : vector<32x8xf32> to vector<32xf32>
    %147 = vector.shape_cast %146 : vector<32xf32> to vector<32x1xf32>
    %148 = vector.broadcast %147 : vector<32x1xf32> to vector<32x8xf32>
    %149 = arith.divf %145, %148 : vector<32x8xf32>
    %150 = vector.extract_strided_slice %149 {offsets = [0, 0], sizes = [16, 8], strides = [1, 1]} : vector<32x8xf32> to vector<16x8xf32>
    %151 = vector.extract_strided_slice %136 {offsets = [0, 0], sizes = [8, 8], strides = [1, 1]} : vector<16x32xf32> to vector<8x8xf32>
    %cst_56 = arith.constant dense<0.000000e+00> : vector<16x8xf32>
    %152 = tpu.matmul %150, %151, %cst_56 {dimension_numbers = #tpu.dot_dimension_numbers<[1], [0], [0], [1], [0, 0, 1, 1], [], []>} : vector<16x8xf32>, vector<8x8xf32>, vector<16x8xf32> -> vector<16x8xf32>
    %153 = vector.extract_strided_slice %149 {offsets = [16, 0], sizes = [16, 8], strides = [1, 1]} : vector<32x8xf32> to vector<16x8xf32>
    %154 = vector.extract_strided_slice %136 {offsets = [8, 0], sizes = [8, 8], strides = [1, 1]} : vector<16x32xf32> to vector<8x8xf32>
    %cst_57 = arith.constant dense<0.000000e+00> : vector<16x8xf32>
    %155 = tpu.matmul %153, %154, %cst_57 {dimension_numbers = #tpu.dot_dimension_numbers<[1], [0], [0], [1], [0, 0, 1, 1], [], []>} : vector<16x8xf32>, vector<8x8xf32>, vector<16x8xf32> -> vector<16x8xf32>
    %156 = vector.extract_strided_slice %13 {offsets = [0, 8], sizes = [32, 8], strides = [1, 1]} : vector<32x32xf32> to vector<32x8xf32>
    %157 = vector.extract_strided_slice %137 {offsets = [0, 8], sizes = [8, 8], strides = [1, 1]} : vector<8x32xf32> to vector<8x8xf32>
    %cst_58 = arith.constant dense<0.000000e+00> : vector<32x8xf32>
    %158 = tpu.matmul %156, %157, %cst_58 {dimension_numbers = #tpu.dot_dimension_numbers<[1], [1], [0], [0], [0, 0, 1, 0], [], []>} : vector<32x8xf32>, vector<8x8xf32>, vector<32x8xf32> -> vector<32x8xf32>
    %cst_59 = arith.constant dense<0xFF800000> : vector<32xf32>
    %159 = vector.multi_reduction <maximumf>, %158, %cst_59 [1] : vector<32x8xf32> to vector<32xf32>
    %160 = vector.shape_cast %159 : vector<32xf32> to vector<32x1xf32>
    %161 = vector.broadcast %160 : vector<32x1xf32> to vector<32x8xf32>
    %162 = arith.subf %158, %161 : vector<32x8xf32>
    %163 = math.exp %162 : vector<32x8xf32>
    %cst_60 = arith.constant dense<0.000000e+00> : vector<32xf32>
    %164 = vector.multi_reduction <add>, %163, %cst_60 [1] : vector<32x8xf32> to vector<32xf32>
    %165 = vector.shape_cast %164 : vector<32xf32> to vector<32x1xf32>
    %166 = vector.broadcast %165 : vector<32x1xf32> to vector<32x8xf32>
    %167 = arith.divf %163, %166 : vector<32x8xf32>
    %168 = vector.extract_strided_slice %167 {offsets = [0, 0], sizes = [16, 8], strides = [1, 1]} : vector<32x8xf32> to vector<16x8xf32>
    %169 = vector.extract_strided_slice %136 {offsets = [0, 8], sizes = [8, 8], strides = [1, 1]} : vector<16x32xf32> to vector<8x8xf32>
    %cst_61 = arith.constant dense<0.000000e+00> : vector<16x8xf32>
    %170 = tpu.matmul %168, %169, %cst_61 {dimension_numbers = #tpu.dot_dimension_numbers<[1], [0], [0], [1], [0, 0, 1, 1], [], []>} : vector<16x8xf32>, vector<8x8xf32>, vector<16x8xf32> -> vector<16x8xf32>
    %171 = vector.extract_strided_slice %167 {offsets = [16, 0], sizes = [16, 8], strides = [1, 1]} : vector<32x8xf32> to vector<16x8xf32>
    %172 = vector.extract_strided_slice %136 {offsets = [8, 8], sizes = [8, 8], strides = [1, 1]} : vector<16x32xf32> to vector<8x8xf32>
    %cst_62 = arith.constant dense<0.000000e+00> : vector<16x8xf32>
    %173 = tpu.matmul %171, %172, %cst_62 {dimension_numbers = #tpu.dot_dimension_numbers<[1], [0], [0], [1], [0, 0, 1, 1], [], []>} : vector<16x8xf32>, vector<8x8xf32>, vector<16x8xf32> -> vector<16x8xf32>
    %174 = vector.extract_strided_slice %13 {offsets = [0, 16], sizes = [32, 8], strides = [1, 1]} : vector<32x32xf32> to vector<32x8xf32>
    %175 = vector.extract_strided_slice %137 {offsets = [0, 16], sizes = [8, 8], strides = [1, 1]} : vector<8x32xf32> to vector<8x8xf32>
    %cst_63 = arith.constant dense<0.000000e+00> : vector<32x8xf32>
    %176 = tpu.matmul %174, %175, %cst_63 {dimension_numbers = #tpu.dot_dimension_numbers<[1], [1], [0], [0], [0, 0, 1, 0], [], []>} : vector<32x8xf32>, vector<8x8xf32>, vector<32x8xf32> -> vector<32x8xf32>
    %cst_64 = arith.constant dense<0xFF800000> : vector<32xf32>
    %177 = vector.multi_reduction <maximumf>, %176, %cst_64 [1] : vector<32x8xf32> to vector<32xf32>
    %178 = vector.shape_cast %177 : vector<32xf32> to vector<32x1xf32>
    %179 = vector.broadcast %178 : vector<32x1xf32> to vector<32x8xf32>
    %180 = arith.subf %176, %179 : vector<32x8xf32>
    %181 = math.exp %180 : vector<32x8xf32>
    %cst_65 = arith.constant dense<0.000000e+00> : vector<32xf32>
    %182 = vector.multi_reduction <add>, %181, %cst_65 [1] : vector<32x8xf32> to vector<32xf32>
    %183 = vector.shape_cast %182 : vector<32xf32> to vector<32x1xf32>
    %184 = vector.broadcast %183 : vector<32x1xf32> to vector<32x8xf32>
    %185 = arith.divf %181, %184 : vector<32x8xf32>
    %186 = vector.extract_strided_slice %185 {offsets = [0, 0], sizes = [16, 8], strides = [1, 1]} : vector<32x8xf32> to vector<16x8xf32>
    %187 = vector.extract_strided_slice %136 {offsets = [0, 16], sizes = [8, 8], strides = [1, 1]} : vector<16x32xf32> to vector<8x8xf32>
    %cst_66 = arith.constant dense<0.000000e+00> : vector<16x8xf32>
    %188 = tpu.matmul %186, %187, %cst_66 {dimension_numbers = #tpu.dot_dimension_numbers<[1], [0], [0], [1], [0, 0, 1, 1], [], []>} : vector<16x8xf32>, vector<8x8xf32>, vector<16x8xf32> -> vector<16x8xf32>
    %189 = vector.extract_strided_slice %185 {offsets = [16, 0], sizes = [16, 8], strides = [1, 1]} : vector<32x8xf32> to vector<16x8xf32>
    %190 = vector.extract_strided_slice %136 {offsets = [8, 16], sizes = [8, 8], strides = [1, 1]} : vector<16x32xf32> to vector<8x8xf32>
    %cst_67 = arith.constant dense<0.000000e+00> : vector<16x8xf32>
    %191 = tpu.matmul %189, %190, %cst_67 {dimension_numbers = #tpu.dot_dimension_numbers<[1], [0], [0], [1], [0, 0, 1, 1], [], []>} : vector<16x8xf32>, vector<8x8xf32>, vector<16x8xf32> -> vector<16x8xf32>
    %192 = vector.extract_strided_slice %13 {offsets = [0, 24], sizes = [32, 8], strides = [1, 1]} : vector<32x32xf32> to vector<32x8xf32>
    %193 = vector.extract_strided_slice %137 {offsets = [0, 24], sizes = [8, 8], strides = [1, 1]} : vector<8x32xf32> to vector<8x8xf32>
    %cst_68 = arith.constant dense<0.000000e+00> : vector<32x8xf32>
    %194 = tpu.matmul %192, %193, %cst_68 {dimension_numbers = #tpu.dot_dimension_numbers<[1], [1], [0], [0], [0, 0, 1, 0], [], []>} : vector<32x8xf32>, vector<8x8xf32>, vector<32x8xf32> -> vector<32x8xf32>
    %cst_69 = arith.constant dense<0xFF800000> : vector<32xf32>
    %195 = vector.multi_reduction <maximumf>, %194, %cst_69 [1] : vector<32x8xf32> to vector<32xf32>
    %196 = vector.shape_cast %195 : vector<32xf32> to vector<32x1xf32>
    %197 = vector.broadcast %196 : vector<32x1xf32> to vector<32x8xf32>
    %198 = arith.subf %194, %197 : vector<32x8xf32>
    %199 = math.exp %198 : vector<32x8xf32>
    %cst_70 = arith.constant dense<0.000000e+00> : vector<32xf32>
    %200 = vector.multi_reduction <add>, %199, %cst_70 [1] : vector<32x8xf32> to vector<32xf32>
    %201 = vector.shape_cast %200 : vector<32xf32> to vector<32x1xf32>
    %202 = vector.broadcast %201 : vector<32x1xf32> to vector<32x8xf32>
    %203 = arith.divf %199, %202 : vector<32x8xf32>
    %204 = vector.extract_strided_slice %203 {offsets = [0, 0], sizes = [16, 8], strides = [1, 1]} : vector<32x8xf32> to vector<16x8xf32>
    %205 = vector.extract_strided_slice %136 {offsets = [0, 24], sizes = [8, 8], strides = [1, 1]} : vector<16x32xf32> to vector<8x8xf32>
    %cst_71 = arith.constant dense<0.000000e+00> : vector<16x8xf32>
    %206 = tpu.matmul %204, %205, %cst_71 {dimension_numbers = #tpu.dot_dimension_numbers<[1], [0], [0], [1], [0, 0, 1, 1], [], []>} : vector<16x8xf32>, vector<8x8xf32>, vector<16x8xf32> -> vector<16x8xf32>
    %207 = vector.extract_strided_slice %203 {offsets = [16, 0], sizes = [16, 8], strides = [1, 1]} : vector<32x8xf32> to vector<16x8xf32>
    %208 = vector.extract_strided_slice %136 {offsets = [8, 24], sizes = [8, 8], strides = [1, 1]} : vector<16x32xf32> to vector<8x8xf32>
    %cst_72 = arith.constant dense<0.000000e+00> : vector<16x8xf32>
    %209 = tpu.matmul %207, %208, %cst_72 {dimension_numbers = #tpu.dot_dimension_numbers<[1], [0], [0], [1], [0, 0, 1, 1], [], []>} : vector<16x8xf32>, vector<8x8xf32>, vector<16x8xf32> -> vector<16x8xf32>
    %210 = tpu.concatenate %152, %170, %188, %206 in 1 : vector<16x8xf32>, vector<16x8xf32>, vector<16x8xf32>, vector<16x8xf32> -> vector<16x32xf32>
    %211 = tpu.concatenate %155, %173, %191, %209 in 1 : vector<16x8xf32>, vector<16x8xf32>, vector<16x8xf32>, vector<16x8xf32> -> vector<16x32xf32>
    %212 = tpu.concatenate %210, %211 in 0 : vector<16x32xf32>, vector<16x32xf32> -> vector<32x32xf32>
    %c0_73 = arith.constant 0 : index
    %c0_74 = arith.constant 0 : index
    %213 = vector.load %arg9[%c0_73, %c0_74] : memref<32x32xf32, #tpu.memory_space<vmem>>, vector<32x32xf32>
    %cst_75 = arith.constant dense<0.000000e+00> : vector<32x32xf32>
    %214 = tpu.matmul %212, %213, %cst_75 {dimension_numbers = #tpu.dot_dimension_numbers<[1], [0], [0], [1], [0, 0, 1, 1], [], []>} : vector<32x32xf32>, vector<32x32xf32>, vector<32x32xf32> -> vector<32x32xf32>
    %c0_76 = arith.constant 0 : index
    %c0_77 = arith.constant 0 : index
    %215 = vector.load %arg10[%c0_76, %c0_77] : memref<1x32xf32, #tpu.memory_space<vmem>>, vector<1x32xf32>
    %216 = vector.broadcast %215 : vector<1x32xf32> to vector<32x32xf32>
    %217 = arith.addf %214, %216 : vector<32x32xf32>
    %c0_78 = arith.constant 0 : index
    %c0_79 = arith.constant 0 : index
    %218 = vector.load %arg11[%c0_78, %c0_79] : memref<32x32xf32, #tpu.memory_space<vmem>>, vector<32x32xf32>
    tpu.vector_store %arg11[%c0_78, %c0_79], %217 {strides = array<i32>} : memref<32x32xf32, #tpu.memory_space<vmem>>, vector<32x32xf32>,
    return
  }
}

</mosaic_0001>

<llo_original>
// kernel: conv_factor_self_attention.1
$region0: #{conv_factor_self_attention.1}
  #allocation0 [shape = 'u32[]', space=smem, size = 0x4, offset = 0x4, fixed_abs, tag = 'smem constant byte address 0x4 - core index']
  #allocation1 [shape = 'u32[144,128]{1,0:T(1,128)}', space=vmem, size = 0x12000, scoped, tag = 'internal scratch']
  %s0 = inlined_call_operand.vmem [shape: f32[32,96], index: 0, kind: input, shape index: {}]
  %s1 = inlined_call_operand.vmem [shape: f32[8,32], index: 1, kind: input, shape index: {}]
  %s2 = inlined_call_operand.vmem [shape: f32[96,32], index: 2, kind: input, shape index: {}]
  %s3 = inlined_call_operand.vmem [shape: f32[1,32], index: 3, kind: input, shape index: {}]
  %s4 = inlined_call_operand.vmem [shape: f32[32,96], index: 4, kind: input, shape index: {}]
  %s5 = inlined_call_operand.vmem [shape: f32[32,64], index: 5, kind: input, shape index: {}]
  %s6 = inlined_call_operand.vmem [shape: f32[32,32], index: 6, kind: input, shape index: {}]
  %s7 = inlined_call_operand.vmem [shape: f32[1,32], index: 7, kind: input, shape index: {}]
  %s8 = inlined_call_operand.vmem [shape: f32[32,32], index: 8, kind: input, shape index: {}]
  %s9 = inlined_call_operand.vmem [shape: f32[32,32], index: 9, kind: input, shape index: {}]
  %s10 = inlined_call_operand.vmem [shape: f32[1,32], index: 10, kind: input, shape index: {}]
  %s11 = inlined_call_operand.hbm [shape: f32[32,32], index: 11, kind: output, shape index: {}]
  %s12 = sld [smem:[#allocation0]]
  $region54: #{conv_factor_self_attention.1} parent=0
    _
  %s14 = ssub.s32 1, %s12
  %s15 = scalar_select 0, %s14, %s12
  $region1: #{conv_factor_self_attention.1} parent=0
    #allocation2 [shape = 'u8[16384]{0}', space=vmem, size = 0x4000, scoped, tag = 'output window, operand 0, single buffered']
    #allocation3 [shape = 's32[1]{0}', space=sflag, size = 0x4, scoped, tag = 'scoped memory for conv_factor_self_attention.1']
    %16 = vsyncpa [#allocation3], 0
    // Predicated region
    $region2: #{conv_factor_self_attention.1} parent=1 // pred_check
      _
    $region3: #{conv_factor_self_attention.1} parent=1 // pred_check_branch
      %18 = sbr.rel (0) target = $region5
    $region4: #{conv_factor_self_attention.1} parent=1 // pred_region
      _
    $region5: #{conv_factor_self_attention.1} parent=1 // pred_fallthru
      _
    // Predicated region
    $region6: #{conv_factor_self_attention.1} parent=1 // pred_check
      _
    $region7: #{conv_factor_self_attention.1} parent=1 // pred_check_branch
      %20 = sbr.rel (0) target = $region9
    $region8: #{conv_factor_self_attention.1} parent=1 // pred_region
      _
    $region9: #{conv_factor_self_attention.1} parent=1 // pred_fallthru
      _
    // Predicated region
    $region10: #{conv_factor_self_attention.1} parent=1 // pred_check
      _
    $region11: #{conv_factor_self_attention.1} parent=1 // pred_check_branch
      %22 = sbr.rel (0) target = $region13
    $region12: #{conv_factor_self_attention.1} parent=1 // pred_region
      _
    $region13: #{conv_factor_self_attention.1} parent=1 // pred_fallthru
      _
    // Predicated region
    $region14: #{conv_factor_self_attention.1} parent=1 // pred_check
      _
    $region15: #{conv_factor_self_attention.1} parent=1 // pred_check_branch
      %24 = sbr.rel (0) target = $region17
    $region16: #{conv_factor_self_attention.1} parent=1 // pred_region
      _
    $region17: #{conv_factor_self_attention.1} parent=1 // pred_fallthru
      _
    // Predicated region
    $region18: #{conv_factor_self_attention.1} parent=1 // pred_check
      _
    $region19: #{conv_factor_self_attention.1} parent=1 // pred_check_branch
      %26 = sbr.rel (0) target = $region21
    $region20: #{conv_factor_self_attention.1} parent=1 // pred_region
      _
    $region21: #{conv_factor_self_attention.1} parent=1 // pred_fallthru
      _
    // Predicated region
    $region22: #{conv_factor_self_attention.1} parent=1 // pred_check
      _
    $region23: #{conv_factor_self_attention.1} parent=1 // pred_check_branch
      %28 = sbr.rel (0) target = $region25
    $region24: #{conv_factor_self_attention.1} parent=1 // pred_region
      _
    $region25: #{conv_factor_self_attention.1} parent=1 // pred_fallthru
      _
    // Predicated region
    $region26: #{conv_factor_self_attention.1} parent=1 // pred_check
      _
    $region27: #{conv_factor_self_attention.1} parent=1 // pred_check_branch
      %30 = sbr.rel (0) target = $region29
    $region28: #{conv_factor_self_attention.1} parent=1 // pred_region
      _
    $region29: #{conv_factor_self_attention.1} parent=1 // pred_fallthru
      _
    // Predicated region
    $region30: #{conv_factor_self_attention.1} parent=1 // pred_check
      _
    $region31: #{conv_factor_self_attention.1} parent=1 // pred_check_branch
      %32 = sbr.rel (0) target = $region33
    $region32: #{conv_factor_self_attention.1} parent=1 // pred_region
      _
    $region33: #{conv_factor_self_attention.1} parent=1 // pred_fallthru
      _
    // Predicated region
    $region34: #{conv_factor_self_attention.1} parent=1 // pred_check
      _
    $region35: #{conv_factor_self_attention.1} parent=1 // pred_check_branch
      %34 = sbr.rel (0) target = $region37
    $region36: #{conv_factor_self_attention.1} parent=1 // pred_region
      _
    $region37: #{conv_factor_self_attention.1} parent=1 // pred_fallthru
      _
    // Predicated region
    $region38: #{conv_factor_self_attention.1} parent=1 // pred_check
      _
    $region39: #{conv_factor_self_attention.1} parent=1 // pred_check_branch
      %36 = sbr.rel (0) target = $region41
    $region40: #{conv_factor_self_attention.1} parent=1 // pred_region
      _
    $region41: #{conv_factor_self_attention.1} parent=1 // pred_fallthru
      _
    // Predicated region
    $region42: #{conv_factor_self_attention.1} parent=1 // pred_check
      _
    $region43: #{conv_factor_self_attention.1} parent=1 // pred_check_branch
      %38 = sbr.rel (0) target = $region45
    $region44: #{conv_factor_self_attention.1} parent=1 // pred_region
      _
    $region45: #{conv_factor_self_attention.1} parent=1 // pred_fallthru
      _
    %v39 = vld [vmem:[%s0] sm:$0xff]
    %v40 = vld [vmem:[%s0 + $0x8] sm:$0xff]
    %v41 = vld [vmem:[%s0 + $0x10] sm:$0xff]
    %v42 = vld [vmem:[%s0 + $0x18] sm:$0xff]
    %v43 = vld [vmem:[%s2] sm:$0xff]
    %v44 = vld [vmem:[%s2 + $0x8] sm:$0xff]
    %v45 = vld [vmem:[%s2 + $0x10] sm:$0xff]
    %v46 = vld [vmem:[%s2 + $0x18] sm:$0xff]
    %v47 = vld [vmem:[%s2 + $0x20] sm:$0xff]
    %v48 = vld [vmem:[%s2 + $0x28] sm:$0xff]
    %v49 = vld [vmem:[%s2 + $0x30] sm:$0xff]
    %v50 = vld [vmem:[%s2 + $0x38] sm:$0xff]
    %v51 = vld [vmem:[%s2 + $0x40] sm:$0xff]
    %v52 = vld [vmem:[%s2 + $0x48] sm:$0xff]
    %v53 = vld [vmem:[%s2 + $0x50] sm:$0xff]
    %v54 = vld [vmem:[%s2 + $0x58] sm:$0xff]
    %v55 = vld [vmem:[%s3] sm:$0x1]
    %v57 = vlaneseq
    %v58 = vshrl.u32 %v57, 7
    %v59 = vsub.s32 0, %v58
    %v60 = vrot.slane %v55, %v59
    %vm62 = vcmask 785408
    %v64 = vsel %vm62, %v39, 0
    %v67 = vsel %vm62, %v40, 0
    %v70 = vsel %vm62, %v41, 0
    %v73 = vsel %vm62, %v42, 0
    %75 = vmatprep.subr.mxu0 0.0
    %76 = vmatpush1.msra.mxu0 %v43
    %77 = vmatprep.subr.mxu0 0.0
    %78 = vmatpush1.msra.mxu0 %v44
    %79 = vmatprep.subr.mxu0 0.0
    %80 = vmatpush1.msra.mxu0 %v45
    %81 = vmatprep.subr.mxu0 0.0
    %82 = vmatpush1.msra.mxu0 %v46
    %83 = vmatprep.subr.mxu0 0.0
    %84 = vmatpush1.msra.mxu0 %v47
    %85 = vmatprep.subr.mxu0 0.0
    %86 = vmatpush1.msra.mxu0 %v48
    %87 = vmatprep.subr.mxu0 0.0
    %88 = vmatpush1.msra.mxu0 %v49
    %89 = vmatprep.subr.mxu0 0.0
    %90 = vmatpush1.msra.mxu0 %v50
    %91 = vmatprep.subr.mxu0 0.0
    %92 = vmatpush1.msra.mxu0 %v51
    %93 = vmatprep.subr.mxu0 0.0
    %94 = vmatpush1.msra.mxu0 %v52
    %95 = vmatprep.subr.mxu0 0.0
    %96 = vmatpush1.msra.mxu0 %v53
    %97 = vmatprep.subr.mxu0 0.0
    %98 = vmatpush1.msra.mxu0 %v54
    %99 = vmatprep.subr.mxu0 0.0
    %100 = vmatpush1.msra.mxu0 0.0
    %101 = vmatprep.subr.mxu0 0.0
    %102 = vmatpush1.msra.mxu0 0.0
    %103 = vmatprep.subr.mxu0 0.0
    %104 = vmatpush1.msra.mxu0 0.0
    %105 = vmatprep.subr.mxu0 0.0
    %106 = vmatpush1.msra.mxu0 0.0
    %107 = vmatprep.subr.mxu0 0.0
    %108 = vmatpush1.msra.mxu0 0.0
    %109 = vmatprep.subr.mxu0 0.0
    %110 = vmatpush1.msra.mxu0 0.0
    %111 = vmatprep.subr.mxu0 0.0
    %112 = vmatpush1.msra.mxu0 0.0
    %113 = vmatprep.subr.mxu0 0.0
    %114 = vmatpush1.msra.mxu0 0.0
    %115 = vmatprep.subr.mxu0 0.0
    %116 = vmatpush1.msra.mxu0 0.0
    %117 = vmatprep.subr.mxu0 0.0
    %118 = vmatpush1.msra.mxu0 0.0
    %119 = vmatprep.subr.mxu0 0.0
    %120 = vmatpush1.msra.mxu0 0.0
    %121 = vmatprep.subr.mxu0 0.0
    %122 = vmatpush1.msra.mxu0 0.0
    %123 = vmatprep.subr.mxu0 0.0
    %124 = vmatpush1.msra.mxu0 0.0
    %125 = vmatprep.subr.mxu0 0.0
    %126 = vmatpush1.msra.mxu0 0.0
    %127 = vmatprep.subr.mxu0 0.0
    %128 = vmatpush1.msra.mxu0 0.0
    %129 = vmatprep.subr.mxu0 0.0
    %130 = vmatpush1.msra.mxu0 0.0
    %131 = vmatprep.subr.mxu0 0.0
    %132 = vmatpush1.msra.mxu0 0.0
    %133 = vmatprep.subr.mxu0 0.0
    %134 = vmatpush1.msra.mxu0 0.0
    %135 = vmatprep.subr.mxu0 0.0
    %136 = vmatpush1.msra.mxu0 0.0
    %137 = vmatprep.subr.mxu0 0.0
    %138 = vmatpush1.msra.mxu0 0.0
    %139 = vmatprep.mubr.f32.mxu0 0.0
    %140 = vmatmul.mubr.f32.gmra.mrb[0].mxu0 %v64
    %v141 = vpop.f32.mrb[0].mxu0
    %v142 = vadd.f32 %v60, %v141
    %v143 = vpop.f32.mrb[0].mxu0
    %144 = vmatprep.mubr.f32.mxu0 0.0
    %145 = vmatmul.mubr.f32.gmra.mrb[0].mxu0 %v67
    %v146 = vpop.f32.mrb[0].mxu0
    %v147 = vadd.f32 %v60, %v146
    %v148 = vpop.f32.mrb[0].mxu0
    %149 = vmatprep.mubr.f32.mxu0 0.0
    %150 = vmatmul.mubr.f32.gmra.mrb[0].mxu0 %v70
    %v151 = vpop.f32.mrb[0].mxu0
    %v152 = vadd.f32 %v60, %v151
    %v153 = vpop.f32.mrb[0].mxu0
    %154 = vmatprep.mubr.f32.mxu0 0.0
    %155 = vmatmul.mubr.f32.gmra.mrb[0].mxu0 %v73
    %v156 = vpop.f32.mrb[0].mxu0
    %v157 = vadd.f32 %v60, %v156
    %v158 = vpop.f32.mrb[0].mxu0
    %159 = vdwg.mxu0
    %v160 = vld [vmem:[%s4] sm:$0xff]
    %v161 = vld [vmem:[%s4 + $0x8] sm:$0xff]
    %v162 = vld [vmem:[%s4 + $0x10] sm:$0xff]
    %v163 = vld [vmem:[%s4 + $0x18] sm:$0xff]
    %vm164 = vcmask 261120
    %v166 = vsel %vm164, %v142, 0
    %v169 = vsel %vm164, %v147, 0
    %v172 = vsel %vm164, %v152, 0
    %v175 = vsel %vm164, %v157, 0
    %177 = vmatprep.subr.mxu0 0.0
    %178 = vmatpush1.msra.mxu0 %v160
    %179 = vmatprep.subr.mxu0 0.0
    %180 = vmatpush1.msra.mxu0 %v161
    %181 = vmatprep.subr.mxu0 0.0
    %182 = vmatpush1.msra.mxu0 %v162
    %183 = vmatprep.subr.mxu0 0.0
    %184 = vmatpush1.msra.mxu0 %v163
    %185 = vmatprep.subr.mxu0 0.0
    %186 = vmatpush1.msra.mxu0 0.0
    %187 = vmatprep.subr.mxu0 0.0
    %188 = vmatpush1.msra.mxu0 0.0
    %189 = vmatprep.subr.mxu0 0.0
    %190 = vmatpush1.msra.mxu0 0.0
    %191 = vmatprep.subr.mxu0 0.0
    %192 = vmatpush1.msra.mxu0 0.0
    %193 = vmatprep.subr.mxu0 0.0
    %194 = vmatpush1.msra.mxu0 0.0
    %195 = vmatprep.subr.mxu0 0.0
    %196 = vmatpush1.msra.mxu0 0.0
    %197 = vmatprep.subr.mxu0 0.0
    %198 = vmatpush1.msra.mxu0 0.0
    %199 = vmatprep.subr.mxu0 0.0
    %200 = vmatpush1.msra.mxu0 0.0
    %201 = vmatprep.subr.mxu0 0.0
    %202 = vmatpush1.msra.mxu0 0.0
    %203 = vmatprep.subr.mxu0 0.0
    %204 = vmatpush1.msra.mxu0 0.0
    %205 = vmatprep.subr.mxu0 0.0
    %206 = vmatpush1.msra.mxu0 0.0
    %207 = vmatprep.subr.mxu0 0.0
    %208 = vmatpush1.msra.mxu0 0.0
    %209 = vmatprep.subr.mxu0 0.0
    %210 = vmatpush1.msra.mxu0 0.0
    %211 = vmatprep.subr.mxu0 0.0
    %212 = vmatpush1.msra.mxu0 0.0
    %213 = vmatprep.subr.mxu0 0.0
    %214 = vmatpush1.msra.mxu0 0.0
    %215 = vmatprep.subr.mxu0 0.0
    %216 = vmatpush1.msra.mxu0 0.0
    %217 = vmatprep.subr.mxu0 0.0
    %218 = vmatpush1.msra.mxu0 0.0
    %219 = vmatprep.subr.mxu0 0.0
    %220 = vmatpush1.msra.mxu0 0.0
    %221 = vmatprep.subr.mxu0 0.0
    %222 = vmatpush1.msra.mxu0 0.0
    %223 = vmatprep.subr.mxu0 0.0
    %224 = vmatpush1.msra.mxu0 0.0
    %225 = vmatprep.subr.mxu0 0.0
    %226 = vmatpush1.msra.mxu0 0.0
    %227 = vmatprep.subr.mxu0 0.0
    %228 = vmatpush1.msra.mxu0 0.0
    %229 = vmatprep.subr.mxu0 0.0
    %230 = vmatpush1.msra.mxu0 0.0
    %231 = vmatprep.subr.mxu0 0.0
    %232 = vmatpush1.msra.mxu0 0.0
    %233 = vmatprep.subr.mxu0 0.0
    %234 = vmatpush1.msra.mxu0 0.0
    %235 = vmatprep.subr.mxu0 0.0
    %236 = vmatpush1.msra.mxu0 0.0
    %237 = vmatprep.subr.mxu0 0.0
    %238 = vmatpush1.msra.mxu0 0.0
    %239 = vmatprep.subr.mxu0 0.0
    %240 = vmatpush1.msra.mxu0 0.0
    %241 = vmatprep.mubr.f32.mxu0 0.0
    %242 = vmatmul.mubr.f32.gmra.mrb[0].mxu0 %v166
    %v243 = vpop.f32.mrb[0].mxu0
    %v244 = vadd.f32 0.0, %v243
    %v245 = vpop.f32.mrb[0].mxu0
    %246 = vmatprep.mubr.f32.mxu0 0.0
    %247 = vmatmul.mubr.f32.gmra.mrb[0].mxu0 %v169
    %v248 = vpop.f32.mrb[0].mxu0
    %v249 = vadd.f32 0.0, %v248
    %v250 = vpop.f32.mrb[0].mxu0
    %251 = vmatprep.mubr.f32.mxu0 0.0
    %252 = vmatmul.mubr.f32.gmra.mrb[0].mxu0 %v172
    %v253 = vpop.f32.mrb[0].mxu0
    %v254 = vadd.f32 0.0, %v253
    %v255 = vpop.f32.mrb[0].mxu0
    %256 = vmatprep.mubr.f32.mxu0 0.0
    %257 = vmatmul.mubr.f32.gmra.mrb[0].mxu0 %v175
    %v258 = vpop.f32.mrb[0].mxu0
    %v259 = vadd.f32 0.0, %v258
    %v260 = vpop.f32.mrb[0].mxu0
    %261 = vdwg.mxu0
    %v262 = vld [vmem:[%s1] sm:$0xff]
    %v263 = vld [vmem:[%s5] sm:$0xff]
    %v264 = vld [vmem:[%s5 + $0x8] sm:$0xff]
    %v265 = vld [vmem:[%s5 + $0x10] sm:$0xff]
    %v266 = vld [vmem:[%s5 + $0x18] sm:$0xff]
    %v268 = vsel %vm164, %v262, 0
    %270 = vmatprep.subr.mxu0 0.0
    %271 = vmatpush1.msra.mxu0 %v263
    %272 = vmatprep.subr.mxu0 0.0
    %273 = vmatpush1.msra.mxu0 %v264
    %274 = vmatprep.subr.mxu0 0.0
    %275 = vmatpush1.msra.mxu0 %v265
    %276 = vmatprep.subr.mxu0 0.0
    %277 = vmatpush1.msra.mxu0 %v266
    %278 = vmatprep.subr.mxu0 0.0
    %279 = vmatpush1.msra.mxu0 0.0
    %280 = vmatprep.subr.mxu0 0.0
    %281 = vmatpush1.msra.mxu0 0.0
    %282 = vmatprep.subr.mxu0 0.0
    %283 = vmatpush1.msra.mxu0 0.0
    %284 = vmatprep.subr.mxu0 0.0
    %285 = vmatpush1.msra.mxu0 0.0
    %286 = vmatprep.subr.mxu0 0.0
    %287 = vmatpush1.msra.mxu0 0.0
    %288 = vmatprep.subr.mxu0 0.0
    %289 = vmatpush1.msra.mxu0 0.0
    %290 = vmatprep.subr.mxu0 0.0
    %291 = vmatpush1.msra.mxu0 0.0
    %292 = vmatprep.subr.mxu0 0.0
    %293 = vmatpush1.msra.mxu0 0.0
    %294 = vmatprep.subr.mxu0 0.0
    %295 = vmatpush1.msra.mxu0 0.0
    %296 = vmatprep.subr.mxu0 0.0
    %297 = vmatpush1.msra.mxu0 0.0
    %298 = vmatprep.subr.mxu0 0.0
    %299 = vmatpush1.msra.mxu0 0.0
    %300 = vmatprep.subr.mxu0 0.0
    %301 = vmatpush1.msra.mxu0 0.0
    %302 = vmatprep.subr.mxu0 0.0
    %303 = vmatpush1.msra.mxu0 0.0
    %304 = vmatprep.subr.mxu0 0.0
    %305 = vmatpush1.msra.mxu0 0.0
    %306 = vmatprep.subr.mxu0 0.0
    %307 = vmatpush1.msra.mxu0 0.0
    %308 = vmatprep.subr.mxu0 0.0
    %309 = vmatpush1.msra.mxu0 0.0
    %310 = vmatprep.subr.mxu0 0.0
    %311 = vmatpush1.msra.mxu0 0.0
    %312 = vmatprep.subr.mxu0 0.0
    %313 = vmatpush1.msra.mxu0 0.0
    %314 = vmatprep.subr.mxu0 0.0
    %315 = vmatpush1.msra.mxu0 0.0
    %316 = vmatprep.subr.mxu0 0.0
    %317 = vmatpush1.msra.mxu0 0.0
    %318 = vmatprep.subr.mxu0 0.0
    %319 = vmatpush1.msra.mxu0 0.0
    %320 = vmatprep.subr.mxu0 0.0
    %321 = vmatpush1.msra.mxu0 0.0
    %322 = vmatprep.subr.mxu0 0.0
    %323 = vmatpush1.msra.mxu0 0.0
    %324 = vmatprep.subr.mxu0 0.0
    %325 = vmatpush1.msra.mxu0 0.0
    %326 = vmatprep.subr.mxu0 0.0
    %327 = vmatpush1.msra.mxu0 0.0
    %328 = vmatprep.subr.mxu0 0.0
    %329 = vmatpush1.msra.mxu0 0.0
    %330 = vmatprep.subr.mxu0 0.0
    %331 = vmatpush1.msra.mxu0 0.0
    %332 = vmatprep.subr.mxu0 0.0
    %333 = vmatpush1.msra.mxu0 0.0
    %334 = vmatprep.mubr.f32.mxu0 0.0
    %335 = vmatmul.mubr.f32.gmra.mrb[0].mxu0 %v268
    %v336 = vpop.f32.mrb[0].mxu0
    %v337 = vadd.f32 0.0, %v336
    %v338 = vpop.f32.mrb[0].mxu0
    %339 = vdwg.mxu0
    %vm340 = vcmask 64512
    %v342 = vsel %vm340, %v337, 0
    %v345 = vsel %vm340, %v244, 0
    %v348 = vsel %vm340, %v249, 0
    %350 = vmatprep.subr.mxu0 0.0
    %351 = vmatpush1.xpose.msra.mxu0 %v345
    %352 = vmatprep.subr.mxu0 0.0
    %353 = vmatpush1.xpose.msra.mxu0 %v348
    %354 = vmatprep.subr.mxu0 0.0
    %355 = vmatpush1.xpose.msra.mxu0 0.0
    %356 = vmatprep.subr.mxu0 0.0
    %357 = vmatpush1.xpose.msra.mxu0 0.0
    %358 = vmatprep.subr.mxu0 0.0
    %359 = vmatpush1.xpose.msra.mxu0 0.0
    %360 = vmatprep.subr.mxu0 0.0
    %361 = vmatpush1.xpose.msra.mxu0 0.0
    %362 = vmatprep.subr.mxu0 0.0
    %363 = vmatpush1.xpose.msra.mxu0 0.0
    %364 = vmatprep.subr.mxu0 0.0
    %365 = vmatpush1.xpose.msra.mxu0 0.0
    %366 = vmatprep.subr.mxu0 0.0
    %367 = vmatpush1.xpose.msra.mxu0 0.0
    %368 = vmatprep.subr.mxu0 0.0
    %369 = vmatpush1.xpose.msra.mxu0 0.0
    %370 = vmatprep.subr.mxu0 0.0
    %371 = vmatpush1.xpose.msra.mxu0 0.0
    %372 = vmatprep.subr.mxu0 0.0
    %373 = vmatpush1.xpose.msra.mxu0 0.0
    %374 = vmatprep.subr.mxu0 0.0
    %375 = vmatpush1.xpose.msra.mxu0 0.0
    %376 = vmatprep.subr.mxu0 0.0
    %377 = vmatpush1.xpose.msra.mxu0 0.0
    %378 = vmatprep.subr.mxu0 0.0
    %379 = vmatpush1.xpose.msra.mxu0 0.0
    %380 = vmatprep.subr.mxu0 0.0
    %381 = vmatpush1.xpose.msra.mxu0 0.0
    %382 = vmatprep.subr.mxu0 0.0
    %383 = vmatpush1.xpose.msra.mxu0 0.0
    %384 = vmatprep.subr.mxu0 0.0
    %385 = vmatpush1.xpose.msra.mxu0 0.0
    %386 = vmatprep.subr.mxu0 0.0
    %387 = vmatpush1.xpose.msra.mxu0 0.0
    %388 = vmatprep.subr.mxu0 0.0
    %389 = vmatpush1.xpose.msra.mxu0 0.0
    %390 = vmatprep.subr.mxu0 0.0
    %391 = vmatpush1.xpose.msra.mxu0 0.0
    %392 = vmatprep.subr.mxu0 0.0
    %393 = vmatpush1.xpose.msra.mxu0 0.0
    %394 = vmatprep.subr.mxu0 0.0
    %395 = vmatpush1.xpose.msra.mxu0 0.0
    %396 = vmatprep.subr.mxu0 0.0
    %397 = vmatpush1.xpose.msra.mxu0 0.0
    %398 = vmatprep.subr.mxu0 0.0
    %399 = vmatpush1.xpose.msra.mxu0 0.0
    %400 = vmatprep.subr.mxu0 0.0
    %401 = vmatpush1.xpose.msra.mxu0 0.0
    %402 = vmatprep.subr.mxu0 0.0
    %403 = vmatpush1.xpose.msra.mxu0 0.0
    %404 = vmatprep.subr.mxu0 0.0
    %405 = vmatpush1.xpose.msra.mxu0 0.0
    %406 = vmatprep.subr.mxu0 0.0
    %407 = vmatpush1.xpose.msra.mxu0 0.0
    %408 = vmatprep.subr.mxu0 0.0
    %409 = vmatpush1.xpose.msra.mxu0 0.0
    %410 = vmatprep.subr.mxu0 0.0
    %411 = vmatpush1.xpose.msra.mxu0 0.0
    %412 = vmatprep.subr.mxu0 0.0
    %413 = vmatpush1.xpose.msra.mxu0 0.0
    %414 = vmatprep.mubr.f32.mxu0 0.0
    %415 = vmatmul.mubr.f32.gmra.mrb[0].mxu0 %v342
    %v416 = vpop.f32.mrb[0].mxu0
    %v417 = vadd.f32 0.0, %v416
    %v418 = vpop.f32.mrb[0].mxu0
    %419 = vdwg.mxu0
    %vm420 = vcmask 130048
    %v421 = vsel %vm420, %v417, -inf
    %422 = vmax.xlane.f32.xlu0 %v421
    %v423 = vpop.xlane.xlu0 %422
    %v424 = vsub.f32 %v417, %v423
    %v425 = vmul.f32 %v424, 1.442695
    %v426 = vpow.pop %v425
    %v427 = vsel %vm420, %v426, 0.0
    %428 = vadd.xlane.f32.xlu0 %v427
    %v429 = vpop.xlane.xlu0 %428
    %v430 = vrcp.pop %v429
    %v431 = vmul.f32 %v426, %v430
    %432 = vrot.lane.b32.xlu0 %v244, 96
    %v433 = vpop.permute.xlu0 %432
    %434 = vrot.lane.b32.xlu0 %v249, 96
    %v435 = vpop.permute.xlu0 %434
    %v439 = vsel %vm420, %v431, 0
    %441 = vmatprep.subr.mxu0 0.0
    %442 = vmatpush1.msra.mxu0 %v433
    %443 = vmatprep.subr.mxu0 0.0
    %444 = vmatpush1.msra.mxu0 %v435
    %445 = vmatprep.subr.mxu0 0.0
    %446 = vmatpush1.msra.mxu0 0.0
    %447 = vmatprep.subr.mxu0 0.0
    %448 = vmatpush1.msra.mxu0 0.0
    %449 = vmatprep.subr.mxu0 0.0
    %450 = vmatpush1.msra.mxu0 0.0
    %451 = vmatprep.subr.mxu0 0.0
    %452 = vmatpush1.msra.mxu0 0.0
    %453 = vmatprep.subr.mxu0 0.0
    %454 = vmatpush1.msra.mxu0 0.0
    %455 = vmatprep.subr.mxu0 0.0
    %456 = vmatpush1.msra.mxu0 0.0
    %457 = vmatprep.subr.mxu0 0.0
    %458 = vmatpush1.msra.mxu0 0.0
    %459 = vmatprep.subr.mxu0 0.0
    %460 = vmatpush1.msra.mxu0 0.0
    %461 = vmatprep.subr.mxu0 0.0
    %462 = vmatpush1.msra.mxu0 0.0
    %463 = vmatprep.subr.mxu0 0.0
    %464 = vmatpush1.msra.mxu0 0.0
    %465 = vmatprep.subr.mxu0 0.0
    %466 = vmatpush1.msra.mxu0 0.0
    %467 = vmatprep.subr.mxu0 0.0
    %468 = vmatpush1.msra.mxu0 0.0
    %469 = vmatprep.subr.mxu0 0.0
    %470 = vmatpush1.msra.mxu0 0.0
    %471 = vmatprep.subr.mxu0 0.0
    %472 = vmatpush1.msra.mxu0 0.0
    %473 = vmatprep.subr.mxu0 0.0
    %474 = vmatpush1.msra.mxu0 0.0
    %475 = vmatprep.subr.mxu0 0.0
    %476 = vmatpush1.msra.mxu0 0.0
    %477 = vmatprep.subr.mxu0 0.0
    %478 = vmatpush1.msra.mxu0 0.0
    %479 = vmatprep.subr.mxu0 0.0
    %480 = vmatpush1.msra.mxu0 0.0
    %481 = vmatprep.subr.mxu0 0.0
    %482 = vmatpush1.msra.mxu0 0.0
    %483 = vmatprep.subr.mxu0 0.0
    %484 = vmatpush1.msra.mxu0 0.0
    %485 = vmatprep.subr.mxu0 0.0
    %486 = vmatpush1.msra.mxu0 0.0
    %487 = vmatprep.subr.mxu0 0.0
    %488 = vmatpush1.msra.mxu0 0.0
    %489 = vmatprep.subr.mxu0 0.0
    %490 = vmatpush1.msra.mxu0 0.0
    %491 = vmatprep.subr.mxu0 0.0
    %492 = vmatpush1.msra.mxu0 0.0
    %493 = vmatprep.subr.mxu0 0.0
    %494 = vmatpush1.msra.mxu0 0.0
    %495 = vmatprep.subr.mxu0 0.0
    %496 = vmatpush1.msra.mxu0 0.0
    %497 = vmatprep.subr.mxu0 0.0
    %498 = vmatpush1.msra.mxu0 0.0
    %499 = vmatprep.subr.mxu0 0.0
    %500 = vmatpush1.msra.mxu0 0.0
    %501 = vmatprep.subr.mxu0 0.0
    %502 = vmatpush1.msra.mxu0 0.0
    %503 = vmatprep.subr.mxu0 0.0
    %504 = vmatpush1.msra.mxu0 0.0
    %505 = vmatprep.mubr.f32.mxu0 0.0
    %506 = vmatmul.mubr.f32.gmra.mrb[0].mxu0 %v439
    %v507 = vpop.f32.mrb[0].mxu0
    %v508 = vadd.f32 0.0, %v507
    %v509 = vpop.f32.mrb[0].mxu0
    %510 = vdwg.mxu0
    %511 = vrot.lane.b32.xlu0 %v337, 120
    %v512 = vpop.permute.xlu0 %511
    %513 = vrot.lane.b32.xlu0 %v244, 120
    %v514 = vpop.permute.xlu0 %513
    %515 = vrot.lane.b32.xlu0 %v249, 120
    %v516 = vpop.permute.xlu0 %515
    %v517 = vsel %vm340, %v512, 0
    %v519 = vsel %vm340, %v514, 0
    %v521 = vsel %vm340, %v516, 0
    %523 = vmatprep.subr.mxu0 0.0
    %524 = vmatpush1.xpose.msra.mxu0 %v519
    %525 = vmatprep.subr.mxu0 0.0
    %526 = vmatpush1.xpose.msra.mxu0 %v521
    %527 = vmatprep.subr.mxu0 0.0
    %528 = vmatpush1.xpose.msra.mxu0 0.0
    %529 = vmatprep.subr.mxu0 0.0
    %530 = vmatpush1.xpose.msra.mxu0 0.0
    %531 = vmatprep.subr.mxu0 0.0
    %532 = vmatpush1.xpose.msra.mxu0 0.0
    %533 = vmatprep.subr.mxu0 0.0
    %534 = vmatpush1.xpose.msra.mxu0 0.0
    %535 = vmatprep.subr.mxu0 0.0
    %536 = vmatpush1.xpose.msra.mxu0 0.0
    %537 = vmatprep.subr.mxu0 0.0
    %538 = vmatpush1.xpose.msra.mxu0 0.0
    %539 = vmatprep.subr.mxu0 0.0
    %540 = vmatpush1.xpose.msra.mxu0 0.0
    %541 = vmatprep.subr.mxu0 0.0
    %542 = vmatpush1.xpose.msra.mxu0 0.0
    %543 = vmatprep.subr.mxu0 0.0
    %544 = vmatpush1.xpose.msra.mxu0 0.0
    %545 = vmatprep.subr.mxu0 0.0
    %546 = vmatpush1.xpose.msra.mxu0 0.0
    %547 = vmatprep.subr.mxu0 0.0
    %548 = vmatpush1.xpose.msra.mxu0 0.0
    %549 = vmatprep.subr.mxu0 0.0
    %550 = vmatpush1.xpose.msra.mxu0 0.0
    %551 = vmatprep.subr.mxu0 0.0
    %552 = vmatpush1.xpose.msra.mxu0 0.0
    %553 = vmatprep.subr.mxu0 0.0
    %554 = vmatpush1.xpose.msra.mxu0 0.0
    %555 = vmatprep.subr.mxu0 0.0
    %556 = vmatpush1.xpose.msra.mxu0 0.0
    %557 = vmatprep.subr.mxu0 0.0
    %558 = vmatpush1.xpose.msra.mxu0 0.0
    %559 = vmatprep.subr.mxu0 0.0
    %560 = vmatpush1.xpose.msra.mxu0 0.0
    %561 = vmatprep.subr.mxu0 0.0
    %562 = vmatpush1.xpose.msra.mxu0 0.0
    %563 = vmatprep.subr.mxu0 0.0
    %564 = vmatpush1.xpose.msra.mxu0 0.0
    %565 = vmatprep.subr.mxu0 0.0
    %566 = vmatpush1.xpose.msra.mxu0 0.0
    %567 = vmatprep.subr.mxu0 0.0
    %568 = vmatpush1.xpose.msra.mxu0 0.0
    %569 = vmatprep.subr.mxu0 0.0
    %570 = vmatpush1.xpose.msra.mxu0 0.0
    %571 = vmatprep.subr.mxu0 0.0
    %572 = vmatpush1.xpose.msra.mxu0 0.0
    %573 = vmatprep.subr.mxu0 0.0
    %574 = vmatpush1.xpose.msra.mxu0 0.0
    %575 = vmatprep.subr.mxu0 0.0
    %576 = vmatpush1.xpose.msra.mxu0 0.0
    %577 = vmatprep.subr.mxu0 0.0
    %578 = vmatpush1.xpose.msra.mxu0 0.0
    %579 = vmatprep.subr.mxu0 0.0
    %580 = vmatpush1.xpose.msra.mxu0 0.0
    %581 = vmatprep.subr.mxu0 0.0
    %582 = vmatpush1.xpose.msra.mxu0 0.0
    %583 = vmatprep.subr.mxu0 0.0
    %584 = vmatpush1.xpose.msra.mxu0 0.0
    %585 = vmatprep.subr.mxu0 0.0
    %586 = vmatpush1.xpose.msra.mxu0 0.0
    %587 = vmatprep.mubr.f32.mxu0 0.0
    %588 = vmatmul.mubr.f32.gmra.mrb[0].mxu0 %v517
    %v589 = vpop.f32.mrb[0].mxu0
    %v590 = vadd.f32 0.0, %v589
    %v591 = vpop.f32.mrb[0].mxu0
    %592 = vdwg.mxu0
    %v593 = vsel %vm420, %v590, -inf
    %594 = vmax.xlane.f32.xlu0 %v593
    %v595 = vpop.xlane.xlu0 %594
    %v596 = vsub.f32 %v590, %v595
    %v597 = vmul.f32 %v596, 1.442695
    %v598 = vpow.pop %v597
    %v599 = vsel %vm420, %v598, 0.0
    %600 = vadd.xlane.f32.xlu0 %v599
    %v601 = vpop.xlane.xlu0 %600
    %v602 = vrcp.pop %v601
    %v603 = vmul.f32 %v598, %v602
    %604 = vrot.lane.b32.xlu0 %v244, 88
    %v605 = vpop.permute.xlu0 %604
    %606 = vrot.lane.b32.xlu0 %v249, 88
    %v607 = vpop.permute.xlu0 %606
    %v611 = vsel %vm420, %v603, 0
    %613 = vmatprep.subr.mxu0 0.0
    %614 = vmatpush1.msra.mxu0 %v605
    %615 = vmatprep.subr.mxu0 0.0
    %616 = vmatpush1.msra.mxu0 %v607
    %617 = vmatprep.subr.mxu0 0.0
    %618 = vmatpush1.msra.mxu0 0.0
    %619 = vmatprep.subr.mxu0 0.0
    %620 = vmatpush1.msra.mxu0 0.0
    %621 = vmatprep.subr.mxu0 0.0
    %622 = vmatpush1.msra.mxu0 0.0
    %623 = vmatprep.subr.mxu0 0.0
    %624 = vmatpush1.msra.mxu0 0.0
    %625 = vmatprep.subr.mxu0 0.0
    %626 = vmatpush1.msra.mxu0 0.0
    %627 = vmatprep.subr.mxu0 0.0
    %628 = vmatpush1.msra.mxu0 0.0
    %629 = vmatprep.subr.mxu0 0.0
    %630 = vmatpush1.msra.mxu0 0.0
    %631 = vmatprep.subr.mxu0 0.0
    %632 = vmatpush1.msra.mxu0 0.0
    %633 = vmatprep.subr.mxu0 0.0
    %634 = vmatpush1.msra.mxu0 0.0
    %635 = vmatprep.subr.mxu0 0.0
    %636 = vmatpush1.msra.mxu0 0.0
    %637 = vmatprep.subr.mxu0 0.0
    %638 = vmatpush1.msra.mxu0 0.0
    %639 = vmatprep.subr.mxu0 0.0
    %640 = vmatpush1.msra.mxu0 0.0
    %641 = vmatprep.subr.mxu0 0.0
    %642 = vmatpush1.msra.mxu0 0.0
    %643 = vmatprep.subr.mxu0 0.0
    %644 = vmatpush1.msra.mxu0 0.0
    %645 = vmatprep.subr.mxu0 0.0
    %646 = vmatpush1.msra.mxu0 0.0
    %647 = vmatprep.subr.mxu0 0.0
    %648 = vmatpush1.msra.mxu0 0.0
    %649 = vmatprep.subr.mxu0 0.0
    %650 = vmatpush1.msra.mxu0 0.0
    %651 = vmatprep.subr.mxu0 0.0
    %652 = vmatpush1.msra.mxu0 0.0
    %653 = vmatprep.subr.mxu0 0.0
    %654 = vmatpush1.msra.mxu0 0.0
    %655 = vmatprep.subr.mxu0 0.0
    %656 = vmatpush1.msra.mxu0 0.0
    %657 = vmatprep.subr.mxu0 0.0
    %658 = vmatpush1.msra.mxu0 0.0
    %659 = vmatprep.subr.mxu0 0.0
    %660 = vmatpush1.msra.mxu0 0.0
    %661 = vmatprep.subr.mxu0 0.0
    %662 = vmatpush1.msra.mxu0 0.0
    %663 = vmatprep.subr.mxu0 0.0
    %664 = vmatpush1.msra.mxu0 0.0
    %665 = vmatprep.subr.mxu0 0.0
    %666 = vmatpush1.msra.mxu0 0.0
    %667 = vmatprep.subr.mxu0 0.0
    %668 = vmatpush1.msra.mxu0 0.0
    %669 = vmatprep.subr.mxu0 0.0
    %670 = vmatpush1.msra.mxu0 0.0
    %671 = vmatprep.subr.mxu0 0.0
    %672 = vmatpush1.msra.mxu0 0.0
    %673 = vmatprep.subr.mxu0 0.0
    %674 = vmatpush1.msra.mxu0 0.0
    %675 = vmatprep.subr.mxu0 0.0
    %676 = vmatpush1.msra.mxu0 0.0
    %677 = vmatprep.mubr.f32.mxu0 0.0
    %678 = vmatmul.mubr.f32.gmra.mrb[0].mxu0 %v611
    %v679 = vpop.f32.mrb[0].mxu0
    %v680 = vadd.f32 0.0, %v679
    %v681 = vpop.f32.mrb[0].mxu0
    %682 = vdwg.mxu0
    %683 = vrot.lane.b32.xlu0 %v337, 112
    %v684 = vpop.permute.xlu0 %683
    %685 = vrot.lane.b32.xlu0 %v244, 112
    %v686 = vpop.permute.xlu0 %685
    %687 = vrot.lane.b32.xlu0 %v249, 112
    %v688 = vpop.permute.xlu0 %687
    %v689 = vsel %vm340, %v684, 0
    %v691 = vsel %vm340, %v686, 0
    %v693 = vsel %vm340, %v688, 0
    %695 = vmatprep.subr.mxu0 0.0
    %696 = vmatpush1.xpose.msra.mxu0 %v691
    %697 = vmatprep.subr.mxu0 0.0
    %698 = vmatpush1.xpose.msra.mxu0 %v693
    %699 = vmatprep.subr.mxu0 0.0
    %700 = vmatpush1.xpose.msra.mxu0 0.0
    %701 = vmatprep.subr.mxu0 0.0
    %702 = vmatpush1.xpose.msra.mxu0 0.0
    %703 = vmatprep.subr.mxu0 0.0
    %704 = vmatpush1.xpose.msra.mxu0 0.0
    %705 = vmatprep.subr.mxu0 0.0
    %706 = vmatpush1.xpose.msra.mxu0 0.0
    %707 = vmatprep.subr.mxu0 0.0
    %708 = vmatpush1.xpose.msra.mxu0 0.0
    %709 = vmatprep.subr.mxu0 0.0
    %710 = vmatpush1.xpose.msra.mxu0 0.0
    %711 = vmatprep.subr.mxu0 0.0
    %712 = vmatpush1.xpose.msra.mxu0 0.0
    %713 = vmatprep.subr.mxu0 0.0
    %714 = vmatpush1.xpose.msra.mxu0 0.0
    %715 = vmatprep.subr.mxu0 0.0
    %716 = vmatpush1.xpose.msra.mxu0 0.0
    %717 = vmatprep.subr.mxu0 0.0
    %718 = vmatpush1.xpose.msra.mxu0 0.0
    %719 = vmatprep.subr.mxu0 0.0
    %720 = vmatpush1.xpose.msra.mxu0 0.0
    %721 = vmatprep.subr.mxu0 0.0
    %722 = vmatpush1.xpose.msra.mxu0 0.0
    %723 = vmatprep.subr.mxu0 0.0
    %724 = vmatpush1.xpose.msra.mxu0 0.0
    %725 = vmatprep.subr.mxu0 0.0
    %726 = vmatpush1.xpose.msra.mxu0 0.0
    %727 = vmatprep.subr.mxu0 0.0
    %728 = vmatpush1.xpose.msra.mxu0 0.0
    %729 = vmatprep.subr.mxu0 0.0
    %730 = vmatpush1.xpose.msra.mxu0 0.0
    %731 = vmatprep.subr.mxu0 0.0
    %732 = vmatpush1.xpose.msra.mxu0 0.0
    %733 = vmatprep.subr.mxu0 0.0
    %734 = vmatpush1.xpose.msra.mxu0 0.0
    %735 = vmatprep.subr.mxu0 0.0
    %736 = vmatpush1.xpose.msra.mxu0 0.0
    %737 = vmatprep.subr.mxu0 0.0
    %738 = vmatpush1.xpose.msra.mxu0 0.0
    %739 = vmatprep.subr.mxu0 0.0
    %740 = vmatpush1.xpose.msra.mxu0 0.0
    %741 = vmatprep.subr.mxu0 0.0
    %742 = vmatpush1.xpose.msra.mxu0 0.0
    %743 = vmatprep.subr.mxu0 0.0
    %744 = vmatpush1.xpose.msra.mxu0 0.0
    %745 = vmatprep.subr.mxu0 0.0
    %746 = vmatpush1.xpose.msra.mxu0 0.0
    %747 = vmatprep.subr.mxu0 0.0
    %748 = vmatpush1.xpose.msra.mxu0 0.0
    %749 = vmatprep.subr.mxu0 0.0
    %750 = vmatpush1.xpose.msra.mxu0 0.0
    %751 = vmatprep.subr.mxu0 0.0
    %752 = vmatpush1.xpose.msra.mxu0 0.0
    %753 = vmatprep.subr.mxu0 0.0
    %754 = vmatpush1.xpose.msra.mxu0 0.0
    %755 = vmatprep.subr.mxu0 0.0
    %756 = vmatpush1.xpose.msra.mxu0 0.0
    %757 = vmatprep.subr.mxu0 0.0
    %758 = vmatpush1.xpose.msra.mxu0 0.0
    %759 = vmatprep.mubr.f32.mxu0 0.0
    %760 = vmatmul.mubr.f32.gmra.mrb[0].mxu0 %v689
    %v761 = vpop.f32.mrb[0].mxu0
    %v762 = vadd.f32 0.0, %v761
    %v763 = vpop.f32.mrb[0].mxu0
    %764 = vdwg.mxu0
    %v765 = vsel %vm420, %v762, -inf
    %766 = vmax.xlane.f32.xlu0 %v765
    %v767 = vpop.xlane.xlu0 %766
    %v768 = vsub.f32 %v762, %v767
    %v769 = vmul.f32 %v768, 1.442695
    %v770 = vpow.pop %v769
    %v771 = vsel %vm420, %v770, 0.0
    %772 = vadd.xlane.f32.xlu0 %v771
    %v773 = vpop.xlane.xlu0 %772
    %v774 = vrcp.pop %v773
    %v775 = vmul.f32 %v770, %v774
    %776 = vrot.lane.b32.xlu0 %v244, 80
    %v777 = vpop.permute.xlu0 %776
    %778 = vrot.lane.b32.xlu0 %v249, 80
    %v779 = vpop.permute.xlu0 %778
    %v783 = vsel %vm420, %v775, 0
    %785 = vmatprep.subr.mxu0 0.0
    %786 = vmatpush1.msra.mxu0 %v777
    %787 = vmatprep.subr.mxu0 0.0
    %788 = vmatpush1.msra.mxu0 %v779
    %789 = vmatprep.subr.mxu0 0.0
    %790 = vmatpush1.msra.mxu0 0.0
    %791 = vmatprep.subr.mxu0 0.0
    %792 = vmatpush1.msra.mxu0 0.0
    %793 = vmatprep.subr.mxu0 0.0
    %794 = vmatpush1.msra.mxu0 0.0
    %795 = vmatprep.subr.mxu0 0.0
    %796 = vmatpush1.msra.mxu0 0.0
    %797 = vmatprep.subr.mxu0 0.0
    %798 = vmatpush1.msra.mxu0 0.0
    %799 = vmatprep.subr.mxu0 0.0
    %800 = vmatpush1.msra.mxu0 0.0
    %801 = vmatprep.subr.mxu0 0.0
    %802 = vmatpush1.msra.mxu0 0.0
    %803 = vmatprep.subr.mxu0 0.0
    %804 = vmatpush1.msra.mxu0 0.0
    %805 = vmatprep.subr.mxu0 0.0
    %806 = vmatpush1.msra.mxu0 0.0
    %807 = vmatprep.subr.mxu0 0.0
    %808 = vmatpush1.msra.mxu0 0.0
    %809 = vmatprep.subr.mxu0 0.0
    %810 = vmatpush1.msra.mxu0 0.0
    %811 = vmatprep.subr.mxu0 0.0
    %812 = vmatpush1.msra.mxu0 0.0
    %813 = vmatprep.subr.mxu0 0.0
    %814 = vmatpush1.msra.mxu0 0.0
    %815 = vmatprep.subr.mxu0 0.0
    %816 = vmatpush1.msra.mxu0 0.0
    %817 = vmatprep.subr.mxu0 0.0
    %818 = vmatpush1.msra.mxu0 0.0
    %819 = vmatprep.subr.mxu0 0.0
    %820 = vmatpush1.msra.mxu0 0.0
    %821 = vmatprep.subr.mxu0 0.0
    %822 = vmatpush1.msra.mxu0 0.0
    %823 = vmatprep.subr.mxu0 0.0
    %824 = vmatpush1.msra.mxu0 0.0
    %825 = vmatprep.subr.mxu0 0.0
    %826 = vmatpush1.msra.mxu0 0.0
    %827 = vmatprep.subr.mxu0 0.0
    %828 = vmatpush1.msra.mxu0 0.0
    %829 = vmatprep.subr.mxu0 0.0
    %830 = vmatpush1.msra.mxu0 0.0
    %831 = vmatprep.subr.mxu0 0.0
    %832 = vmatpush1.msra.mxu0 0.0
    %833 = vmatprep.subr.mxu0 0.0
    %834 = vmatpush1.msra.mxu0 0.0
    %835 = vmatprep.subr.mxu0 0.0
    %836 = vmatpush1.msra.mxu0 0.0
    %837 = vmatprep.subr.mxu0 0.0
    %838 = vmatpush1.msra.mxu0 0.0
    %839 = vmatprep.subr.mxu0 0.0
    %840 = vmatpush1.msra.mxu0 0.0
    %841 = vmatprep.subr.mxu0 0.0
    %842 = vmatpush1.msra.mxu0 0.0
    %843 = vmatprep.subr.mxu0 0.0
    %844 = vmatpush1.msra.mxu0 0.0
    %845 = vmatprep.subr.mxu0 0.0
    %846 = vmatpush1.msra.mxu0 0.0
    %847 = vmatprep.subr.mxu0 0.0
    %848 = vmatpush1.msra.mxu0 0.0
    %849 = vmatprep.mubr.f32.mxu0 0.0
    %850 = vmatmul.mubr.f32.gmra.mrb[0].mxu0 %v783
    %v851 = vpop.f32.mrb[0].mxu0
    %v852 = vadd.f32 0.0, %v851
    %v853 = vpop.f32.mrb[0].mxu0
    %854 = vdwg.mxu0
    %855 = vrot.lane.b32.xlu0 %v337, 104
    %v856 = vpop.permute.xlu0 %855
    %857 = vrot.lane.b32.xlu0 %v244, 104
    %v858 = vpop.permute.xlu0 %857
    %859 = vrot.lane.b32.xlu0 %v249, 104
    %v860 = vpop.permute.xlu0 %859
    %v861 = vsel %vm340, %v856, 0
    %v863 = vsel %vm340, %v858, 0
    %v865 = vsel %vm340, %v860, 0
    %867 = vmatprep.subr.mxu0 0.0
    %868 = vmatpush1.xpose.msra.mxu0 %v863
    %869 = vmatprep.subr.mxu0 0.0
    %870 = vmatpush1.xpose.msra.mxu0 %v865
    %871 = vmatprep.subr.mxu0 0.0
    %872 = vmatpush1.xpose.msra.mxu0 0.0
    %873 = vmatprep.subr.mxu0 0.0
    %874 = vmatpush1.xpose.msra.mxu0 0.0
    %875 = vmatprep.subr.mxu0 0.0
    %876 = vmatpush1.xpose.msra.mxu0 0.0
    %877 = vmatprep.subr.mxu0 0.0
    %878 = vmatpush1.xpose.msra.mxu0 0.0
    %879 = vmatprep.subr.mxu0 0.0
    %880 = vmatpush1.xpose.msra.mxu0 0.0
    %881 = vmatprep.subr.mxu0 0.0
    %882 = vmatpush1.xpose.msra.mxu0 0.0
    %883 = vmatprep.subr.mxu0 0.0
    %884 = vmatpush1.xpose.msra.mxu0 0.0
    %885 = vmatprep.subr.mxu0 0.0
    %886 = vmatpush1.xpose.msra.mxu0 0.0
    %887 = vmatprep.subr.mxu0 0.0
    %888 = vmatpush1.xpose.msra.mxu0 0.0
    %889 = vmatprep.subr.mxu0 0.0
    %890 = vmatpush1.xpose.msra.mxu0 0.0
    %891 = vmatprep.subr.mxu0 0.0
    %892 = vmatpush1.xpose.msra.mxu0 0.0
    %893 = vmatprep.subr.mxu0 0.0
    %894 = vmatpush1.xpose.msra.mxu0 0.0
    %895 = vmatprep.subr.mxu0 0.0
    %896 = vmatpush1.xpose.msra.mxu0 0.0
    %897 = vmatprep.subr.mxu0 0.0
    %898 = vmatpush1.xpose.msra.mxu0 0.0
    %899 = vmatprep.subr.mxu0 0.0
    %900 = vmatpush1.xpose.msra.mxu0 0.0
    %901 = vmatprep.subr.mxu0 0.0
    %902 = vmatpush1.xpose.msra.mxu0 0.0
    %903 = vmatprep.subr.mxu0 0.0
    %904 = vmatpush1.xpose.msra.mxu0 0.0
    %905 = vmatprep.subr.mxu0 0.0
    %906 = vmatpush1.xpose.msra.mxu0 0.0
    %907 = vmatprep.subr.mxu0 0.0
    %908 = vmatpush1.xpose.msra.mxu0 0.0
    %909 = vmatprep.subr.mxu0 0.0
    %910 = vmatpush1.xpose.msra.mxu0 0.0
    %911 = vmatprep.subr.mxu0 0.0
    %912 = vmatpush1.xpose.msra.mxu0 0.0
    %913 = vmatprep.subr.mxu0 0.0
    %914 = vmatpush1.xpose.msra.mxu0 0.0
    %915 = vmatprep.subr.mxu0 0.0
    %916 = vmatpush1.xpose.msra.mxu0 0.0
    %917 = vmatprep.subr.mxu0 0.0
    %918 = vmatpush1.xpose.msra.mxu0 0.0
    %919 = vmatprep.subr.mxu0 0.0
    %920 = vmatpush1.xpose.msra.mxu0 0.0
    %921 = vmatprep.subr.mxu0 0.0
    %922 = vmatpush1.xpose.msra.mxu0 0.0
    %923 = vmatprep.subr.mxu0 0.0
    %924 = vmatpush1.xpose.msra.mxu0 0.0
    %925 = vmatprep.subr.mxu0 0.0
    %926 = vmatpush1.xpose.msra.mxu0 0.0
    %927 = vmatprep.subr.mxu0 0.0
    %928 = vmatpush1.xpose.msra.mxu0 0.0
    %929 = vmatprep.subr.mxu0 0.0
    %930 = vmatpush1.xpose.msra.mxu0 0.0
    %931 = vmatprep.mubr.f32.mxu0 0.0
    %932 = vmatmul.mubr.f32.gmra.mrb[0].mxu0 %v861
    %v933 = vpop.f32.mrb[0].mxu0
    %v934 = vadd.f32 0.0, %v933
    %v935 = vpop.f32.mrb[0].mxu0
    %936 = vdwg.mxu0
    %v937 = vsel %vm420, %v934, -inf
    %938 = vmax.xlane.f32.xlu0 %v937
    %v939 = vpop.xlane.xlu0 %938
    %v940 = vsub.f32 %v934, %v939
    %v941 = vmul.f32 %v940, 1.442695
    %v942 = vpow.pop %v941
    %v943 = vsel %vm420, %v942, 0.0
    %944 = vadd.xlane.f32.xlu0 %v943
    %v945 = vpop.xlane.xlu0 %944
    %v946 = vrcp.pop %v945
    %v947 = vmul.f32 %v942, %v946
    %948 = vrot.lane.b32.xlu0 %v244, 72
    %v949 = vpop.permute.xlu0 %948
    %950 = vrot.lane.b32.xlu0 %v249, 72
    %v951 = vpop.permute.xlu0 %950
    %v955 = vsel %vm420, %v947, 0
    %957 = vmatprep.subr.mxu0 0.0
    %958 = vmatpush1.msra.mxu0 %v949
    %959 = vmatprep.subr.mxu0 0.0
    %960 = vmatpush1.msra.mxu0 %v951
    %961 = vmatprep.subr.mxu0 0.0
    %962 = vmatpush1.msra.mxu0 0.0
    %963 = vmatprep.subr.mxu0 0.0
    %964 = vmatpush1.msra.mxu0 0.0
    %965 = vmatprep.subr.mxu0 0.0
    %966 = vmatpush1.msra.mxu0 0.0
    %967 = vmatprep.subr.mxu0 0.0
    %968 = vmatpush1.msra.mxu0 0.0
    %969 = vmatprep.subr.mxu0 0.0
    %970 = vmatpush1.msra.mxu0 0.0
    %971 = vmatprep.subr.mxu0 0.0
    %972 = vmatpush1.msra.mxu0 0.0
    %973 = vmatprep.subr.mxu0 0.0
    %974 = vmatpush1.msra.mxu0 0.0
    %975 = vmatprep.subr.mxu0 0.0
    %976 = vmatpush1.msra.mxu0 0.0
    %977 = vmatprep.subr.mxu0 0.0
    %978 = vmatpush1.msra.mxu0 0.0
    %979 = vmatprep.subr.mxu0 0.0
    %980 = vmatpush1.msra.mxu0 0.0
    %981 = vmatprep.subr.mxu0 0.0
    %982 = vmatpush1.msra.mxu0 0.0
    %983 = vmatprep.subr.mxu0 0.0
    %984 = vmatpush1.msra.mxu0 0.0
    %985 = vmatprep.subr.mxu0 0.0
    %986 = vmatpush1.msra.mxu0 0.0
    %987 = vmatprep.subr.mxu0 0.0
    %988 = vmatpush1.msra.mxu0 0.0
    %989 = vmatprep.subr.mxu0 0.0
    %990 = vmatpush1.msra.mxu0 0.0
    %991 = vmatprep.subr.mxu0 0.0
    %992 = vmatpush1.msra.mxu0 0.0
    %993 = vmatprep.subr.mxu0 0.0
    %994 = vmatpush1.msra.mxu0 0.0
    %995 = vmatprep.subr.mxu0 0.0
    %996 = vmatpush1.msra.mxu0 0.0
    %997 = vmatprep.subr.mxu0 0.0
    %998 = vmatpush1.msra.mxu0 0.0
    %999 = vmatprep.subr.mxu0 0.0
    %1000 = vmatpush1.msra.mxu0 0.0
    %1001 = vmatprep.subr.mxu0 0.0
    %1002 = vmatpush1.msra.mxu0 0.0
    %1003 = vmatprep.subr.mxu0 0.0
    %1004 = vmatpush1.msra.mxu0 0.0
    %1005 = vmatprep.subr.mxu0 0.0
    %1006 = vmatpush1.msra.mxu0 0.0
    %1007 = vmatprep.subr.mxu0 0.0
    %1008 = vmatpush1.msra.mxu0 0.0
    %1009 = vmatprep.subr.mxu0 0.0
    %1010 = vmatpush1.msra.mxu0 0.0
    %1011 = vmatprep.subr.mxu0 0.0
    %1012 = vmatpush1.msra.mxu0 0.0
    %1013 = vmatprep.subr.mxu0 0.0
    %1014 = vmatpush1.msra.mxu0 0.0
    %1015 = vmatprep.subr.mxu0 0.0
    %1016 = vmatpush1.msra.mxu0 0.0
    %1017 = vmatprep.subr.mxu0 0.0
    %1018 = vmatpush1.msra.mxu0 0.0
    %1019 = vmatprep.subr.mxu0 0.0
    %1020 = vmatpush1.msra.mxu0 0.0
    %1021 = vmatprep.mubr.f32.mxu0 0.0
    %1022 = vmatmul.mubr.f32.gmra.mrb[0].mxu0 %v955
    %v1023 = vpop.f32.mrb[0].mxu0
    %v1024 = vadd.f32 0.0, %v1023
    %v1025 = vpop.f32.mrb[0].mxu0
    %1026 = vdwg.mxu0
    %1028 = vrot.lane.b32.xlu0 %v680, 8
    %v1029 = vpop.permute.xlu0 %1028
    %1032 = vrot.lane.b32.xlu0 %v852, 16
    %v1033 = vpop.permute.xlu0 %1032
    %1036 = vrot.lane.b32.xlu0 %v1024, 24
    %v1037 = vpop.permute.xlu0 %1036
    %v1039 = vsel %vm340, %v508, %v1029
    %v1040 = vsel %vm420, %v1039, %v1033
    %vm1041 = vcmask 195584
    %v1042 = vsel %vm1041, %v1040, %v1037
    %v1044 = vsel %vm340, %v254, 0
    %v1047 = vsel %vm340, %v259, 0
    %1049 = vmatprep.subr.mxu0 0.0
    %1050 = vmatpush1.xpose.msra.mxu0 %v1044
    %1051 = vmatprep.subr.mxu0 0.0
    %1052 = vmatpush1.xpose.msra.mxu0 %v1047
    %1053 = vmatprep.subr.mxu0 0.0
    %1054 = vmatpush1.xpose.msra.mxu0 0.0
    %1055 = vmatprep.subr.mxu0 0.0
    %1056 = vmatpush1.xpose.msra.mxu0 0.0
    %1057 = vmatprep.subr.mxu0 0.0
    %1058 = vmatpush1.xpose.msra.mxu0 0.0
    %1059 = vmatprep.subr.mxu0 0.0
    %1060 = vmatpush1.xpose.msra.mxu0 0.0
    %1061 = vmatprep.subr.mxu0 0.0
    %1062 = vmatpush1.xpose.msra.mxu0 0.0
    %1063 = vmatprep.subr.mxu0 0.0
    %1064 = vmatpush1.xpose.msra.mxu0 0.0
    %1065 = vmatprep.subr.mxu0 0.0
    %1066 = vmatpush1.xpose.msra.mxu0 0.0
    %1067 = vmatprep.subr.mxu0 0.0
    %1068 = vmatpush1.xpose.msra.mxu0 0.0
    %1069 = vmatprep.subr.mxu0 0.0
    %1070 = vmatpush1.xpose.msra.mxu0 0.0
    %1071 = vmatprep.subr.mxu0 0.0
    %1072 = vmatpush1.xpose.msra.mxu0 0.0
    %1073 = vmatprep.subr.mxu0 0.0
    %1074 = vmatpush1.xpose.msra.mxu0 0.0
    %1075 = vmatprep.subr.mxu0 0.0
    %1076 = vmatpush1.xpose.msra.mxu0 0.0
    %1077 = vmatprep.subr.mxu0 0.0
    %1078 = vmatpush1.xpose.msra.mxu0 0.0
    %1079 = vmatprep.subr.mxu0 0.0
    %1080 = vmatpush1.xpose.msra.mxu0 0.0
    %1081 = vmatprep.subr.mxu0 0.0
    %1082 = vmatpush1.xpose.msra.mxu0 0.0
    %1083 = vmatprep.subr.mxu0 0.0
    %1084 = vmatpush1.xpose.msra.mxu0 0.0
    %1085 = vmatprep.subr.mxu0 0.0
    %1086 = vmatpush1.xpose.msra.mxu0 0.0
    %1087 = vmatprep.subr.mxu0 0.0
    %1088 = vmatpush1.xpose.msra.mxu0 0.0
    %1089 = vmatprep.subr.mxu0 0.0
    %1090 = vmatpush1.xpose.msra.mxu0 0.0
    %1091 = vmatprep.subr.mxu0 0.0
    %1092 = vmatpush1.xpose.msra.mxu0 0.0
    %1093 = vmatprep.subr.mxu0 0.0
    %1094 = vmatpush1.xpose.msra.mxu0 0.0
    %1095 = vmatprep.subr.mxu0 0.0
    %1096 = vmatpush1.xpose.msra.mxu0 0.0
    %1097 = vmatprep.subr.mxu0 0.0
    %1098 = vmatpush1.xpose.msra.mxu0 0.0
    %1099 = vmatprep.subr.mxu0 0.0
    %1100 = vmatpush1.xpose.msra.mxu0 0.0
    %1101 = vmatprep.subr.mxu0 0.0
    %1102 = vmatpush1.xpose.msra.mxu0 0.0
    %1103 = vmatprep.subr.mxu0 0.0
    %1104 = vmatpush1.xpose.msra.mxu0 0.0
    %1105 = vmatprep.subr.mxu0 0.0
    %1106 = vmatpush1.xpose.msra.mxu0 0.0
    %1107 = vmatprep.subr.mxu0 0.0
    %1108 = vmatpush1.xpose.msra.mxu0 0.0
    %1109 = vmatprep.subr.mxu0 0.0
    %1110 = vmatpush1.xpose.msra.mxu0 0.0
    %1111 = vmatprep.subr.mxu0 0.0
    %1112 = vmatpush1.xpose.msra.mxu0 0.0
    %1113 = vmatprep.mubr.f32.mxu0 0.0
    %1114 = vmatmul.mubr.f32.gmra.mrb[0].mxu0 %v342
    %v1115 = vpop.f32.mrb[0].mxu0
    %v1116 = vadd.f32 0.0, %v1115
    %v1117 = vpop.f32.mrb[0].mxu0
    %1118 = vdwg.mxu0
    %v1119 = vsel %vm420, %v1116, -inf
    %1120 = vmax.xlane.f32.xlu0 %v1119
    %v1121 = vpop.xlane.xlu0 %1120
    %v1122 = vsub.f32 %v1116, %v1121
    %v1123 = vmul.f32 %v1122, 1.442695
    %v1124 = vpow.pop %v1123
    %v1125 = vsel %vm420, %v1124, 0.0
    %1126 = vadd.xlane.f32.xlu0 %v1125
    %v1127 = vpop.xlane.xlu0 %1126
    %v1128 = vrcp.pop %v1127
    %v1129 = vmul.f32 %v1124, %v1128
    %1130 = vrot.lane.b32.xlu0 %v254, 96
    %v1131 = vpop.permute.xlu0 %1130
    %1132 = vrot.lane.b32.xlu0 %v259, 96
    %v1133 = vpop.permute.xlu0 %1132
    %v1137 = vsel %vm420, %v1129, 0
    %1139 = vmatprep.subr.mxu0 0.0
    %1140 = vmatpush1.msra.mxu0 %v1131
    %1141 = vmatprep.subr.mxu0 0.0
    %1142 = vmatpush1.msra.mxu0 %v1133
    %1143 = vmatprep.subr.mxu0 0.0
    %1144 = vmatpush1.msra.mxu0 0.0
    %1145 = vmatprep.subr.mxu0 0.0
    %1146 = vmatpush1.msra.mxu0 0.0
    %1147 = vmatprep.subr.mxu0 0.0
    %1148 = vmatpush1.msra.mxu0 0.0
    %1149 = vmatprep.subr.mxu0 0.0
    %1150 = vmatpush1.msra.mxu0 0.0
    %1151 = vmatprep.subr.mxu0 0.0
    %1152 = vmatpush1.msra.mxu0 0.0
    %1153 = vmatprep.subr.mxu0 0.0
    %1154 = vmatpush1.msra.mxu0 0.0
    %1155 = vmatprep.subr.mxu0 0.0
    %1156 = vmatpush1.msra.mxu0 0.0
    %1157 = vmatprep.subr.mxu0 0.0
    %1158 = vmatpush1.msra.mxu0 0.0
    %1159 = vmatprep.subr.mxu0 0.0
    %1160 = vmatpush1.msra.mxu0 0.0
    %1161 = vmatprep.subr.mxu0 0.0
    %1162 = vmatpush1.msra.mxu0 0.0
    %1163 = vmatprep.subr.mxu0 0.0
    %1164 = vmatpush1.msra.mxu0 0.0
    %1165 = vmatprep.subr.mxu0 0.0
    %1166 = vmatpush1.msra.mxu0 0.0
    %1167 = vmatprep.subr.mxu0 0.0
    %1168 = vmatpush1.msra.mxu0 0.0
    %1169 = vmatprep.subr.mxu0 0.0
    %1170 = vmatpush1.msra.mxu0 0.0
    %1171 = vmatprep.subr.mxu0 0.0
    %1172 = vmatpush1.msra.mxu0 0.0
    %1173 = vmatprep.subr.mxu0 0.0
    %1174 = vmatpush1.msra.mxu0 0.0
    %1175 = vmatprep.subr.mxu0 0.0
    %1176 = vmatpush1.msra.mxu0 0.0
    %1177 = vmatprep.subr.mxu0 0.0
    %1178 = vmatpush1.msra.mxu0 0.0
    %1179 = vmatprep.subr.mxu0 0.0
    %1180 = vmatpush1.msra.mxu0 0.0
    %1181 = vmatprep.subr.mxu0 0.0
    %1182 = vmatpush1.msra.mxu0 0.0
    %1183 = vmatprep.subr.mxu0 0.0
    %1184 = vmatpush1.msra.mxu0 0.0
    %1185 = vmatprep.subr.mxu0 0.0
    %1186 = vmatpush1.msra.mxu0 0.0
    %1187 = vmatprep.subr.mxu0 0.0
    %1188 = vmatpush1.msra.mxu0 0.0
    %1189 = vmatprep.subr.mxu0 0.0
    %1190 = vmatpush1.msra.mxu0 0.0
    %1191 = vmatprep.subr.mxu0 0.0
    %1192 = vmatpush1.msra.mxu0 0.0
    %1193 = vmatprep.subr.mxu0 0.0
    %1194 = vmatpush1.msra.mxu0 0.0
    %1195 = vmatprep.subr.mxu0 0.0
    %1196 = vmatpush1.msra.mxu0 0.0
    %1197 = vmatprep.subr.mxu0 0.0
    %1198 = vmatpush1.msra.mxu0 0.0
    %1199 = vmatprep.subr.mxu0 0.0
    %1200 = vmatpush1.msra.mxu0 0.0
    %1201 = vmatprep.subr.mxu0 0.0
    %1202 = vmatpush1.msra.mxu0 0.0
    %1203 = vmatprep.mubr.f32.mxu0 0.0
    %1204 = vmatmul.mubr.f32.gmra.mrb[0].mxu0 %v1137
    %v1205 = vpop.f32.mrb[0].mxu0
    %v1206 = vadd.f32 0.0, %v1205
    %v1207 = vpop.f32.mrb[0].mxu0
    %1208 = vdwg.mxu0
    %1209 = vrot.lane.b32.xlu0 %v254, 120
    %v1210 = vpop.permute.xlu0 %1209
    %1211 = vrot.lane.b32.xlu0 %v259, 120
    %v1212 = vpop.permute.xlu0 %1211
    %v1213 = vsel %vm340, %v1210, 0
    %v1215 = vsel %vm340, %v1212, 0
    %1217 = vmatprep.subr.mxu0 0.0
    %1218 = vmatpush1.xpose.msra.mxu0 %v1213
    %1219 = vmatprep.subr.mxu0 0.0
    %1220 = vmatpush1.xpose.msra.mxu0 %v1215
    %1221 = vmatprep.subr.mxu0 0.0
    %1222 = vmatpush1.xpose.msra.mxu0 0.0
    %1223 = vmatprep.subr.mxu0 0.0
    %1224 = vmatpush1.xpose.msra.mxu0 0.0
    %1225 = vmatprep.subr.mxu0 0.0
    %1226 = vmatpush1.xpose.msra.mxu0 0.0
    %1227 = vmatprep.subr.mxu0 0.0
    %1228 = vmatpush1.xpose.msra.mxu0 0.0
    %1229 = vmatprep.subr.mxu0 0.0
    %1230 = vmatpush1.xpose.msra.mxu0 0.0
    %1231 = vmatprep.subr.mxu0 0.0
    %1232 = vmatpush1.xpose.msra.mxu0 0.0
    %1233 = vmatprep.subr.mxu0 0.0
    %1234 = vmatpush1.xpose.msra.mxu0 0.0
    %1235 = vmatprep.subr.mxu0 0.0
    %1236 = vmatpush1.xpose.msra.mxu0 0.0
    %1237 = vmatprep.subr.mxu0 0.0
    %1238 = vmatpush1.xpose.msra.mxu0 0.0
    %1239 = vmatprep.subr.mxu0 0.0
    %1240 = vmatpush1.xpose.msra.mxu0 0.0
    %1241 = vmatprep.subr.mxu0 0.0
    %1242 = vmatpush1.xpose.msra.mxu0 0.0
    %1243 = vmatprep.subr.mxu0 0.0
    %1244 = vmatpush1.xpose.msra.mxu0 0.0
    %1245 = vmatprep.subr.mxu0 0.0
    %1246 = vmatpush1.xpose.msra.mxu0 0.0
    %1247 = vmatprep.subr.mxu0 0.0
    %1248 = vmatpush1.xpose.msra.mxu0 0.0
    %1249 = vmatprep.subr.mxu0 0.0
    %1250 = vmatpush1.xpose.msra.mxu0 0.0
    %1251 = vmatprep.subr.mxu0 0.0
    %1252 = vmatpush1.xpose.msra.mxu0 0.0
    %1253 = vmatprep.subr.mxu0 0.0
    %1254 = vmatpush1.xpose.msra.mxu0 0.0
    %1255 = vmatprep.subr.mxu0 0.0
    %1256 = vmatpush1.xpose.msra.mxu0 0.0
    %1257 = vmatprep.subr.mxu0 0.0
    %1258 = vmatpush1.xpose.msra.mxu0 0.0
    %1259 = vmatprep.subr.mxu0 0.0
    %1260 = vmatpush1.xpose.msra.mxu0 0.0
    %1261 = vmatprep.subr.mxu0 0.0
    %1262 = vmatpush1.xpose.msra.mxu0 0.0
    %1263 = vmatprep.subr.mxu0 0.0
    %1264 = vmatpush1.xpose.msra.mxu0 0.0
    %1265 = vmatprep.subr.mxu0 0.0
    %1266 = vmatpush1.xpose.msra.mxu0 0.0
    %1267 = vmatprep.subr.mxu0 0.0
    %1268 = vmatpush1.xpose.msra.mxu0 0.0
    %1269 = vmatprep.subr.mxu0 0.0
    %1270 = vmatpush1.xpose.msra.mxu0 0.0
    %1271 = vmatprep.subr.mxu0 0.0
    %1272 = vmatpush1.xpose.msra.mxu0 0.0
    %1273 = vmatprep.subr.mxu0 0.0
    %1274 = vmatpush1.xpose.msra.mxu0 0.0
    %1275 = vmatprep.subr.mxu0 0.0
    %1276 = vmatpush1.xpose.msra.mxu0 0.0
    %1277 = vmatprep.subr.mxu0 0.0
    %1278 = vmatpush1.xpose.msra.mxu0 0.0
    %1279 = vmatprep.subr.mxu0 0.0
    %1280 = vmatpush1.xpose.msra.mxu0 0.0
    %1281 = vmatprep.mubr.f32.mxu0 0.0
    %1282 = vmatmul.mubr.f32.gmra.mrb[0].mxu0 %v517
    %v1283 = vpop.f32.mrb[0].mxu0
    %v1284 = vadd.f32 0.0, %v1283
    %v1285 = vpop.f32.mrb[0].mxu0
    %1286 = vdwg.mxu0
    %v1287 = vsel %vm420, %v1284, -inf
    %1288 = vmax.xlane.f32.xlu0 %v1287
    %v1289 = vpop.xlane.xlu0 %1288
    %v1290 = vsub.f32 %v1284, %v1289
    %v1291 = vmul.f32 %v1290, 1.442695
    %v1292 = vpow.pop %v1291
    %v1293 = vsel %vm420, %v1292, 0.0
    %1294 = vadd.xlane.f32.xlu0 %v1293
    %v1295 = vpop.xlane.xlu0 %1294
    %v1296 = vrcp.pop %v1295
    %v1297 = vmul.f32 %v1292, %v1296
    %1298 = vrot.lane.b32.xlu0 %v254, 88
    %v1299 = vpop.permute.xlu0 %1298
    %1300 = vrot.lane.b32.xlu0 %v259, 88
    %v1301 = vpop.permute.xlu0 %1300
    %v1305 = vsel %vm420, %v1297, 0
    %1307 = vmatprep.subr.mxu0 0.0
    %1308 = vmatpush1.msra.mxu0 %v1299
    %1309 = vmatprep.subr.mxu0 0.0
    %1310 = vmatpush1.msra.mxu0 %v1301
    %1311 = vmatprep.subr.mxu0 0.0
    %1312 = vmatpush1.msra.mxu0 0.0
    %1313 = vmatprep.subr.mxu0 0.0
    %1314 = vmatpush1.msra.mxu0 0.0
    %1315 = vmatprep.subr.mxu0 0.0
    %1316 = vmatpush1.msra.mxu0 0.0
    %1317 = vmatprep.subr.mxu0 0.0
    %1318 = vmatpush1.msra.mxu0 0.0
    %1319 = vmatprep.subr.mxu0 0.0
    %1320 = vmatpush1.msra.mxu0 0.0
    %1321 = vmatprep.subr.mxu0 0.0
    %1322 = vmatpush1.msra.mxu0 0.0
    %1323 = vmatprep.subr.mxu0 0.0
    %1324 = vmatpush1.msra.mxu0 0.0
    %1325 = vmatprep.subr.mxu0 0.0
    %1326 = vmatpush1.msra.mxu0 0.0
    %1327 = vmatprep.subr.mxu0 0.0
    %1328 = vmatpush1.msra.mxu0 0.0
    %1329 = vmatprep.subr.mxu0 0.0
    %1330 = vmatpush1.msra.mxu0 0.0
    %1331 = vmatprep.subr.mxu0 0.0
    %1332 = vmatpush1.msra.mxu0 0.0
    %1333 = vmatprep.subr.mxu0 0.0
    %1334 = vmatpush1.msra.mxu0 0.0
    %1335 = vmatprep.subr.mxu0 0.0
    %1336 = vmatpush1.msra.mxu0 0.0
    %1337 = vmatprep.subr.mxu0 0.0
    %1338 = vmatpush1.msra.mxu0 0.0
    %1339 = vmatprep.subr.mxu0 0.0
    %1340 = vmatpush1.msra.mxu0 0.0
    %1341 = vmatprep.subr.mxu0 0.0
    %1342 = vmatpush1.msra.mxu0 0.0
    %1343 = vmatprep.subr.mxu0 0.0
    %1344 = vmatpush1.msra.mxu0 0.0
    %1345 = vmatprep.subr.mxu0 0.0
    %1346 = vmatpush1.msra.mxu0 0.0
    %1347 = vmatprep.subr.mxu0 0.0
    %1348 = vmatpush1.msra.mxu0 0.0
    %1349 = vmatprep.subr.mxu0 0.0
    %1350 = vmatpush1.msra.mxu0 0.0
    %1351 = vmatprep.subr.mxu0 0.0
    %1352 = vmatpush1.msra.mxu0 0.0
    %1353 = vmatprep.subr.mxu0 0.0
    %1354 = vmatpush1.msra.mxu0 0.0
    %1355 = vmatprep.subr.mxu0 0.0
    %1356 = vmatpush1.msra.mxu0 0.0
    %1357 = vmatprep.subr.mxu0 0.0
    %1358 = vmatpush1.msra.mxu0 0.0
    %1359 = vmatprep.subr.mxu0 0.0
    %1360 = vmatpush1.msra.mxu0 0.0
    %1361 = vmatprep.subr.mxu0 0.0
    %1362 = vmatpush1.msra.mxu0 0.0
    %1363 = vmatprep.subr.mxu0 0.0
    %1364 = vmatpush1.msra.mxu0 0.0
    %1365 = vmatprep.subr.mxu0 0.0
    %1366 = vmatpush1.msra.mxu0 0.0
    %1367 = vmatprep.subr.mxu0 0.0
    %1368 = vmatpush1.msra.mxu0 0.0
    %1369 = vmatprep.subr.mxu0 0.0
    %1370 = vmatpush1.msra.mxu0 0.0
    %1371 = vmatprep.mubr.f32.mxu0 0.0
    %1372 = vmatmul.mubr.f32.gmra.mrb[0].mxu0 %v1305
    %v1373 = vpop.f32.mrb[0].mxu0
    %v1374 = vadd.f32 0.0, %v1373
    %v1375 = vpop.f32.mrb[0].mxu0
    %1376 = vdwg.mxu0
    %1377 = vrot.lane.b32.xlu0 %v254, 112
    %v1378 = vpop.permute.xlu0 %1377
    %1379 = vrot.lane.b32.xlu0 %v259, 112
    %v1380 = vpop.permute.xlu0 %1379
    %v1381 = vsel %vm340, %v1378, 0
    %v1383 = vsel %vm340, %v1380, 0
    %1385 = vmatprep.subr.mxu0 0.0
    %1386 = vmatpush1.xpose.msra.mxu0 %v1381
    %1387 = vmatprep.subr.mxu0 0.0
    %1388 = vmatpush1.xpose.msra.mxu0 %v1383
    %1389 = vmatprep.subr.mxu0 0.0
    %1390 = vmatpush1.xpose.msra.mxu0 0.0
    %1391 = vmatprep.subr.mxu0 0.0
    %1392 = vmatpush1.xpose.msra.mxu0 0.0
    %1393 = vmatprep.subr.mxu0 0.0
    %1394 = vmatpush1.xpose.msra.mxu0 0.0
    %1395 = vmatprep.subr.mxu0 0.0
    %1396 = vmatpush1.xpose.msra.mxu0 0.0
    %1397 = vmatprep.subr.mxu0 0.0
    %1398 = vmatpush1.xpose.msra.mxu0 0.0
    %1399 = vmatprep.subr.mxu0 0.0
    %1400 = vmatpush1.xpose.msra.mxu0 0.0
    %1401 = vmatprep.subr.mxu0 0.0
    %1402 = vmatpush1.xpose.msra.mxu0 0.0
    %1403 = vmatprep.subr.mxu0 0.0
    %1404 = vmatpush1.xpose.msra.mxu0 0.0
    %1405 = vmatprep.subr.mxu0 0.0
    %1406 = vmatpush1.xpose.msra.mxu0 0.0
    %1407 = vmatprep.subr.mxu0 0.0
    %1408 = vmatpush1.xpose.msra.mxu0 0.0
    %1409 = vmatprep.subr.mxu0 0.0
    %1410 = vmatpush1.xpose.msra.mxu0 0.0
    %1411 = vmatprep.subr.mxu0 0.0
    %1412 = vmatpush1.xpose.msra.mxu0 0.0
    %1413 = vmatprep.subr.mxu0 0.0
    %1414 = vmatpush1.xpose.msra.mxu0 0.0
    %1415 = vmatprep.subr.mxu0 0.0
    %1416 = vmatpush1.xpose.msra.mxu0 0.0
    %1417 = vmatprep.subr.mxu0 0.0
    %1418 = vmatpush1.xpose.msra.mxu0 0.0
    %1419 = vmatprep.subr.mxu0 0.0
    %1420 = vmatpush1.xpose.msra.mxu0 0.0
    %1421 = vmatprep.subr.mxu0 0.0
    %1422 = vmatpush1.xpose.msra.mxu0 0.0
    %1423 = vmatprep.subr.mxu0 0.0
    %1424 = vmatpush1.xpose.msra.mxu0 0.0
    %1425 = vmatprep.subr.mxu0 0.0
    %1426 = vmatpush1.xpose.msra.mxu0 0.0
    %1427 = vmatprep.subr.mxu0 0.0
    %1428 = vmatpush1.xpose.msra.mxu0 0.0
    %1429 = vmatprep.subr.mxu0 0.0
    %1430 = vmatpush1.xpose.msra.mxu0 0.0
    %1431 = vmatprep.subr.mxu0 0.0
    %1432 = vmatpush1.xpose.msra.mxu0 0.0
    %1433 = vmatprep.subr.mxu0 0.0
    %1434 = vmatpush1.xpose.msra.mxu0 0.0
    %1435 = vmatprep.subr.mxu0 0.0
    %1436 = vmatpush1.xpose.msra.mxu0 0.0
    %1437 = vmatprep.subr.mxu0 0.0
    %1438 = vmatpush1.xpose.msra.mxu0 0.0
    %1439 = vmatprep.subr.mxu0 0.0
    %1440 = vmatpush1.xpose.msra.mxu0 0.0
    %1441 = vmatprep.subr.mxu0 0.0
    %1442 = vmatpush1.xpose.msra.mxu0 0.0
    %1443 = vmatprep.subr.mxu0 0.0
    %1444 = vmatpush1.xpose.msra.mxu0 0.0
    %1445 = vmatprep.subr.mxu0 0.0
    %1446 = vmatpush1.xpose.msra.mxu0 0.0
    %1447 = vmatprep.subr.mxu0 0.0
    %1448 = vmatpush1.xpose.msra.mxu0 0.0
    %1449 = vmatprep.mubr.f32.mxu0 0.0
    %1450 = vmatmul.mubr.f32.gmra.mrb[0].mxu0 %v689
    %v1451 = vpop.f32.mrb[0].mxu0
    %v1452 = vadd.f32 0.0, %v1451
    %v1453 = vpop.f32.mrb[0].mxu0
    %1454 = vdwg.mxu0
    %v1455 = vsel %vm420, %v1452, -inf
    %1456 = vmax.xlane.f32.xlu0 %v1455
    %v1457 = vpop.xlane.xlu0 %1456
    %v1458 = vsub.f32 %v1452, %v1457
    %v1459 = vmul.f32 %v1458, 1.442695
    %v1460 = vpow.pop %v1459
    %v1461 = vsel %vm420, %v1460, 0.0
    %1462 = vadd.xlane.f32.xlu0 %v1461
    %v1463 = vpop.xlane.xlu0 %1462
    %v1464 = vrcp.pop %v1463
    %v1465 = vmul.f32 %v1460, %v1464
    %1466 = vrot.lane.b32.xlu0 %v254, 80
    %v1467 = vpop.permute.xlu0 %1466
    %1468 = vrot.lane.b32.xlu0 %v259, 80
    %v1469 = vpop.permute.xlu0 %1468
    %v1473 = vsel %vm420, %v1465, 0
    %1475 = vmatprep.subr.mxu0 0.0
    %1476 = vmatpush1.msra.mxu0 %v1467
    %1477 = vmatprep.subr.mxu0 0.0
    %1478 = vmatpush1.msra.mxu0 %v1469
    %1479 = vmatprep.subr.mxu0 0.0
    %1480 = vmatpush1.msra.mxu0 0.0
    %1481 = vmatprep.subr.mxu0 0.0
    %1482 = vmatpush1.msra.mxu0 0.0
    %1483 = vmatprep.subr.mxu0 0.0
    %1484 = vmatpush1.msra.mxu0 0.0
    %1485 = vmatprep.subr.mxu0 0.0
    %1486 = vmatpush1.msra.mxu0 0.0
    %1487 = vmatprep.subr.mxu0 0.0
    %1488 = vmatpush1.msra.mxu0 0.0
    %1489 = vmatprep.subr.mxu0 0.0
    %1490 = vmatpush1.msra.mxu0 0.0
    %1491 = vmatprep.subr.mxu0 0.0
    %1492 = vmatpush1.msra.mxu0 0.0
    %1493 = vmatprep.subr.mxu0 0.0
    %1494 = vmatpush1.msra.mxu0 0.0
    %1495 = vmatprep.subr.mxu0 0.0
    %1496 = vmatpush1.msra.mxu0 0.0
    %1497 = vmatprep.subr.mxu0 0.0
    %1498 = vmatpush1.msra.mxu0 0.0
    %1499 = vmatprep.subr.mxu0 0.0
    %1500 = vmatpush1.msra.mxu0 0.0
    %1501 = vmatprep.subr.mxu0 0.0
    %1502 = vmatpush1.msra.mxu0 0.0
    %1503 = vmatprep.subr.mxu0 0.0
    %1504 = vmatpush1.msra.mxu0 0.0
    %1505 = vmatprep.subr.mxu0 0.0
    %1506 = vmatpush1.msra.mxu0 0.0
    %1507 = vmatprep.subr.mxu0 0.0
    %1508 = vmatpush1.msra.mxu0 0.0
    %1509 = vmatprep.subr.mxu0 0.0
    %1510 = vmatpush1.msra.mxu0 0.0
    %1511 = vmatprep.subr.mxu0 0.0
    %1512 = vmatpush1.msra.mxu0 0.0
    %1513 = vmatprep.subr.mxu0 0.0
    %1514 = vmatpush1.msra.mxu0 0.0
    %1515 = vmatprep.subr.mxu0 0.0
    %1516 = vmatpush1.msra.mxu0 0.0
    %1517 = vmatprep.subr.mxu0 0.0
    %1518 = vmatpush1.msra.mxu0 0.0
    %1519 = vmatprep.subr.mxu0 0.0
    %1520 = vmatpush1.msra.mxu0 0.0
    %1521 = vmatprep.subr.mxu0 0.0
    %1522 = vmatpush1.msra.mxu0 0.0
    %1523 = vmatprep.subr.mxu0 0.0
    %1524 = vmatpush1.msra.mxu0 0.0
    %1525 = vmatprep.subr.mxu0 0.0
    %1526 = vmatpush1.msra.mxu0 0.0
    %1527 = vmatprep.subr.mxu0 0.0
    %1528 = vmatpush1.msra.mxu0 0.0
    %1529 = vmatprep.subr.mxu0 0.0
    %1530 = vmatpush1.msra.mxu0 0.0
    %1531 = vmatprep.subr.mxu0 0.0
    %1532 = vmatpush1.msra.mxu0 0.0
    %1533 = vmatprep.subr.mxu0 0.0
    %1534 = vmatpush1.msra.mxu0 0.0
    %1535 = vmatprep.subr.mxu0 0.0
    %1536 = vmatpush1.msra.mxu0 0.0
    %1537 = vmatprep.subr.mxu0 0.0
    %1538 = vmatpush1.msra.mxu0 0.0
    %1539 = vmatprep.mubr.f32.mxu0 0.0
    %1540 = vmatmul.mubr.f32.gmra.mrb[0].mxu0 %v1473
    %v1541 = vpop.f32.mrb[0].mxu0
    %v1542 = vadd.f32 0.0, %v1541
    %v1543 = vpop.f32.mrb[0].mxu0
    %1544 = vdwg.mxu0
    %1545 = vrot.lane.b32.xlu0 %v254, 104
    %v1546 = vpop.permute.xlu0 %1545
    %1547 = vrot.lane.b32.xlu0 %v259, 104
    %v1548 = vpop.permute.xlu0 %1547
    %v1549 = vsel %vm340, %v1546, 0
    %v1551 = vsel %vm340, %v1548, 0
    %1553 = vmatprep.subr.mxu0 0.0
    %1554 = vmatpush1.xpose.msra.mxu0 %v1549
    %1555 = vmatprep.subr.mxu0 0.0
    %1556 = vmatpush1.xpose.msra.mxu0 %v1551
    %1557 = vmatprep.subr.mxu0 0.0
    %1558 = vmatpush1.xpose.msra.mxu0 0.0
    %1559 = vmatprep.subr.mxu0 0.0
    %1560 = vmatpush1.xpose.msra.mxu0 0.0
    %1561 = vmatprep.subr.mxu0 0.0
    %1562 = vmatpush1.xpose.msra.mxu0 0.0
    %1563 = vmatprep.subr.mxu0 0.0
    %1564 = vmatpush1.xpose.msra.mxu0 0.0
    %1565 = vmatprep.subr.mxu0 0.0
    %1566 = vmatpush1.xpose.msra.mxu0 0.0
    %1567 = vmatprep.subr.mxu0 0.0
    %1568 = vmatpush1.xpose.msra.mxu0 0.0
    %1569 = vmatprep.subr.mxu0 0.0
    %1570 = vmatpush1.xpose.msra.mxu0 0.0
    %1571 = vmatprep.subr.mxu0 0.0
    %1572 = vmatpush1.xpose.msra.mxu0 0.0
    %1573 = vmatprep.subr.mxu0 0.0
    %1574 = vmatpush1.xpose.msra.mxu0 0.0
    %1575 = vmatprep.subr.mxu0 0.0
    %1576 = vmatpush1.xpose.msra.mxu0 0.0
    %1577 = vmatprep.subr.mxu0 0.0
    %1578 = vmatpush1.xpose.msra.mxu0 0.0
    %1579 = vmatprep.subr.mxu0 0.0
    %1580 = vmatpush1.xpose.msra.mxu0 0.0
    %1581 = vmatprep.subr.mxu0 0.0
    %1582 = vmatpush1.xpose.msra.mxu0 0.0
    %1583 = vmatprep.subr.mxu0 0.0
    %1584 = vmatpush1.xpose.msra.mxu0 0.0
    %1585 = vmatprep.subr.mxu0 0.0
    %1586 = vmatpush1.xpose.msra.mxu0 0.0
    %1587 = vmatprep.subr.mxu0 0.0
    %1588 = vmatpush1.xpose.msra.mxu0 0.0
    %1589 = vmatprep.subr.mxu0 0.0
    %1590 = vmatpush1.xpose.msra.mxu0 0.0
    %1591 = vmatprep.subr.mxu0 0.0
    %1592 = vmatpush1.xpose.msra.mxu0 0.0
    %1593 = vmatprep.subr.mxu0 0.0
    %1594 = vmatpush1.xpose.msra.mxu0 0.0
    %1595 = vmatprep.subr.mxu0 0.0
    %1596 = vmatpush1.xpose.msra.mxu0 0.0
    %1597 = vmatprep.subr.mxu0 0.0
    %1598 = vmatpush1.xpose.msra.mxu0 0.0
    %1599 = vmatprep.subr.mxu0 0.0
    %1600 = vmatpush1.xpose.msra.mxu0 0.0
    %1601 = vmatprep.subr.mxu0 0.0
    %1602 = vmatpush1.xpose.msra.mxu0 0.0
    %1603 = vmatprep.subr.mxu0 0.0
    %1604 = vmatpush1.xpose.msra.mxu0 0.0
    %1605 = vmatprep.subr.mxu0 0.0
    %1606 = vmatpush1.xpose.msra.mxu0 0.0
    %1607 = vmatprep.subr.mxu0 0.0
    %1608 = vmatpush1.xpose.msra.mxu0 0.0
    %1609 = vmatprep.subr.mxu0 0.0
    %1610 = vmatpush1.xpose.msra.mxu0 0.0
    %1611 = vmatprep.subr.mxu0 0.0
    %1612 = vmatpush1.xpose.msra.mxu0 0.0
    %1613 = vmatprep.subr.mxu0 0.0
    %1614 = vmatpush1.xpose.msra.mxu0 0.0
    %1615 = vmatprep.subr.mxu0 0.0
    %1616 = vmatpush1.xpose.msra.mxu0 0.0
    %1617 = vmatprep.mubr.f32.mxu0 0.0
    %1618 = vmatmul.mubr.f32.gmra.mrb[0].mxu0 %v861
    %v1619 = vpop.f32.mrb[0].mxu0
    %v1620 = vadd.f32 0.0, %v1619
    %v1621 = vpop.f32.mrb[0].mxu0
    %1622 = vdwg.mxu0
    %v1623 = vsel %vm420, %v1620, -inf
    %1624 = vmax.xlane.f32.xlu0 %v1623
    %v1625 = vpop.xlane.xlu0 %1624
    %v1626 = vsub.f32 %v1620, %v1625
    %v1627 = vmul.f32 %v1626, 1.442695
    %v1628 = vpow.pop %v1627
    %v1629 = vsel %vm420, %v1628, 0.0
    %1630 = vadd.xlane.f32.xlu0 %v1629
    %v1631 = vpop.xlane.xlu0 %1630
    %v1632 = vrcp.pop %v1631
    %v1633 = vmul.f32 %v1628, %v1632
    %1634 = vrot.lane.b32.xlu0 %v254, 72
    %v1635 = vpop.permute.xlu0 %1634
    %1636 = vrot.lane.b32.xlu0 %v259, 72
    %v1637 = vpop.permute.xlu0 %1636
    %v1641 = vsel %vm420, %v1633, 0
    %1643 = vmatprep.subr.mxu0 0.0
    %1644 = vmatpush1.msra.mxu0 %v1635
    %1645 = vmatprep.subr.mxu0 0.0
    %1646 = vmatpush1.msra.mxu0 %v1637
    %1647 = vmatprep.subr.mxu0 0.0
    %1648 = vmatpush1.msra.mxu0 0.0
    %1649 = vmatprep.subr.mxu0 0.0
    %1650 = vmatpush1.msra.mxu0 0.0
    %1651 = vmatprep.subr.mxu0 0.0
    %1652 = vmatpush1.msra.mxu0 0.0
    %1653 = vmatprep.subr.mxu0 0.0
    %1654 = vmatpush1.msra.mxu0 0.0
    %1655 = vmatprep.subr.mxu0 0.0
    %1656 = vmatpush1.msra.mxu0 0.0
    %1657 = vmatprep.subr.mxu0 0.0
    %1658 = vmatpush1.msra.mxu0 0.0
    %1659 = vmatprep.subr.mxu0 0.0
    %1660 = vmatpush1.msra.mxu0 0.0
    %1661 = vmatprep.subr.mxu0 0.0
    %1662 = vmatpush1.msra.mxu0 0.0
    %1663 = vmatprep.subr.mxu0 0.0
    %1664 = vmatpush1.msra.mxu0 0.0
    %1665 = vmatprep.subr.mxu0 0.0
    %1666 = vmatpush1.msra.mxu0 0.0
    %1667 = vmatprep.subr.mxu0 0.0
    %1668 = vmatpush1.msra.mxu0 0.0
    %1669 = vmatprep.subr.mxu0 0.0
    %1670 = vmatpush1.msra.mxu0 0.0
    %1671 = vmatprep.subr.mxu0 0.0
    %1672 = vmatpush1.msra.mxu0 0.0
    %1673 = vmatprep.subr.mxu0 0.0
    %1674 = vmatpush1.msra.mxu0 0.0
    %1675 = vmatprep.subr.mxu0 0.0
    %1676 = vmatpush1.msra.mxu0 0.0
    %1677 = vmatprep.subr.mxu0 0.0
    %1678 = vmatpush1.msra.mxu0 0.0
    %1679 = vmatprep.subr.mxu0 0.0
    %1680 = vmatpush1.msra.mxu0 0.0
    %1681 = vmatprep.subr.mxu0 0.0
    %1682 = vmatpush1.msra.mxu0 0.0
    %1683 = vmatprep.subr.mxu0 0.0
    %1684 = vmatpush1.msra.mxu0 0.0
    %1685 = vmatprep.subr.mxu0 0.0
    %1686 = vmatpush1.msra.mxu0 0.0
    %1687 = vmatprep.subr.mxu0 0.0
    %1688 = vmatpush1.msra.mxu0 0.0
    %1689 = vmatprep.subr.mxu0 0.0
    %1690 = vmatpush1.msra.mxu0 0.0
    %1691 = vmatprep.subr.mxu0 0.0
    %1692 = vmatpush1.msra.mxu0 0.0
    %1693 = vmatprep.subr.mxu0 0.0
    %1694 = vmatpush1.msra.mxu0 0.0
    %1695 = vmatprep.subr.mxu0 0.0
    %1696 = vmatpush1.msra.mxu0 0.0
    %1697 = vmatprep.subr.mxu0 0.0
    %1698 = vmatpush1.msra.mxu0 0.0
    %1699 = vmatprep.subr.mxu0 0.0
    %1700 = vmatpush1.msra.mxu0 0.0
    %1701 = vmatprep.subr.mxu0 0.0
    %1702 = vmatpush1.msra.mxu0 0.0
    %1703 = vmatprep.subr.mxu0 0.0
    %1704 = vmatpush1.msra.mxu0 0.0
    %1705 = vmatprep.subr.mxu0 0.0
    %1706 = vmatpush1.msra.mxu0 0.0
    %1707 = vmatprep.mubr.f32.mxu0 0.0
    %1708 = vmatmul.mubr.f32.gmra.mrb[0].mxu0 %v1641
    %v1709 = vpop.f32.mrb[0].mxu0
    %v1710 = vadd.f32 0.0, %v1709
    %v1711 = vpop.f32.mrb[0].mxu0
    %1712 = vdwg.mxu0
    %1714 = vrot.lane.b32.xlu0 %v1374, 8
    %v1715 = vpop.permute.xlu0 %1714
    %1718 = vrot.lane.b32.xlu0 %v1542, 16
    %v1719 = vpop.permute.xlu0 %1718
    %1722 = vrot.lane.b32.xlu0 %v1710, 24
    %v1723 = vpop.permute.xlu0 %1722
    %v1725 = vsel %vm340, %v1206, %v1715
    %v1726 = vsel %vm420, %v1725, %v1719
    %v1727 = vsel %vm1041, %v1726, %v1723
    %v1728 = vld [vmem:[%s6] sm:$0xff]
    %v1729 = vld [vmem:[%s6 + $0x8] sm:$0xff]
    %v1730 = vld [vmem:[%s6 + $0x10] sm:$0xff]
    %v1731 = vld [vmem:[%s6 + $0x18] sm:$0xff]
    %v1732 = vld [vmem:[%s7] sm:$0x1]
    %v1734 = vlaneseq
    %v1735 = vshrl.u32 %v1734, 7
    %v1736 = vsub.s32 0, %v1735
    %v1737 = vrot.slane %v1732, %v1736
    %v1740 = vsel %vm164, %v1042, 0
    %v1743 = vsel %vm164, %v1727, 0
    %1745 = vmatprep.subr.mxu0 0.0
    %1746 = vmatpush1.msra.mxu0 %v1728
    %1747 = vmatprep.subr.mxu0 0.0
    %1748 = vmatpush1.msra.mxu0 %v1729
    %1749 = vmatprep.subr.mxu0 0.0
    %1750 = vmatpush1.msra.mxu0 %v1730
    %1751 = vmatprep.subr.mxu0 0.0
    %1752 = vmatpush1.msra.mxu0 %v1731
    %1753 = vmatprep.subr.mxu0 0.0
    %1754 = vmatpush1.msra.mxu0 0.0
    %1755 = vmatprep.subr.mxu0 0.0
    %1756 = vmatpush1.msra.mxu0 0.0
    %1757 = vmatprep.subr.mxu0 0.0
    %1758 = vmatpush1.msra.mxu0 0.0
    %1759 = vmatprep.subr.mxu0 0.0
    %1760 = vmatpush1.msra.mxu0 0.0
    %1761 = vmatprep.subr.mxu0 0.0
    %1762 = vmatpush1.msra.mxu0 0.0
    %1763 = vmatprep.subr.mxu0 0.0
    %1764 = vmatpush1.msra.mxu0 0.0
    %1765 = vmatprep.subr.mxu0 0.0
    %1766 = vmatpush1.msra.mxu0 0.0
    %1767 = vmatprep.subr.mxu0 0.0
    %1768 = vmatpush1.msra.mxu0 0.0
    %1769 = vmatprep.subr.mxu0 0.0
    %1770 = vmatpush1.msra.mxu0 0.0
    %1771 = vmatprep.subr.mxu0 0.0
    %1772 = vmatpush1.msra.mxu0 0.0
    %1773 = vmatprep.subr.mxu0 0.0
    %1774 = vmatpush1.msra.mxu0 0.0
    %1775 = vmatprep.subr.mxu0 0.0
    %1776 = vmatpush1.msra.mxu0 0.0
    %1777 = vmatprep.subr.mxu0 0.0
    %1778 = vmatpush1.msra.mxu0 0.0
    %1779 = vmatprep.subr.mxu0 0.0
    %1780 = vmatpush1.msra.mxu0 0.0
    %1781 = vmatprep.subr.mxu0 0.0
    %1782 = vmatpush1.msra.mxu0 0.0
    %1783 = vmatprep.subr.mxu0 0.0
    %1784 = vmatpush1.msra.mxu0 0.0
    %1785 = vmatprep.subr.mxu0 0.0
    %1786 = vmatpush1.msra.mxu0 0.0
    %1787 = vmatprep.subr.mxu0 0.0
    %1788 = vmatpush1.msra.mxu0 0.0
    %1789 = vmatprep.subr.mxu0 0.0
    %1790 = vmatpush1.msra.mxu0 0.0
    %1791 = vmatprep.subr.mxu0 0.0
    %1792 = vmatpush1.msra.mxu0 0.0
    %1793 = vmatprep.subr.mxu0 0.0
    %1794 = vmatpush1.msra.mxu0 0.0
    %1795 = vmatprep.subr.mxu0 0.0
    %1796 = vmatpush1.msra.mxu0 0.0
    %1797 = vmatprep.subr.mxu0 0.0
    %1798 = vmatpush1.msra.mxu0 0.0
    %1799 = vmatprep.subr.mxu0 0.0
    %1800 = vmatpush1.msra.mxu0 0.0
    %1801 = vmatprep.subr.mxu0 0.0
    %1802 = vmatpush1.msra.mxu0 0.0
    %1803 = vmatprep.subr.mxu0 0.0
    %1804 = vmatpush1.msra.mxu0 0.0
    %1805 = vmatprep.subr.mxu0 0.0
    %1806 = vmatpush1.msra.mxu0 0.0
    %1807 = vmatprep.subr.mxu0 0.0
    %1808 = vmatpush1.msra.mxu0 0.0
    %1809 = vmatprep.mubr.f32.mxu0 0.0
    %1810 = vmatmul.mubr.f32.gmra.mrb[0].mxu0 %v1740
    %v1811 = vpop.f32.mrb[0].mxu0
    %v1812 = vadd.f32 %v1737, %v1811
    %v1813 = vpop.f32.mrb[0].mxu0
    %1814 = vmatprep.mubr.f32.mxu0 0.0
    %1815 = vmatmul.mubr.f32.gmra.mrb[0].mxu0 %v1743
    %v1816 = vpop.f32.mrb[0].mxu0
    %v1817 = vadd.f32 %v1737, %v1816
    %v1818 = vpop.f32.mrb[0].mxu0
    %1819 = vdwg.mxu0
    %v1820 = vld [vmem:[%s8] sm:$0xff]
    %v1821 = vld [vmem:[%s8 + $0x8] sm:$0xff]
    %v1822 = vld [vmem:[%s8 + $0x10] sm:$0xff]
    %v1823 = vld [vmem:[%s8 + $0x18] sm:$0xff]
    %v1825 = vsel %vm164, %v1812, 0
    %v1828 = vsel %vm164, %v1817, 0
    %1830 = vmatprep.subr.mxu0 0.0
    %1831 = vmatpush1.msra.mxu0 %v1820
    %1832 = vmatprep.subr.mxu0 0.0
    %1833 = vmatpush1.msra.mxu0 %v1821
    %1834 = vmatprep.subr.mxu0 0.0
    %1835 = vmatpush1.msra.mxu0 %v1822
    %1836 = vmatprep.subr.mxu0 0.0
    %1837 = vmatpush1.msra.mxu0 %v1823
    %1838 = vmatprep.subr.mxu0 0.0
    %1839 = vmatpush1.msra.mxu0 0.0
    %1840 = vmatprep.subr.mxu0 0.0
    %1841 = vmatpush1.msra.mxu0 0.0
    %1842 = vmatprep.subr.mxu0 0.0
    %1843 = vmatpush1.msra.mxu0 0.0
    %1844 = vmatprep.subr.mxu0 0.0
    %1845 = vmatpush1.msra.mxu0 0.0
    %1846 = vmatprep.subr.mxu0 0.0
    %1847 = vmatpush1.msra.mxu0 0.0
    %1848 = vmatprep.subr.mxu0 0.0
    %1849 = vmatpush1.msra.mxu0 0.0
    %1850 = vmatprep.subr.mxu0 0.0
    %1851 = vmatpush1.msra.mxu0 0.0
    %1852 = vmatprep.subr.mxu0 0.0
    %1853 = vmatpush1.msra.mxu0 0.0
    %1854 = vmatprep.subr.mxu0 0.0
    %1855 = vmatpush1.msra.mxu0 0.0
    %1856 = vmatprep.subr.mxu0 0.0
    %1857 = vmatpush1.msra.mxu0 0.0
    %1858 = vmatprep.subr.mxu0 0.0
    %1859 = vmatpush1.msra.mxu0 0.0
    %1860 = vmatprep.subr.mxu0 0.0
    %1861 = vmatpush1.msra.mxu0 0.0
    %1862 = vmatprep.subr.mxu0 0.0
    %1863 = vmatpush1.msra.mxu0 0.0
    %1864 = vmatprep.subr.mxu0 0.0
    %1865 = vmatpush1.msra.mxu0 0.0
    %1866 = vmatprep.subr.mxu0 0.0
    %1867 = vmatpush1.msra.mxu0 0.0
    %1868 = vmatprep.subr.mxu0 0.0
    %1869 = vmatpush1.msra.mxu0 0.0
    %1870 = vmatprep.subr.mxu0 0.0
    %1871 = vmatpush1.msra.mxu0 0.0
    %1872 = vmatprep.subr.mxu0 0.0
    %1873 = vmatpush1.msra.mxu0 0.0
    %1874 = vmatprep.subr.mxu0 0.0
    %1875 = vmatpush1.msra.mxu0 0.0
    %1876 = vmatprep.subr.mxu0 0.0
    %1877 = vmatpush1.msra.mxu0 0.0
    %1878 = vmatprep.subr.mxu0 0.0
    %1879 = vmatpush1.msra.mxu0 0.0
    %1880 = vmatprep.subr.mxu0 0.0
    %1881 = vmatpush1.msra.mxu0 0.0
    %1882 = vmatprep.subr.mxu0 0.0
    %1883 = vmatpush1.msra.mxu0 0.0
    %1884 = vmatprep.subr.mxu0 0.0
    %1885 = vmatpush1.msra.mxu0 0.0
    %1886 = vmatprep.subr.mxu0 0.0
    %1887 = vmatpush1.msra.mxu0 0.0
    %1888 = vmatprep.subr.mxu0 0.0
    %1889 = vmatpush1.msra.mxu0 0.0
    %1890 = vmatprep.subr.mxu0 0.0
    %1891 = vmatpush1.msra.mxu0 0.0
    %1892 = vmatprep.subr.mxu0 0.0
    %1893 = vmatpush1.msra.mxu0 0.0
    %1894 = vmatprep.mubr.f32.mxu0 0.0
    %1895 = vmatmul.mubr.f32.gmra.mrb[0].mxu0 %v1825
    %v1896 = vpop.f32.mrb[0].mxu0
    %v1897 = vadd.f32 0.0, %v1896
    %v1898 = vpop.f32.mrb[0].mxu0
    %1899 = vmatprep.mubr.f32.mxu0 0.0
    %1900 = vmatmul.mubr.f32.gmra.mrb[0].mxu0 %v1828
    %v1901 = vpop.f32.mrb[0].mxu0
    %v1902 = vadd.f32 0.0, %v1901
    %v1903 = vpop.f32.mrb[0].mxu0
    %1904 = vdwg.mxu0
    %1905 = vrot.lane.b32.xlu0 %v244, 64
    %v1906 = vpop.permute.xlu0 %1905
    %1907 = vrot.lane.b32.xlu0 %v249, 64
    %v1908 = vpop.permute.xlu0 %1907
    %1909 = vrot.lane.b32.xlu0 %v254, 64
    %v1910 = vpop.permute.xlu0 %1909
    %1911 = vrot.lane.b32.xlu0 %v259, 64
    %v1912 = vpop.permute.xlu0 %1911
    %1913 = vrot.lane.b32.xlu0 %v337, 96
    %v1914 = vpop.permute.xlu0 %1913
    %v1915 = vsel %vm340, %v1906, 0
    %v1917 = vsel %vm340, %v1908, 0
    %v1919 = vsel %vm340, %v1910, 0
    %v1921 = vsel %vm340, %v1912, 0
    %v1923 = vsel %vm340, %v1914, 0
    %1925 = vmatprep.subr.mxu0 0.0
    %1926 = vmatpush1.xpose.msra.mxu0 %v1923
    %1927 = vmatprep.subr.mxu0 0.0
    %1928 = vmatpush1.xpose.msra.mxu0 0.0
    %1929 = vmatprep.subr.mxu0 0.0
    %1930 = vmatpush1.xpose.msra.mxu0 0.0
    %1931 = vmatprep.subr.mxu0 0.0
    %1932 = vmatpush1.xpose.msra.mxu0 0.0
    %1933 = vmatprep.subr.mxu0 0.0
    %1934 = vmatpush1.xpose.msra.mxu0 0.0
    %1935 = vmatprep.subr.mxu0 0.0
    %1936 = vmatpush1.xpose.msra.mxu0 0.0
    %1937 = vmatprep.subr.mxu0 0.0
    %1938 = vmatpush1.xpose.msra.mxu0 0.0
    %1939 = vmatprep.subr.mxu0 0.0
    %1940 = vmatpush1.xpose.msra.mxu0 0.0
    %1941 = vmatprep.subr.mxu0 0.0
    %1942 = vmatpush1.xpose.msra.mxu0 0.0
    %1943 = vmatprep.subr.mxu0 0.0
    %1944 = vmatpush1.xpose.msra.mxu0 0.0
    %1945 = vmatprep.subr.mxu0 0.0
    %1946 = vmatpush1.xpose.msra.mxu0 0.0
    %1947 = vmatprep.subr.mxu0 0.0
    %1948 = vmatpush1.xpose.msra.mxu0 0.0
    %1949 = vmatprep.subr.mxu0 0.0
    %1950 = vmatpush1.xpose.msra.mxu0 0.0
    %1951 = vmatprep.subr.mxu0 0.0
    %1952 = vmatpush1.xpose.msra.mxu0 0.0
    %1953 = vmatprep.subr.mxu0 0.0
    %1954 = vmatpush1.xpose.msra.mxu0 0.0
    %1955 = vmatprep.subr.mxu0 0.0
    %1956 = vmatpush1.xpose.msra.mxu0 0.0
    %1957 = vmatprep.subr.mxu0 0.0
    %1958 = vmatpush1.xpose.msra.mxu0 0.0
    %1959 = vmatprep.subr.mxu0 0.0
    %1960 = vmatpush1.xpose.msra.mxu0 0.0
    %1961 = vmatprep.subr.mxu0 0.0
    %1962 = vmatpush1.xpose.msra.mxu0 0.0
    %1963 = vmatprep.subr.mxu0 0.0
    %1964 = vmatpush1.xpose.msra.mxu0 0.0
    %1965 = vmatprep.subr.mxu0 0.0
    %1966 = vmatpush1.xpose.msra.mxu0 0.0
    %1967 = vmatprep.subr.mxu0 0.0
    %1968 = vmatpush1.xpose.msra.mxu0 0.0
    %1969 = vmatprep.subr.mxu0 0.0
    %1970 = vmatpush1.xpose.msra.mxu0 0.0
    %1971 = vmatprep.subr.mxu0 0.0
    %1972 = vmatpush1.xpose.msra.mxu0 0.0
    %1973 = vmatprep.subr.mxu0 0.0
    %1974 = vmatpush1.xpose.msra.mxu0 0.0
    %1975 = vmatprep.subr.mxu0 0.0
    %1976 = vmatpush1.xpose.msra.mxu0 0.0
    %1977 = vmatprep.subr.mxu0 0.0
    %1978 = vmatpush1.xpose.msra.mxu0 0.0
    %1979 = vmatprep.subr.mxu0 0.0
    %1980 = vmatpush1.xpose.msra.mxu0 0.0
    %1981 = vmatprep.subr.mxu0 0.0
    %1982 = vmatpush1.xpose.msra.mxu0 0.0
    %1983 = vmatprep.subr.mxu0 0.0
    %1984 = vmatpush1.xpose.msra.mxu0 0.0
    %1985 = vmatprep.subr.mxu0 0.0
    %1986 = vmatpush1.xpose.msra.mxu0 0.0
    %1987 = vmatprep.subr.mxu0 0.0
    %1988 = vmatpush1.xpose.msra.mxu0 0.0
    %1989 = vmatprep.mubr.f32.mxu0 0.0
    %1990 = vmatmul.mubr.f32.gmra.mrb[0].mxu0 %v1915
    %v1991 = vpop.f32.mrb[0].mxu0
    %v1992 = vadd.f32 0.0, %v1991
    %v1993 = vpop.f32.mrb[0].mxu0
    %1994 = vmatprep.mubr.f32.mxu0 0.0
    %1995 = vmatmul.mubr.f32.gmra.mrb[0].mxu0 %v1917
    %v1996 = vpop.f32.mrb[0].mxu0
    %v1997 = vadd.f32 0.0, %v1996
    %v1998 = vpop.f32.mrb[0].mxu0
    %1999 = vmatprep.mubr.f32.mxu0 0.0
    %2000 = vmatmul.mubr.f32.gmra.mrb[0].mxu0 %v1919
    %v2001 = vpop.f32.mrb[0].mxu0
    %v2002 = vadd.f32 0.0, %v2001
    %v2003 = vpop.f32.mrb[0].mxu0
    %2004 = vmatprep.mubr.f32.mxu0 0.0
    %2005 = vmatmul.mubr.f32.gmra.mrb[0].mxu0 %v1921
    %v2006 = vpop.f32.mrb[0].mxu0
    %v2007 = vadd.f32 0.0, %v2006
    %v2008 = vpop.f32.mrb[0].mxu0
    %2009 = vdwg.mxu0
    %v2010 = vsel %vm340, %v1992, -inf
    %2011 = vmax.xlane.f32.xlu0 %v2010
    %v2012 = vpop.xlane.xlu0 %2011
    %v2013 = vsel %vm340, %v1997, -inf
    %2014 = vmax.xlane.f32.xlu0 %v2013
    %v2015 = vpop.xlane.xlu0 %2014
    %v2016 = vsel %vm340, %v2002, -inf
    %2017 = vmax.xlane.f32.xlu0 %v2016
    %v2018 = vpop.xlane.xlu0 %2017
    %v2019 = vsel %vm340, %v2007, -inf
    %2020 = vmax.xlane.f32.xlu0 %v2019
    %v2021 = vpop.xlane.xlu0 %2020
    %v2022 = vsub.f32 %v1992, %v2012
    %v2023 = vsub.f32 %v1997, %v2015
    %v2024 = vsub.f32 %v2002, %v2018
    %v2025 = vsub.f32 %v2007, %v2021
    %v2026 = vmul.f32 %v2022, 1.442695
    %v2027 = vpow.pop %v2026
    %v2028 = vmul.f32 %v2023, 1.442695
    %v2029 = vpow.pop %v2028
    %v2030 = vmul.f32 %v2024, 1.442695
    %v2031 = vpow.pop %v2030
    %v2032 = vmul.f32 %v2025, 1.442695
    %v2033 = vpow.pop %v2032
    %v2034 = vsel %vm340, %v2027, 0.0
    %2035 = vadd.xlane.f32.xlu0 %v2034
    %v2036 = vpop.xlane.xlu0 %2035
    %v2037 = vsel %vm340, %v2029, 0.0
    %2038 = vadd.xlane.f32.xlu0 %v2037
    %v2039 = vpop.xlane.xlu0 %2038
    %v2040 = vsel %vm340, %v2031, 0.0
    %2041 = vadd.xlane.f32.xlu0 %v2040
    %v2042 = vpop.xlane.xlu0 %2041
    %v2043 = vsel %vm340, %v2033, 0.0
    %2044 = vadd.xlane.f32.xlu0 %v2043
    %v2045 = vpop.xlane.xlu0 %2044
    %v2046 = vrcp.pop %v2036
    %v2047 = vmul.f32 %v2027, %v2046
    %v2048 = vrcp.pop %v2039
    %v2049 = vmul.f32 %v2029, %v2048
    %v2050 = vrcp.pop %v2042
    %v2051 = vmul.f32 %v2031, %v2050
    %v2052 = vrcp.pop %v2045
    %v2053 = vmul.f32 %v2033, %v2052
    %v2055 = vsel %vm340, %v2047, 0
    %v2058 = vsel %vm340, %v2049, 0
    %2060 = vmatprep.subr.mxu0 0.0
    %2061 = vmatpush1.msra.mxu0 %v1897
    %2062 = vmatprep.subr.mxu0 0.0
    %2063 = vmatpush1.msra.mxu0 0.0
    %2064 = vmatprep.subr.mxu0 0.0
    %2065 = vmatpush1.msra.mxu0 0.0
    %2066 = vmatprep.subr.mxu0 0.0
    %2067 = vmatpush1.msra.mxu0 0.0
    %2068 = vmatprep.subr.mxu0 0.0
    %2069 = vmatpush1.msra.mxu0 0.0
    %2070 = vmatprep.subr.mxu0 0.0
    %2071 = vmatpush1.msra.mxu0 0.0
    %2072 = vmatprep.subr.mxu0 0.0
    %2073 = vmatpush1.msra.mxu0 0.0
    %2074 = vmatprep.subr.mxu0 0.0
    %2075 = vmatpush1.msra.mxu0 0.0
    %2076 = vmatprep.subr.mxu0 0.0
    %2077 = vmatpush1.msra.mxu0 0.0
    %2078 = vmatprep.subr.mxu0 0.0
    %2079 = vmatpush1.msra.mxu0 0.0
    %2080 = vmatprep.subr.mxu0 0.0
    %2081 = vmatpush1.msra.mxu0 0.0
    %2082 = vmatprep.subr.mxu0 0.0
    %2083 = vmatpush1.msra.mxu0 0.0
    %2084 = vmatprep.subr.mxu0 0.0
    %2085 = vmatpush1.msra.mxu0 0.0
    %2086 = vmatprep.subr.mxu0 0.0
    %2087 = vmatpush1.msra.mxu0 0.0
    %2088 = vmatprep.subr.mxu0 0.0
    %2089 = vmatpush1.msra.mxu0 0.0
    %2090 = vmatprep.subr.mxu0 0.0
    %2091 = vmatpush1.msra.mxu0 0.0
    %2092 = vmatprep.subr.mxu0 0.0
    %2093 = vmatpush1.msra.mxu0 0.0
    %2094 = vmatprep.subr.mxu0 0.0
    %2095 = vmatpush1.msra.mxu0 0.0
    %2096 = vmatprep.subr.mxu0 0.0
    %2097 = vmatpush1.msra.mxu0 0.0
    %2098 = vmatprep.subr.mxu0 0.0
    %2099 = vmatpush1.msra.mxu0 0.0
    %2100 = vmatprep.subr.mxu0 0.0
    %2101 = vmatpush1.msra.mxu0 0.0
    %2102 = vmatprep.subr.mxu0 0.0
    %2103 = vmatpush1.msra.mxu0 0.0
    %2104 = vmatprep.subr.mxu0 0.0
    %2105 = vmatpush1.msra.mxu0 0.0
    %2106 = vmatprep.subr.mxu0 0.0
    %2107 = vmatpush1.msra.mxu0 0.0
    %2108 = vmatprep.subr.mxu0 0.0
    %2109 = vmatpush1.msra.mxu0 0.0
    %2110 = vmatprep.subr.mxu0 0.0
    %2111 = vmatpush1.msra.mxu0 0.0
    %2112 = vmatprep.subr.mxu0 0.0
    %2113 = vmatpush1.msra.mxu0 0.0
    %2114 = vmatprep.subr.mxu0 0.0
    %2115 = vmatpush1.msra.mxu0 0.0
    %2116 = vmatprep.subr.mxu0 0.0
    %2117 = vmatpush1.msra.mxu0 0.0
    %2118 = vmatprep.subr.mxu0 0.0
    %2119 = vmatpush1.msra.mxu0 0.0
    %2120 = vmatprep.subr.mxu0 0.0
    %2121 = vmatpush1.msra.mxu0 0.0
    %2122 = vmatprep.subr.mxu0 0.0
    %2123 = vmatpush1.msra.mxu0 0.0
    %2124 = vmatprep.mubr.f32.mxu0 0.0
    %2125 = vmatmul.mubr.f32.gmra.mrb[0].mxu0 %v2055
    %v2126 = vpop.f32.mrb[0].mxu0
    %v2127 = vadd.f32 0.0, %v2126
    %v2128 = vpop.f32.mrb[0].mxu0
    %2129 = vmatprep.mubr.f32.mxu0 0.0
    %2130 = vmatmul.mubr.f32.gmra.mrb[0].mxu0 %v2058
    %v2131 = vpop.f32.mrb[0].mxu0
    %v2132 = vadd.f32 0.0, %v2131
    %v2133 = vpop.f32.mrb[0].mxu0
    %2134 = vdwg.mxu0
    %v2136 = vsel %vm340, %v2051, 0
    %v2139 = vsel %vm340, %v2053, 0
    %2141 = vmatprep.subr.mxu0 0.0
    %2142 = vmatpush1.msra.mxu0 %v1902
    %2143 = vmatprep.subr.mxu0 0.0
    %2144 = vmatpush1.msra.mxu0 0.0
    %2145 = vmatprep.subr.mxu0 0.0
    %2146 = vmatpush1.msra.mxu0 0.0
    %2147 = vmatprep.subr.mxu0 0.0
    %2148 = vmatpush1.msra.mxu0 0.0
    %2149 = vmatprep.subr.mxu0 0.0
    %2150 = vmatpush1.msra.mxu0 0.0
    %2151 = vmatprep.subr.mxu0 0.0
    %2152 = vmatpush1.msra.mxu0 0.0
    %2153 = vmatprep.subr.mxu0 0.0
    %2154 = vmatpush1.msra.mxu0 0.0
    %2155 = vmatprep.subr.mxu0 0.0
    %2156 = vmatpush1.msra.mxu0 0.0
    %2157 = vmatprep.subr.mxu0 0.0
    %2158 = vmatpush1.msra.mxu0 0.0
    %2159 = vmatprep.subr.mxu0 0.0
    %2160 = vmatpush1.msra.mxu0 0.0
    %2161 = vmatprep.subr.mxu0 0.0
    %2162 = vmatpush1.msra.mxu0 0.0
    %2163 = vmatprep.subr.mxu0 0.0
    %2164 = vmatpush1.msra.mxu0 0.0
    %2165 = vmatprep.subr.mxu0 0.0
    %2166 = vmatpush1.msra.mxu0 0.0
    %2167 = vmatprep.subr.mxu0 0.0
    %2168 = vmatpush1.msra.mxu0 0.0
    %2169 = vmatprep.subr.mxu0 0.0
    %2170 = vmatpush1.msra.mxu0 0.0
    %2171 = vmatprep.subr.mxu0 0.0
    %2172 = vmatpush1.msra.mxu0 0.0
    %2173 = vmatprep.subr.mxu0 0.0
    %2174 = vmatpush1.msra.mxu0 0.0
    %2175 = vmatprep.subr.mxu0 0.0
    %2176 = vmatpush1.msra.mxu0 0.0
    %2177 = vmatprep.subr.mxu0 0.0
    %2178 = vmatpush1.msra.mxu0 0.0
    %2179 = vmatprep.subr.mxu0 0.0
    %2180 = vmatpush1.msra.mxu0 0.0
    %2181 = vmatprep.subr.mxu0 0.0
    %2182 = vmatpush1.msra.mxu0 0.0
    %2183 = vmatprep.subr.mxu0 0.0
    %2184 = vmatpush1.msra.mxu0 0.0
    %2185 = vmatprep.subr.mxu0 0.0
    %2186 = vmatpush1.msra.mxu0 0.0
    %2187 = vmatprep.subr.mxu0 0.0
    %2188 = vmatpush1.msra.mxu0 0.0
    %2189 = vmatprep.subr.mxu0 0.0
    %2190 = vmatpush1.msra.mxu0 0.0
    %2191 = vmatprep.subr.mxu0 0.0
    %2192 = vmatpush1.msra.mxu0 0.0
    %2193 = vmatprep.subr.mxu0 0.0
    %2194 = vmatpush1.msra.mxu0 0.0
    %2195 = vmatprep.subr.mxu0 0.0
    %2196 = vmatpush1.msra.mxu0 0.0
    %2197 = vmatprep.subr.mxu0 0.0
    %2198 = vmatpush1.msra.mxu0 0.0
    %2199 = vmatprep.subr.mxu0 0.0
    %2200 = vmatpush1.msra.mxu0 0.0
    %2201 = vmatprep.subr.mxu0 0.0
    %2202 = vmatpush1.msra.mxu0 0.0
    %2203 = vmatprep.subr.mxu0 0.0
    %2204 = vmatpush1.msra.mxu0 0.0
    %2205 = vmatprep.mubr.f32.mxu0 0.0
    %2206 = vmatmul.mubr.f32.gmra.mrb[0].mxu0 %v2136
    %v2207 = vpop.f32.mrb[0].mxu0
    %v2208 = vadd.f32 0.0, %v2207
    %v2209 = vpop.f32.mrb[0].mxu0
    %2210 = vmatprep.mubr.f32.mxu0 0.0
    %2211 = vmatmul.mubr.f32.gmra.mrb[0].mxu0 %v2139
    %v2212 = vpop.f32.mrb[0].mxu0
    %v2213 = vadd.f32 0.0, %v2212
    %v2214 = vpop.f32.mrb[0].mxu0
    %2215 = vdwg.mxu0
    %2216 = vrot.lane.b32.xlu0 %v244, 56
    %v2217 = vpop.permute.xlu0 %2216
    %2218 = vrot.lane.b32.xlu0 %v249, 56
    %v2219 = vpop.permute.xlu0 %2218
    %2220 = vrot.lane.b32.xlu0 %v254, 56
    %v2221 = vpop.permute.xlu0 %2220
    %2222 = vrot.lane.b32.xlu0 %v259, 56
    %v2223 = vpop.permute.xlu0 %2222
    %2224 = vrot.lane.b32.xlu0 %v337, 88
    %v2225 = vpop.permute.xlu0 %2224
    %v2226 = vsel %vm340, %v2217, 0
    %v2228 = vsel %vm340, %v2219, 0
    %v2230 = vsel %vm340, %v2221, 0
    %v2232 = vsel %vm340, %v2223, 0
    %v2234 = vsel %vm340, %v2225, 0
    %2236 = vmatprep.subr.mxu0 0.0
    %2237 = vmatpush1.xpose.msra.mxu0 %v2234
    %2238 = vmatprep.subr.mxu0 0.0
    %2239 = vmatpush1.xpose.msra.mxu0 0.0
    %2240 = vmatprep.subr.mxu0 0.0
    %2241 = vmatpush1.xpose.msra.mxu0 0.0
    %2242 = vmatprep.subr.mxu0 0.0
    %2243 = vmatpush1.xpose.msra.mxu0 0.0
    %2244 = vmatprep.subr.mxu0 0.0
    %2245 = vmatpush1.xpose.msra.mxu0 0.0
    %2246 = vmatprep.subr.mxu0 0.0
    %2247 = vmatpush1.xpose.msra.mxu0 0.0
    %2248 = vmatprep.subr.mxu0 0.0
    %2249 = vmatpush1.xpose.msra.mxu0 0.0
    %2250 = vmatprep.subr.mxu0 0.0
    %2251 = vmatpush1.xpose.msra.mxu0 0.0
    %2252 = vmatprep.subr.mxu0 0.0
    %2253 = vmatpush1.xpose.msra.mxu0 0.0
    %2254 = vmatprep.subr.mxu0 0.0
    %2255 = vmatpush1.xpose.msra.mxu0 0.0
    %2256 = vmatprep.subr.mxu0 0.0
    %2257 = vmatpush1.xpose.msra.mxu0 0.0
    %2258 = vmatprep.subr.mxu0 0.0
    %2259 = vmatpush1.xpose.msra.mxu0 0.0
    %2260 = vmatprep.subr.mxu0 0.0
    %2261 = vmatpush1.xpose.msra.mxu0 0.0
    %2262 = vmatprep.subr.mxu0 0.0
    %2263 = vmatpush1.xpose.msra.mxu0 0.0
    %2264 = vmatprep.subr.mxu0 0.0
    %2265 = vmatpush1.xpose.msra.mxu0 0.0
    %2266 = vmatprep.subr.mxu0 0.0
    %2267 = vmatpush1.xpose.msra.mxu0 0.0
    %2268 = vmatprep.subr.mxu0 0.0
    %2269 = vmatpush1.xpose.msra.mxu0 0.0
    %2270 = vmatprep.subr.mxu0 0.0
    %2271 = vmatpush1.xpose.msra.mxu0 0.0
    %2272 = vmatprep.subr.mxu0 0.0
    %2273 = vmatpush1.xpose.msra.mxu0 0.0
    %2274 = vmatprep.subr.mxu0 0.0
    %2275 = vmatpush1.xpose.msra.mxu0 0.0
    %2276 = vmatprep.subr.mxu0 0.0
    %2277 = vmatpush1.xpose.msra.mxu0 0.0
    %2278 = vmatprep.subr.mxu0 0.0
    %2279 = vmatpush1.xpose.msra.mxu0 0.0
    %2280 = vmatprep.subr.mxu0 0.0
    %2281 = vmatpush1.xpose.msra.mxu0 0.0
    %2282 = vmatprep.subr.mxu0 0.0
    %2283 = vmatpush1.xpose.msra.mxu0 0.0
    %2284 = vmatprep.subr.mxu0 0.0
    %2285 = vmatpush1.xpose.msra.mxu0 0.0
    %2286 = vmatprep.subr.mxu0 0.0
    %2287 = vmatpush1.xpose.msra.mxu0 0.0
    %2288 = vmatprep.subr.mxu0 0.0
    %2289 = vmatpush1.xpose.msra.mxu0 0.0
    %2290 = vmatprep.subr.mxu0 0.0
    %2291 = vmatpush1.xpose.msra.mxu0 0.0
    %2292 = vmatprep.subr.mxu0 0.0
    %2293 = vmatpush1.xpose.msra.mxu0 0.0
    %2294 = vmatprep.subr.mxu0 0.0
    %2295 = vmatpush1.xpose.msra.mxu0 0.0
    %2296 = vmatprep.subr.mxu0 0.0
    %2297 = vmatpush1.xpose.msra.mxu0 0.0
    %2298 = vmatprep.subr.mxu0 0.0
    %2299 = vmatpush1.xpose.msra.mxu0 0.0
    %2300 = vmatprep.mubr.f32.mxu0 0.0
    %2301 = vmatmul.mubr.f32.gmra.mrb[0].mxu0 %v2226
    %v2302 = vpop.f32.mrb[0].mxu0
    %v2303 = vadd.f32 0.0, %v2302
    %v2304 = vpop.f32.mrb[0].mxu0
    %2305 = vmatprep.mubr.f32.mxu0 0.0
    %2306 = vmatmul.mubr.f32.gmra.mrb[0].mxu0 %v2228
    %v2307 = vpop.f32.mrb[0].mxu0
    %v2308 = vadd.f32 0.0, %v2307
    %v2309 = vpop.f32.mrb[0].mxu0
    %2310 = vmatprep.mubr.f32.mxu0 0.0
    %2311 = vmatmul.mubr.f32.gmra.mrb[0].mxu0 %v2230
    %v2312 = vpop.f32.mrb[0].mxu0
    %v2313 = vadd.f32 0.0, %v2312
    %v2314 = vpop.f32.mrb[0].mxu0
    %2315 = vmatprep.mubr.f32.mxu0 0.0
    %2316 = vmatmul.mubr.f32.gmra.mrb[0].mxu0 %v2232
    %v2317 = vpop.f32.mrb[0].mxu0
    %v2318 = vadd.f32 0.0, %v2317
    %v2319 = vpop.f32.mrb[0].mxu0
    %2320 = vdwg.mxu0
    %v2321 = vsel %vm340, %v2303, -inf
    %2322 = vmax.xlane.f32.xlu0 %v2321
    %v2323 = vpop.xlane.xlu0 %2322
    %v2324 = vsel %vm340, %v2308, -inf
    %2325 = vmax.xlane.f32.xlu0 %v2324
    %v2326 = vpop.xlane.xlu0 %2325
    %v2327 = vsel %vm340, %v2313, -inf
    %2328 = vmax.xlane.f32.xlu0 %v2327
    %v2329 = vpop.xlane.xlu0 %2328
    %v2330 = vsel %vm340, %v2318, -inf
    %2331 = vmax.xlane.f32.xlu0 %v2330
    %v2332 = vpop.xlane.xlu0 %2331
    %v2333 = vsub.f32 %v2303, %v2323
    %v2334 = vsub.f32 %v2308, %v2326
    %v2335 = vsub.f32 %v2313, %v2329
    %v2336 = vsub.f32 %v2318, %v2332
    %v2337 = vmul.f32 %v2333, 1.442695
    %v2338 = vpow.pop %v2337
    %v2339 = vmul.f32 %v2334, 1.442695
    %v2340 = vpow.pop %v2339
    %v2341 = vmul.f32 %v2335, 1.442695
    %v2342 = vpow.pop %v2341
    %v2343 = vmul.f32 %v2336, 1.442695
    %v2344 = vpow.pop %v2343
    %v2345 = vsel %vm340, %v2338, 0.0
    %2346 = vadd.xlane.f32.xlu0 %v2345
    %v2347 = vpop.xlane.xlu0 %2346
    %v2348 = vsel %vm340, %v2340, 0.0
    %2349 = vadd.xlane.f32.xlu0 %v2348
    %v2350 = vpop.xlane.xlu0 %2349
    %v2351 = vsel %vm340, %v2342, 0.0
    %2352 = vadd.xlane.f32.xlu0 %v2351
    %v2353 = vpop.xlane.xlu0 %2352
    %v2354 = vsel %vm340, %v2344, 0.0
    %2355 = vadd.xlane.f32.xlu0 %v2354
    %v2356 = vpop.xlane.xlu0 %2355
    %v2357 = vrcp.pop %v2347
    %v2358 = vmul.f32 %v2338, %v2357
    %v2359 = vrcp.pop %v2350
    %v2360 = vmul.f32 %v2340, %v2359
    %v2361 = vrcp.pop %v2353
    %v2362 = vmul.f32 %v2342, %v2361
    %v2363 = vrcp.pop %v2356
    %v2364 = vmul.f32 %v2344, %v2363
    %2366 = vrot.lane.b32.xlu0 %v1897, 120
    %v2367 = vpop.permute.xlu0 %2366
    %v2370 = vsel %vm340, %v2358, 0
    %v2373 = vsel %vm340, %v2360, 0
    %2375 = vmatprep.subr.mxu0 0.0
    %2376 = vmatpush1.msra.mxu0 %v2367
    %2377 = vmatprep.subr.mxu0 0.0
    %2378 = vmatpush1.msra.mxu0 0.0
    %2379 = vmatprep.subr.mxu0 0.0
    %2380 = vmatpush1.msra.mxu0 0.0
    %2381 = vmatprep.subr.mxu0 0.0
    %2382 = vmatpush1.msra.mxu0 0.0
    %2383 = vmatprep.subr.mxu0 0.0
    %2384 = vmatpush1.msra.mxu0 0.0
    %2385 = vmatprep.subr.mxu0 0.0
    %2386 = vmatpush1.msra.mxu0 0.0
    %2387 = vmatprep.subr.mxu0 0.0
    %2388 = vmatpush1.msra.mxu0 0.0
    %2389 = vmatprep.subr.mxu0 0.0
    %2390 = vmatpush1.msra.mxu0 0.0
    %2391 = vmatprep.subr.mxu0 0.0
    %2392 = vmatpush1.msra.mxu0 0.0
    %2393 = vmatprep.subr.mxu0 0.0
    %2394 = vmatpush1.msra.mxu0 0.0
    %2395 = vmatprep.subr.mxu0 0.0
    %2396 = vmatpush1.msra.mxu0 0.0
    %2397 = vmatprep.subr.mxu0 0.0
    %2398 = vmatpush1.msra.mxu0 0.0
    %2399 = vmatprep.subr.mxu0 0.0
    %2400 = vmatpush1.msra.mxu0 0.0
    %2401 = vmatprep.subr.mxu0 0.0
    %2402 = vmatpush1.msra.mxu0 0.0
    %2403 = vmatprep.subr.mxu0 0.0
    %2404 = vmatpush1.msra.mxu0 0.0
    %2405 = vmatprep.subr.mxu0 0.0
    %2406 = vmatpush1.msra.mxu0 0.0
    %2407 = vmatprep.subr.mxu0 0.0
    %2408 = vmatpush1.msra.mxu0 0.0
    %2409 = vmatprep.subr.mxu0 0.0
    %2410 = vmatpush1.msra.mxu0 0.0
    %2411 = vmatprep.subr.mxu0 0.0
    %2412 = vmatpush1.msra.mxu0 0.0
    %2413 = vmatprep.subr.mxu0 0.0
    %2414 = vmatpush1.msra.mxu0 0.0
    %2415 = vmatprep.subr.mxu0 0.0
    %2416 = vmatpush1.msra.mxu0 0.0
    %2417 = vmatprep.subr.mxu0 0.0
    %2418 = vmatpush1.msra.mxu0 0.0
    %2419 = vmatprep.subr.mxu0 0.0
    %2420 = vmatpush1.msra.mxu0 0.0
    %2421 = vmatprep.subr.mxu0 0.0
    %2422 = vmatpush1.msra.mxu0 0.0
    %2423 = vmatprep.subr.mxu0 0.0
    %2424 = vmatpush1.msra.mxu0 0.0
    %2425 = vmatprep.subr.mxu0 0.0
    %2426 = vmatpush1.msra.mxu0 0.0
    %2427 = vmatprep.subr.mxu0 0.0
    %2428 = vmatpush1.msra.mxu0 0.0
    %2429 = vmatprep.subr.mxu0 0.0
    %2430 = vmatpush1.msra.mxu0 0.0
    %2431 = vmatprep.subr.mxu0 0.0
    %2432 = vmatpush1.msra.mxu0 0.0
    %2433 = vmatprep.subr.mxu0 0.0
    %2434 = vmatpush1.msra.mxu0 0.0
    %2435 = vmatprep.subr.mxu0 0.0
    %2436 = vmatpush1.msra.mxu0 0.0
    %2437 = vmatprep.subr.mxu0 0.0
    %2438 = vmatpush1.msra.mxu0 0.0
    %2439 = vmatprep.mubr.f32.mxu0 0.0
    %2440 = vmatmul.mubr.f32.gmra.mrb[0].mxu0 %v2370
    %v2441 = vpop.f32.mrb[0].mxu0
    %v2442 = vadd.f32 0.0, %v2441
    %v2443 = vpop.f32.mrb[0].mxu0
    %2444 = vmatprep.mubr.f32.mxu0 0.0
    %2445 = vmatmul.mubr.f32.gmra.mrb[0].mxu0 %v2373
    %v2446 = vpop.f32.mrb[0].mxu0
    %v2447 = vadd.f32 0.0, %v2446
    %v2448 = vpop.f32.mrb[0].mxu0
    %2449 = vdwg.mxu0
    %2451 = vrot.lane.b32.xlu0 %v1902, 120
    %v2452 = vpop.permute.xlu0 %2451
    %v2455 = vsel %vm340, %v2362, 0
    %v2458 = vsel %vm340, %v2364, 0
    %2460 = vmatprep.subr.mxu0 0.0
    %2461 = vmatpush1.msra.mxu0 %v2452
    %2462 = vmatprep.subr.mxu0 0.0
    %2463 = vmatpush1.msra.mxu0 0.0
    %2464 = vmatprep.subr.mxu0 0.0
    %2465 = vmatpush1.msra.mxu0 0.0
    %2466 = vmatprep.subr.mxu0 0.0
    %2467 = vmatpush1.msra.mxu0 0.0
    %2468 = vmatprep.subr.mxu0 0.0
    %2469 = vmatpush1.msra.mxu0 0.0
    %2470 = vmatprep.subr.mxu0 0.0
    %2471 = vmatpush1.msra.mxu0 0.0
    %2472 = vmatprep.subr.mxu0 0.0
    %2473 = vmatpush1.msra.mxu0 0.0
    %2474 = vmatprep.subr.mxu0 0.0
    %2475 = vmatpush1.msra.mxu0 0.0
    %2476 = vmatprep.subr.mxu0 0.0
    %2477 = vmatpush1.msra.mxu0 0.0
    %2478 = vmatprep.subr.mxu0 0.0
    %2479 = vmatpush1.msra.mxu0 0.0
    %2480 = vmatprep.subr.mxu0 0.0
    %2481 = vmatpush1.msra.mxu0 0.0
    %2482 = vmatprep.subr.mxu0 0.0
    %2483 = vmatpush1.msra.mxu0 0.0
    %2484 = vmatprep.subr.mxu0 0.0
    %2485 = vmatpush1.msra.mxu0 0.0
    %2486 = vmatprep.subr.mxu0 0.0
    %2487 = vmatpush1.msra.mxu0 0.0
    %2488 = vmatprep.subr.mxu0 0.0
    %2489 = vmatpush1.msra.mxu0 0.0
    %2490 = vmatprep.subr.mxu0 0.0
    %2491 = vmatpush1.msra.mxu0 0.0
    %2492 = vmatprep.subr.mxu0 0.0
    %2493 = vmatpush1.msra.mxu0 0.0
    %2494 = vmatprep.subr.mxu0 0.0
    %2495 = vmatpush1.msra.mxu0 0.0
    %2496 = vmatprep.subr.mxu0 0.0
    %2497 = vmatpush1.msra.mxu0 0.0
    %2498 = vmatprep.subr.mxu0 0.0
    %2499 = vmatpush1.msra.mxu0 0.0
    %2500 = vmatprep.subr.mxu0 0.0
    %2501 = vmatpush1.msra.mxu0 0.0
    %2502 = vmatprep.subr.mxu0 0.0
    %2503 = vmatpush1.msra.mxu0 0.0
    %2504 = vmatprep.subr.mxu0 0.0
    %2505 = vmatpush1.msra.mxu0 0.0
    %2506 = vmatprep.subr.mxu0 0.0
    %2507 = vmatpush1.msra.mxu0 0.0
    %2508 = vmatprep.subr.mxu0 0.0
    %2509 = vmatpush1.msra.mxu0 0.0
    %2510 = vmatprep.subr.mxu0 0.0
    %2511 = vmatpush1.msra.mxu0 0.0
    %2512 = vmatprep.subr.mxu0 0.0
    %2513 = vmatpush1.msra.mxu0 0.0
    %2514 = vmatprep.subr.mxu0 0.0
    %2515 = vmatpush1.msra.mxu0 0.0
    %2516 = vmatprep.subr.mxu0 0.0
    %2517 = vmatpush1.msra.mxu0 0.0
    %2518 = vmatprep.subr.mxu0 0.0
    %2519 = vmatpush1.msra.mxu0 0.0
    %2520 = vmatprep.subr.mxu0 0.0
    %2521 = vmatpush1.msra.mxu0 0.0
    %2522 = vmatprep.subr.mxu0 0.0
    %2523 = vmatpush1.msra.mxu0 0.0
    %2524 = vmatprep.mubr.f32.mxu0 0.0
    %2525 = vmatmul.mubr.f32.gmra.mrb[0].mxu0 %v2455
    %v2526 = vpop.f32.mrb[0].mxu0
    %v2527 = vadd.f32 0.0, %v2526
    %v2528 = vpop.f32.mrb[0].mxu0
    %2529 = vmatprep.mubr.f32.mxu0 0.0
    %2530 = vmatmul.mubr.f32.gmra.mrb[0].mxu0 %v2458
    %v2531 = vpop.f32.mrb[0].mxu0
    %v2532 = vadd.f32 0.0, %v2531
    %v2533 = vpop.f32.mrb[0].mxu0
    %2534 = vdwg.mxu0
    %2535 = vrot.lane.b32.xlu0 %v244, 48
    %v2536 = vpop.permute.xlu0 %2535
    %2537 = vrot.lane.b32.xlu0 %v249, 48
    %v2538 = vpop.permute.xlu0 %2537
    %2539 = vrot.lane.b32.xlu0 %v254, 48
    %v2540 = vpop.permute.xlu0 %2539
    %2541 = vrot.lane.b32.xlu0 %v259, 48
    %v2542 = vpop.permute.xlu0 %2541
    %2543 = vrot.lane.b32.xlu0 %v337, 80
    %v2544 = vpop.permute.xlu0 %2543
    %v2545 = vsel %vm340, %v2536, 0
    %v2547 = vsel %vm340, %v2538, 0
    %v2549 = vsel %vm340, %v2540, 0
    %v2551 = vsel %vm340, %v2542, 0
    %v2553 = vsel %vm340, %v2544, 0
    %2555 = vmatprep.subr.mxu0 0.0
    %2556 = vmatpush1.xpose.msra.mxu0 %v2553
    %2557 = vmatprep.subr.mxu0 0.0
    %2558 = vmatpush1.xpose.msra.mxu0 0.0
    %2559 = vmatprep.subr.mxu0 0.0
    %2560 = vmatpush1.xpose.msra.mxu0 0.0
    %2561 = vmatprep.subr.mxu0 0.0
    %2562 = vmatpush1.xpose.msra.mxu0 0.0
    %2563 = vmatprep.subr.mxu0 0.0
    %2564 = vmatpush1.xpose.msra.mxu0 0.0
    %2565 = vmatprep.subr.mxu0 0.0
    %2566 = vmatpush1.xpose.msra.mxu0 0.0
    %2567 = vmatprep.subr.mxu0 0.0
    %2568 = vmatpush1.xpose.msra.mxu0 0.0
    %2569 = vmatprep.subr.mxu0 0.0
    %2570 = vmatpush1.xpose.msra.mxu0 0.0
    %2571 = vmatprep.subr.mxu0 0.0
    %2572 = vmatpush1.xpose.msra.mxu0 0.0
    %2573 = vmatprep.subr.mxu0 0.0
    %2574 = vmatpush1.xpose.msra.mxu0 0.0
    %2575 = vmatprep.subr.mxu0 0.0
    %2576 = vmatpush1.xpose.msra.mxu0 0.0
    %2577 = vmatprep.subr.mxu0 0.0
    %2578 = vmatpush1.xpose.msra.mxu0 0.0
    %2579 = vmatprep.subr.mxu0 0.0
    %2580 = vmatpush1.xpose.msra.mxu0 0.0
    %2581 = vmatprep.subr.mxu0 0.0
    %2582 = vmatpush1.xpose.msra.mxu0 0.0
    %2583 = vmatprep.subr.mxu0 0.0
    %2584 = vmatpush1.xpose.msra.mxu0 0.0
    %2585 = vmatprep.subr.mxu0 0.0
    %2586 = vmatpush1.xpose.msra.mxu0 0.0
    %2587 = vmatprep.subr.mxu0 0.0
    %2588 = vmatpush1.xpose.msra.mxu0 0.0
    %2589 = vmatprep.subr.mxu0 0.0
    %2590 = vmatpush1.xpose.msra.mxu0 0.0
    %2591 = vmatprep.subr.mxu0 0.0
    %2592 = vmatpush1.xpose.msra.mxu0 0.0
    %2593 = vmatprep.subr.mxu0 0.0
    %2594 = vmatpush1.xpose.msra.mxu0 0.0
    %2595 = vmatprep.subr.mxu0 0.0
    %2596 = vmatpush1.xpose.msra.mxu0 0.0
    %2597 = vmatprep.subr.mxu0 0.0
    %2598 = vmatpush1.xpose.msra.mxu0 0.0
    %2599 = vmatprep.subr.mxu0 0.0
    %2600 = vmatpush1.xpose.msra.mxu0 0.0
    %2601 = vmatprep.subr.mxu0 0.0
    %2602 = vmatpush1.xpose.msra.mxu0 0.0
    %2603 = vmatprep.subr.mxu0 0.0
    %2604 = vmatpush1.xpose.msra.mxu0 0.0
    %2605 = vmatprep.subr.mxu0 0.0
    %2606 = vmatpush1.xpose.msra.mxu0 0.0
    %2607 = vmatprep.subr.mxu0 0.0
    %2608 = vmatpush1.xpose.msra.mxu0 0.0
    %2609 = vmatprep.subr.mxu0 0.0
    %2610 = vmatpush1.xpose.msra.mxu0 0.0
    %2611 = vmatprep.subr.mxu0 0.0
    %2612 = vmatpush1.xpose.msra.mxu0 0.0
    %2613 = vmatprep.subr.mxu0 0.0
    %2614 = vmatpush1.xpose.msra.mxu0 0.0
    %2615 = vmatprep.subr.mxu0 0.0
    %2616 = vmatpush1.xpose.msra.mxu0 0.0
    %2617 = vmatprep.subr.mxu0 0.0
    %2618 = vmatpush1.xpose.msra.mxu0 0.0
    %2619 = vmatprep.mubr.f32.mxu0 0.0
    %2620 = vmatmul.mubr.f32.gmra.mrb[0].mxu0 %v2545
    %v2621 = vpop.f32.mrb[0].mxu0
    %v2622 = vadd.f32 0.0, %v2621
    %v2623 = vpop.f32.mrb[0].mxu0
    %2624 = vmatprep.mubr.f32.mxu0 0.0
    %2625 = vmatmul.mubr.f32.gmra.mrb[0].mxu0 %v2547
    %v2626 = vpop.f32.mrb[0].mxu0
    %v2627 = vadd.f32 0.0, %v2626
    %v2628 = vpop.f32.mrb[0].mxu0
    %2629 = vmatprep.mubr.f32.mxu0 0.0
    %2630 = vmatmul.mubr.f32.gmra.mrb[0].mxu0 %v2549
    %v2631 = vpop.f32.mrb[0].mxu0
    %v2632 = vadd.f32 0.0, %v2631
    %v2633 = vpop.f32.mrb[0].mxu0
    %2634 = vmatprep.mubr.f32.mxu0 0.0
    %2635 = vmatmul.mubr.f32.gmra.mrb[0].mxu0 %v2551
    %v2636 = vpop.f32.mrb[0].mxu0
    %v2637 = vadd.f32 0.0, %v2636
    %v2638 = vpop.f32.mrb[0].mxu0
    %2639 = vdwg.mxu0
    %v2640 = vsel %vm340, %v2622, -inf
    %2641 = vmax.xlane.f32.xlu0 %v2640
    %v2642 = vpop.xlane.xlu0 %2641
    %v2643 = vsel %vm340, %v2627, -inf
    %2644 = vmax.xlane.f32.xlu0 %v2643
    %v2645 = vpop.xlane.xlu0 %2644
    %v2646 = vsel %vm340, %v2632, -inf
    %2647 = vmax.xlane.f32.xlu0 %v2646
    %v2648 = vpop.xlane.xlu0 %2647
    %v2649 = vsel %vm340, %v2637, -inf
    %2650 = vmax.xlane.f32.xlu0 %v2649
    %v2651 = vpop.xlane.xlu0 %2650
    %v2652 = vsub.f32 %v2622, %v2642
    %v2653 = vsub.f32 %v2627, %v2645
    %v2654 = vsub.f32 %v2632, %v2648
    %v2655 = vsub.f32 %v2637, %v2651
    %v2656 = vmul.f32 %v2652, 1.442695
    %v2657 = vpow.pop %v2656
    %v2658 = vmul.f32 %v2653, 1.442695
    %v2659 = vpow.pop %v2658
    %v2660 = vmul.f32 %v2654, 1.442695
    %v2661 = vpow.pop %v2660
    %v2662 = vmul.f32 %v2655, 1.442695
    %v2663 = vpow.pop %v2662
    %v2664 = vsel %vm340, %v2657, 0.0
    %2665 = vadd.xlane.f32.xlu0 %v2664
    %v2666 = vpop.xlane.xlu0 %2665
    %v2667 = vsel %vm340, %v2659, 0.0
    %2668 = vadd.xlane.f32.xlu0 %v2667
    %v2669 = vpop.xlane.xlu0 %2668
    %v2670 = vsel %vm340, %v2661, 0.0
    %2671 = vadd.xlane.f32.xlu0 %v2670
    %v2672 = vpop.xlane.xlu0 %2671
    %v2673 = vsel %vm340, %v2663, 0.0
    %2674 = vadd.xlane.f32.xlu0 %v2673
    %v2675 = vpop.xlane.xlu0 %2674
    %v2676 = vrcp.pop %v2666
    %v2677 = vmul.f32 %v2657, %v2676
    %v2678 = vrcp.pop %v2669
    %v2679 = vmul.f32 %v2659, %v2678
    %v2680 = vrcp.pop %v2672
    %v2681 = vmul.f32 %v2661, %v2680
    %v2682 = vrcp.pop %v2675
    %v2683 = vmul.f32 %v2663, %v2682
    %2684 = vrot.lane.b32.xlu0 %v1897, 112
    %v2685 = vpop.permute.xlu0 %2684
    %v2688 = vsel %vm340, %v2677, 0
    %v2691 = vsel %vm340, %v2679, 0
    %2693 = vmatprep.subr.mxu0 0.0
    %2694 = vmatpush1.msra.mxu0 %v2685
    %2695 = vmatprep.subr.mxu0 0.0
    %2696 = vmatpush1.msra.mxu0 0.0
    %2697 = vmatprep.subr.mxu0 0.0
    %2698 = vmatpush1.msra.mxu0 0.0
    %2699 = vmatprep.subr.mxu0 0.0
    %2700 = vmatpush1.msra.mxu0 0.0
    %2701 = vmatprep.subr.mxu0 0.0
    %2702 = vmatpush1.msra.mxu0 0.0
    %2703 = vmatprep.subr.mxu0 0.0
    %2704 = vmatpush1.msra.mxu0 0.0
    %2705 = vmatprep.subr.mxu0 0.0
    %2706 = vmatpush1.msra.mxu0 0.0
    %2707 = vmatprep.subr.mxu0 0.0
    %2708 = vmatpush1.msra.mxu0 0.0
    %2709 = vmatprep.subr.mxu0 0.0
    %2710 = vmatpush1.msra.mxu0 0.0
    %2711 = vmatprep.subr.mxu0 0.0
    %2712 = vmatpush1.msra.mxu0 0.0
    %2713 = vmatprep.subr.mxu0 0.0
    %2714 = vmatpush1.msra.mxu0 0.0
    %2715 = vmatprep.subr.mxu0 0.0
    %2716 = vmatpush1.msra.mxu0 0.0
    %2717 = vmatprep.subr.mxu0 0.0
    %2718 = vmatpush1.msra.mxu0 0.0
    %2719 = vmatprep.subr.mxu0 0.0
    %2720 = vmatpush1.msra.mxu0 0.0
    %2721 = vmatprep.subr.mxu0 0.0
    %2722 = vmatpush1.msra.mxu0 0.0
    %2723 = vmatprep.subr.mxu0 0.0
    %2724 = vmatpush1.msra.mxu0 0.0
    %2725 = vmatprep.subr.mxu0 0.0
    %2726 = vmatpush1.msra.mxu0 0.0
    %2727 = vmatprep.subr.mxu0 0.0
    %2728 = vmatpush1.msra.mxu0 0.0
    %2729 = vmatprep.subr.mxu0 0.0
    %2730 = vmatpush1.msra.mxu0 0.0
    %2731 = vmatprep.subr.mxu0 0.0
    %2732 = vmatpush1.msra.mxu0 0.0
    %2733 = vmatprep.subr.mxu0 0.0
    %2734 = vmatpush1.msra.mxu0 0.0
    %2735 = vmatprep.subr.mxu0 0.0
    %2736 = vmatpush1.msra.mxu0 0.0
    %2737 = vmatprep.subr.mxu0 0.0
    %2738 = vmatpush1.msra.mxu0 0.0
    %2739 = vmatprep.subr.mxu0 0.0
    %2740 = vmatpush1.msra.mxu0 0.0
    %2741 = vmatprep.subr.mxu0 0.0
    %2742 = vmatpush1.msra.mxu0 0.0
    %2743 = vmatprep.subr.mxu0 0.0
    %2744 = vmatpush1.msra.mxu0 0.0
    %2745 = vmatprep.subr.mxu0 0.0
    %2746 = vmatpush1.msra.mxu0 0.0
    %2747 = vmatprep.subr.mxu0 0.0
    %2748 = vmatpush1.msra.mxu0 0.0
    %2749 = vmatprep.subr.mxu0 0.0
    %2750 = vmatpush1.msra.mxu0 0.0
    %2751 = vmatprep.subr.mxu0 0.0
    %2752 = vmatpush1.msra.mxu0 0.0
    %2753 = vmatprep.subr.mxu0 0.0
    %2754 = vmatpush1.msra.mxu0 0.0
    %2755 = vmatprep.subr.mxu0 0.0
    %2756 = vmatpush1.msra.mxu0 0.0
    %2757 = vmatprep.mubr.f32.mxu0 0.0
    %2758 = vmatmul.mubr.f32.gmra.mrb[0].mxu0 %v2688
    %v2759 = vpop.f32.mrb[0].mxu0
    %v2760 = vadd.f32 0.0, %v2759
    %v2761 = vpop.f32.mrb[0].mxu0
    %2762 = vmatprep.mubr.f32.mxu0 0.0
    %2763 = vmatmul.mubr.f32.gmra.mrb[0].mxu0 %v2691
    %v2764 = vpop.f32.mrb[0].mxu0
    %v2765 = vadd.f32 0.0, %v2764
    %v2766 = vpop.f32.mrb[0].mxu0
    %2767 = vdwg.mxu0
    %2768 = vrot.lane.b32.xlu0 %v1902, 112
    %v2769 = vpop.permute.xlu0 %2768
    %v2772 = vsel %vm340, %v2681, 0
    %v2775 = vsel %vm340, %v2683, 0
    %2777 = vmatprep.subr.mxu0 0.0
    %2778 = vmatpush1.msra.mxu0 %v2769
    %2779 = vmatprep.subr.mxu0 0.0
    %2780 = vmatpush1.msra.mxu0 0.0
    %2781 = vmatprep.subr.mxu0 0.0
    %2782 = vmatpush1.msra.mxu0 0.0
    %2783 = vmatprep.subr.mxu0 0.0
    %2784 = vmatpush1.msra.mxu0 0.0
    %2785 = vmatprep.subr.mxu0 0.0
    %2786 = vmatpush1.msra.mxu0 0.0
    %2787 = vmatprep.subr.mxu0 0.0
    %2788 = vmatpush1.msra.mxu0 0.0
    %2789 = vmatprep.subr.mxu0 0.0
    %2790 = vmatpush1.msra.mxu0 0.0
    %2791 = vmatprep.subr.mxu0 0.0
    %2792 = vmatpush1.msra.mxu0 0.0
    %2793 = vmatprep.subr.mxu0 0.0
    %2794 = vmatpush1.msra.mxu0 0.0
    %2795 = vmatprep.subr.mxu0 0.0
    %2796 = vmatpush1.msra.mxu0 0.0
    %2797 = vmatprep.subr.mxu0 0.0
    %2798 = vmatpush1.msra.mxu0 0.0
    %2799 = vmatprep.subr.mxu0 0.0
    %2800 = vmatpush1.msra.mxu0 0.0
    %2801 = vmatprep.subr.mxu0 0.0
    %2802 = vmatpush1.msra.mxu0 0.0
    %2803 = vmatprep.subr.mxu0 0.0
    %2804 = vmatpush1.msra.mxu0 0.0
    %2805 = vmatprep.subr.mxu0 0.0
    %2806 = vmatpush1.msra.mxu0 0.0
    %2807 = vmatprep.subr.mxu0 0.0
    %2808 = vmatpush1.msra.mxu0 0.0
    %2809 = vmatprep.subr.mxu0 0.0
    %2810 = vmatpush1.msra.mxu0 0.0
    %2811 = vmatprep.subr.mxu0 0.0
    %2812 = vmatpush1.msra.mxu0 0.0
    %2813 = vmatprep.subr.mxu0 0.0
    %2814 = vmatpush1.msra.mxu0 0.0
    %2815 = vmatprep.subr.mxu0 0.0
    %2816 = vmatpush1.msra.mxu0 0.0
    %2817 = vmatprep.subr.mxu0 0.0
    %2818 = vmatpush1.msra.mxu0 0.0
    %2819 = vmatprep.subr.mxu0 0.0
    %2820 = vmatpush1.msra.mxu0 0.0
    %2821 = vmatprep.subr.mxu0 0.0
    %2822 = vmatpush1.msra.mxu0 0.0
    %2823 = vmatprep.subr.mxu0 0.0
    %2824 = vmatpush1.msra.mxu0 0.0
    %2825 = vmatprep.subr.mxu0 0.0
    %2826 = vmatpush1.msra.mxu0 0.0
    %2827 = vmatprep.subr.mxu0 0.0
    %2828 = vmatpush1.msra.mxu0 0.0
    %2829 = vmatprep.subr.mxu0 0.0
    %2830 = vmatpush1.msra.mxu0 0.0
    %2831 = vmatprep.subr.mxu0 0.0
    %2832 = vmatpush1.msra.mxu0 0.0
    %2833 = vmatprep.subr.mxu0 0.0
    %2834 = vmatpush1.msra.mxu0 0.0
    %2835 = vmatprep.subr.mxu0 0.0
    %2836 = vmatpush1.msra.mxu0 0.0
    %2837 = vmatprep.subr.mxu0 0.0
    %2838 = vmatpush1.msra.mxu0 0.0
    %2839 = vmatprep.subr.mxu0 0.0
    %2840 = vmatpush1.msra.mxu0 0.0
    %2841 = vmatprep.mubr.f32.mxu0 0.0
    %2842 = vmatmul.mubr.f32.gmra.mrb[0].mxu0 %v2772
    %v2843 = vpop.f32.mrb[0].mxu0
    %v2844 = vadd.f32 0.0, %v2843
    %v2845 = vpop.f32.mrb[0].mxu0
    %2846 = vmatprep.mubr.f32.mxu0 0.0
    %2847 = vmatmul.mubr.f32.gmra.mrb[0].mxu0 %v2775
    %v2848 = vpop.f32.mrb[0].mxu0
    %v2849 = vadd.f32 0.0, %v2848
    %v2850 = vpop.f32.mrb[0].mxu0
    %2851 = vdwg.mxu0
    %2852 = vrot.lane.b32.xlu0 %v244, 40
    %v2853 = vpop.permute.xlu0 %2852
    %2854 = vrot.lane.b32.xlu0 %v249, 40
    %v2855 = vpop.permute.xlu0 %2854
    %2856 = vrot.lane.b32.xlu0 %v254, 40
    %v2857 = vpop.permute.xlu0 %2856
    %2858 = vrot.lane.b32.xlu0 %v259, 40
    %v2859 = vpop.permute.xlu0 %2858
    %2860 = vrot.lane.b32.xlu0 %v337, 72
    %v2861 = vpop.permute.xlu0 %2860
    %v2862 = vsel %vm340, %v2853, 0
    %v2864 = vsel %vm340, %v2855, 0
    %v2866 = vsel %vm340, %v2857, 0
    %v2868 = vsel %vm340, %v2859, 0
    %v2870 = vsel %vm340, %v2861, 0
    %2872 = vmatprep.subr.mxu0 0.0
    %2873 = vmatpush1.xpose.msra.mxu0 %v2870
    %2874 = vmatprep.subr.mxu0 0.0
    %2875 = vmatpush1.xpose.msra.mxu0 0.0
    %2876 = vmatprep.subr.mxu0 0.0
    %2877 = vmatpush1.xpose.msra.mxu0 0.0
    %2878 = vmatprep.subr.mxu0 0.0
    %2879 = vmatpush1.xpose.msra.mxu0 0.0
    %2880 = vmatprep.subr.mxu0 0.0
    %2881 = vmatpush1.xpose.msra.mxu0 0.0
    %2882 = vmatprep.subr.mxu0 0.0
    %2883 = vmatpush1.xpose.msra.mxu0 0.0
    %2884 = vmatprep.subr.mxu0 0.0
    %2885 = vmatpush1.xpose.msra.mxu0 0.0
    %2886 = vmatprep.subr.mxu0 0.0
    %2887 = vmatpush1.xpose.msra.mxu0 0.0
    %2888 = vmatprep.subr.mxu0 0.0
    %2889 = vmatpush1.xpose.msra.mxu0 0.0
    %2890 = vmatprep.subr.mxu0 0.0
    %2891 = vmatpush1.xpose.msra.mxu0 0.0
    %2892 = vmatprep.subr.mxu0 0.0
    %2893 = vmatpush1.xpose.msra.mxu0 0.0
    %2894 = vmatprep.subr.mxu0 0.0
    %2895 = vmatpush1.xpose.msra.mxu0 0.0
    %2896 = vmatprep.subr.mxu0 0.0
    %2897 = vmatpush1.xpose.msra.mxu0 0.0
    %2898 = vmatprep.subr.mxu0 0.0
    %2899 = vmatpush1.xpose.msra.mxu0 0.0
    %2900 = vmatprep.subr.mxu0 0.0
    %2901 = vmatpush1.xpose.msra.mxu0 0.0
    %2902 = vmatprep.subr.mxu0 0.0
    %2903 = vmatpush1.xpose.msra.mxu0 0.0
    %2904 = vmatprep.subr.mxu0 0.0
    %2905 = vmatpush1.xpose.msra.mxu0 0.0
    %2906 = vmatprep.subr.mxu0 0.0
    %2907 = vmatpush1.xpose.msra.mxu0 0.0
    %2908 = vmatprep.subr.mxu0 0.0
    %2909 = vmatpush1.xpose.msra.mxu0 0.0
    %2910 = vmatprep.subr.mxu0 0.0
    %2911 = vmatpush1.xpose.msra.mxu0 0.0
    %2912 = vmatprep.subr.mxu0 0.0
    %2913 = vmatpush1.xpose.msra.mxu0 0.0
    %2914 = vmatprep.subr.mxu0 0.0
    %2915 = vmatpush1.xpose.msra.mxu0 0.0
    %2916 = vmatprep.subr.mxu0 0.0
    %2917 = vmatpush1.xpose.msra.mxu0 0.0
    %2918 = vmatprep.subr.mxu0 0.0
    %2919 = vmatpush1.xpose.msra.mxu0 0.0
    %2920 = vmatprep.subr.mxu0 0.0
    %2921 = vmatpush1.xpose.msra.mxu0 0.0
    %2922 = vmatprep.subr.mxu0 0.0
    %2923 = vmatpush1.xpose.msra.mxu0 0.0
    %2924 = vmatprep.subr.mxu0 0.0
    %2925 = vmatpush1.xpose.msra.mxu0 0.0
    %2926 = vmatprep.subr.mxu0 0.0
    %2927 = vmatpush1.xpose.msra.mxu0 0.0
    %2928 = vmatprep.subr.mxu0 0.0
    %2929 = vmatpush1.xpose.msra.mxu0 0.0
    %2930 = vmatprep.subr.mxu0 0.0
    %2931 = vmatpush1.xpose.msra.mxu0 0.0
    %2932 = vmatprep.subr.mxu0 0.0
    %2933 = vmatpush1.xpose.msra.mxu0 0.0
    %2934 = vmatprep.subr.mxu0 0.0
    %2935 = vmatpush1.xpose.msra.mxu0 0.0
    %2936 = vmatprep.mubr.f32.mxu0 0.0
    %2937 = vmatmul.mubr.f32.gmra.mrb[0].mxu0 %v2862
    %v2938 = vpop.f32.mrb[0].mxu0
    %v2939 = vadd.f32 0.0, %v2938
    %v2940 = vpop.f32.mrb[0].mxu0
    %2941 = vmatprep.mubr.f32.mxu0 0.0
    %2942 = vmatmul.mubr.f32.gmra.mrb[0].mxu0 %v2864
    %v2943 = vpop.f32.mrb[0].mxu0
    %v2944 = vadd.f32 0.0, %v2943
    %v2945 = vpop.f32.mrb[0].mxu0
    %2946 = vmatprep.mubr.f32.mxu0 0.0
    %2947 = vmatmul.mubr.f32.gmra.mrb[0].mxu0 %v2866
    %v2948 = vpop.f32.mrb[0].mxu0
    %v2949 = vadd.f32 0.0, %v2948
    %v2950 = vpop.f32.mrb[0].mxu0
    %2951 = vmatprep.mubr.f32.mxu0 0.0
    %2952 = vmatmul.mubr.f32.gmra.mrb[0].mxu0 %v2868
    %v2953 = vpop.f32.mrb[0].mxu0
    %v2954 = vadd.f32 0.0, %v2953
    %v2955 = vpop.f32.mrb[0].mxu0
    %2956 = vdwg.mxu0
    %v2957 = vsel %vm340, %v2939, -inf
    %2958 = vmax.xlane.f32.xlu0 %v2957
    %v2959 = vpop.xlane.xlu0 %2958
    %v2960 = vsel %vm340, %v2944, -inf
    %2961 = vmax.xlane.f32.xlu0 %v2960
    %v2962 = vpop.xlane.xlu0 %2961
    %v2963 = vsel %vm340, %v2949, -inf
    %2964 = vmax.xlane.f32.xlu0 %v2963
    %v2965 = vpop.xlane.xlu0 %2964
    %v2966 = vsel %vm340, %v2954, -inf
    %2967 = vmax.xlane.f32.xlu0 %v2966
    %v2968 = vpop.xlane.xlu0 %2967
    %v2969 = vsub.f32 %v2939, %v2959
    %v2970 = vsub.f32 %v2944, %v2962
    %v2971 = vsub.f32 %v2949, %v2965
    %v2972 = vsub.f32 %v2954, %v2968
    %v2973 = vmul.f32 %v2969, 1.442695
    %v2974 = vpow.pop %v2973
    %v2975 = vmul.f32 %v2970, 1.442695
    %v2976 = vpow.pop %v2975
    %v2977 = vmul.f32 %v2971, 1.442695
    %v2978 = vpow.pop %v2977
    %v2979 = vmul.f32 %v2972, 1.442695
    %v2980 = vpow.pop %v2979
    %v2981 = vsel %vm340, %v2974, 0.0
    %2982 = vadd.xlane.f32.xlu0 %v2981
    %v2983 = vpop.xlane.xlu0 %2982
    %v2984 = vsel %vm340, %v2976, 0.0
    %2985 = vadd.xlane.f32.xlu0 %v2984
    %v2986 = vpop.xlane.xlu0 %2985
    %v2987 = vsel %vm340, %v2978, 0.0
    %2988 = vadd.xlane.f32.xlu0 %v2987
    %v2989 = vpop.xlane.xlu0 %2988
    %v2990 = vsel %vm340, %v2980, 0.0
    %2991 = vadd.xlane.f32.xlu0 %v2990
    %v2992 = vpop.xlane.xlu0 %2991
    %v2993 = vrcp.pop %v2983
    %v2994 = vmul.f32 %v2974, %v2993
    %v2995 = vrcp.pop %v2986
    %v2996 = vmul.f32 %v2976, %v2995
    %v2997 = vrcp.pop %v2989
    %v2998 = vmul.f32 %v2978, %v2997
    %v2999 = vrcp.pop %v2992
    %v3000 = vmul.f32 %v2980, %v2999
    %3001 = vrot.lane.b32.xlu0 %v1897, 104
    %v3002 = vpop.permute.xlu0 %3001
    %v3005 = vsel %vm340, %v2994, 0
    %v3008 = vsel %vm340, %v2996, 0
    %3010 = vmatprep.subr.mxu0 0.0
    %3011 = vmatpush1.msra.mxu0 %v3002
    %3012 = vmatprep.subr.mxu0 0.0
    %3013 = vmatpush1.msra.mxu0 0.0
    %3014 = vmatprep.subr.mxu0 0.0
    %3015 = vmatpush1.msra.mxu0 0.0
    %3016 = vmatprep.subr.mxu0 0.0
    %3017 = vmatpush1.msra.mxu0 0.0
    %3018 = vmatprep.subr.mxu0 0.0
    %3019 = vmatpush1.msra.mxu0 0.0
    %3020 = vmatprep.subr.mxu0 0.0
    %3021 = vmatpush1.msra.mxu0 0.0
    %3022 = vmatprep.subr.mxu0 0.0
    %3023 = vmatpush1.msra.mxu0 0.0
    %3024 = vmatprep.subr.mxu0 0.0
    %3025 = vmatpush1.msra.mxu0 0.0
    %3026 = vmatprep.subr.mxu0 0.0
    %3027 = vmatpush1.msra.mxu0 0.0
    %3028 = vmatprep.subr.mxu0 0.0
    %3029 = vmatpush1.msra.mxu0 0.0
    %3030 = vmatprep.subr.mxu0 0.0
    %3031 = vmatpush1.msra.mxu0 0.0
    %3032 = vmatprep.subr.mxu0 0.0
    %3033 = vmatpush1.msra.mxu0 0.0
    %3034 = vmatprep.subr.mxu0 0.0
    %3035 = vmatpush1.msra.mxu0 0.0
    %3036 = vmatprep.subr.mxu0 0.0
    %3037 = vmatpush1.msra.mxu0 0.0
    %3038 = vmatprep.subr.mxu0 0.0
    %3039 = vmatpush1.msra.mxu0 0.0
    %3040 = vmatprep.subr.mxu0 0.0
    %3041 = vmatpush1.msra.mxu0 0.0
    %3042 = vmatprep.subr.mxu0 0.0
    %3043 = vmatpush1.msra.mxu0 0.0
    %3044 = vmatprep.subr.mxu0 0.0
    %3045 = vmatpush1.msra.mxu0 0.0
    %3046 = vmatprep.subr.mxu0 0.0
    %3047 = vmatpush1.msra.mxu0 0.0
    %3048 = vmatprep.subr.mxu0 0.0
    %3049 = vmatpush1.msra.mxu0 0.0
    %3050 = vmatprep.subr.mxu0 0.0
    %3051 = vmatpush1.msra.mxu0 0.0
    %3052 = vmatprep.subr.mxu0 0.0
    %3053 = vmatpush1.msra.mxu0 0.0
    %3054 = vmatprep.subr.mxu0 0.0
    %3055 = vmatpush1.msra.mxu0 0.0
    %3056 = vmatprep.subr.mxu0 0.0
    %3057 = vmatpush1.msra.mxu0 0.0
    %3058 = vmatprep.subr.mxu0 0.0
    %3059 = vmatpush1.msra.mxu0 0.0
    %3060 = vmatprep.subr.mxu0 0.0
    %3061 = vmatpush1.msra.mxu0 0.0
    %3062 = vmatprep.subr.mxu0 0.0
    %3063 = vmatpush1.msra.mxu0 0.0
    %3064 = vmatprep.subr.mxu0 0.0
    %3065 = vmatpush1.msra.mxu0 0.0
    %3066 = vmatprep.subr.mxu0 0.0
    %3067 = vmatpush1.msra.mxu0 0.0
    %3068 = vmatprep.subr.mxu0 0.0
    %3069 = vmatpush1.msra.mxu0 0.0
    %3070 = vmatprep.subr.mxu0 0.0
    %3071 = vmatpush1.msra.mxu0 0.0
    %3072 = vmatprep.subr.mxu0 0.0
    %3073 = vmatpush1.msra.mxu0 0.0
    %3074 = vmatprep.mubr.f32.mxu0 0.0
    %3075 = vmatmul.mubr.f32.gmra.mrb[0].mxu0 %v3005
    %v3076 = vpop.f32.mrb[0].mxu0
    %v3077 = vadd.f32 0.0, %v3076
    %v3078 = vpop.f32.mrb[0].mxu0
    %3079 = vmatprep.mubr.f32.mxu0 0.0
    %3080 = vmatmul.mubr.f32.gmra.mrb[0].mxu0 %v3008
    %v3081 = vpop.f32.mrb[0].mxu0
    %v3082 = vadd.f32 0.0, %v3081
    %v3083 = vpop.f32.mrb[0].mxu0
    %3084 = vdwg.mxu0
    %3085 = vrot.lane.b32.xlu0 %v1902, 104
    %v3086 = vpop.permute.xlu0 %3085
    %v3089 = vsel %vm340, %v2998, 0
    %v3092 = vsel %vm340, %v3000, 0
    %3094 = vmatprep.subr.mxu0 0.0
    %3095 = vmatpush1.msra.mxu0 %v3086
    %3096 = vmatprep.subr.mxu0 0.0
    %3097 = vmatpush1.msra.mxu0 0.0
    %3098 = vmatprep.subr.mxu0 0.0
    %3099 = vmatpush1.msra.mxu0 0.0
    %3100 = vmatprep.subr.mxu0 0.0
    %3101 = vmatpush1.msra.mxu0 0.0
    %3102 = vmatprep.subr.mxu0 0.0
    %3103 = vmatpush1.msra.mxu0 0.0
    %3104 = vmatprep.subr.mxu0 0.0
    %3105 = vmatpush1.msra.mxu0 0.0
    %3106 = vmatprep.subr.mxu0 0.0
    %3107 = vmatpush1.msra.mxu0 0.0
    %3108 = vmatprep.subr.mxu0 0.0
    %3109 = vmatpush1.msra.mxu0 0.0
    %3110 = vmatprep.subr.mxu0 0.0
    %3111 = vmatpush1.msra.mxu0 0.0
    %3112 = vmatprep.subr.mxu0 0.0
    %3113 = vmatpush1.msra.mxu0 0.0
    %3114 = vmatprep.subr.mxu0 0.0
    %3115 = vmatpush1.msra.mxu0 0.0
    %3116 = vmatprep.subr.mxu0 0.0
    %3117 = vmatpush1.msra.mxu0 0.0
    %3118 = vmatprep.subr.mxu0 0.0
    %3119 = vmatpush1.msra.mxu0 0.0
    %3120 = vmatprep.subr.mxu0 0.0
    %3121 = vmatpush1.msra.mxu0 0.0
    %3122 = vmatprep.subr.mxu0 0.0
    %3123 = vmatpush1.msra.mxu0 0.0
    %3124 = vmatprep.subr.mxu0 0.0
    %3125 = vmatpush1.msra.mxu0 0.0
    %3126 = vmatprep.subr.mxu0 0.0
    %3127 = vmatpush1.msra.mxu0 0.0
    %3128 = vmatprep.subr.mxu0 0.0
    %3129 = vmatpush1.msra.mxu0 0.0
    %3130 = vmatprep.subr.mxu0 0.0
    %3131 = vmatpush1.msra.mxu0 0.0
    %3132 = vmatprep.subr.mxu0 0.0
    %3133 = vmatpush1.msra.mxu0 0.0
    %3134 = vmatprep.subr.mxu0 0.0
    %3135 = vmatpush1.msra.mxu0 0.0
    %3136 = vmatprep.subr.mxu0 0.0
    %3137 = vmatpush1.msra.mxu0 0.0
    %3138 = vmatprep.subr.mxu0 0.0
    %3139 = vmatpush1.msra.mxu0 0.0
    %3140 = vmatprep.subr.mxu0 0.0
    %3141 = vmatpush1.msra.mxu0 0.0
    %3142 = vmatprep.subr.mxu0 0.0
    %3143 = vmatpush1.msra.mxu0 0.0
    %3144 = vmatprep.subr.mxu0 0.0
    %3145 = vmatpush1.msra.mxu0 0.0
    %3146 = vmatprep.subr.mxu0 0.0
    %3147 = vmatpush1.msra.mxu0 0.0
    %3148 = vmatprep.subr.mxu0 0.0
    %3149 = vmatpush1.msra.mxu0 0.0
    %3150 = vmatprep.subr.mxu0 0.0
    %3151 = vmatpush1.msra.mxu0 0.0
    %3152 = vmatprep.subr.mxu0 0.0
    %3153 = vmatpush1.msra.mxu0 0.0
    %3154 = vmatprep.subr.mxu0 0.0
    %3155 = vmatpush1.msra.mxu0 0.0
    %3156 = vmatprep.subr.mxu0 0.0
    %3157 = vmatpush1.msra.mxu0 0.0
    %3158 = vmatprep.mubr.f32.mxu0 0.0
    %3159 = vmatmul.mubr.f32.gmra.mrb[0].mxu0 %v3089
    %v3160 = vpop.f32.mrb[0].mxu0
    %v3161 = vadd.f32 0.0, %v3160
    %v3162 = vpop.f32.mrb[0].mxu0
    %3163 = vmatprep.mubr.f32.mxu0 0.0
    %3164 = vmatmul.mubr.f32.gmra.mrb[0].mxu0 %v3092
    %v3165 = vpop.f32.mrb[0].mxu0
    %v3166 = vadd.f32 0.0, %v3165
    %v3167 = vpop.f32.mrb[0].mxu0
    %3168 = vdwg.mxu0
    %3171 = vrot.lane.b32.xlu0 %v2442, 8
    %v3172 = vpop.permute.xlu0 %3171
    %3173 = vrot.lane.b32.xlu0 %v2447, 8
    %v3174 = vpop.permute.xlu0 %3173
    %3179 = vrot.lane.b32.xlu0 %v2760, 16
    %v3180 = vpop.permute.xlu0 %3179
    %3181 = vrot.lane.b32.xlu0 %v2765, 16
    %v3182 = vpop.permute.xlu0 %3181
    %3187 = vrot.lane.b32.xlu0 %v3077, 24
    %v3188 = vpop.permute.xlu0 %3187
    %3189 = vrot.lane.b32.xlu0 %v3082, 24
    %v3190 = vpop.permute.xlu0 %3189
    %v3193 = vsel %vm340, %v2127, %v3172
    %v3194 = vsel %vm340, %v2132, %v3174
    %v3195 = vsel %vm420, %v3193, %v3180
    %v3196 = vsel %vm420, %v3194, %v3182
    %v3197 = vsel %vm1041, %v3195, %v3188
    %v3198 = vsel %vm1041, %v3196, %v3190
    %3201 = vrot.lane.b32.xlu0 %v2527, 8
    %v3202 = vpop.permute.xlu0 %3201
    %3203 = vrot.lane.b32.xlu0 %v2532, 8
    %v3204 = vpop.permute.xlu0 %3203
    %3209 = vrot.lane.b32.xlu0 %v2844, 16
    %v3210 = vpop.permute.xlu0 %3209
    %3211 = vrot.lane.b32.xlu0 %v2849, 16
    %v3212 = vpop.permute.xlu0 %3211
    %3217 = vrot.lane.b32.xlu0 %v3161, 24
    %v3218 = vpop.permute.xlu0 %3217
    %3219 = vrot.lane.b32.xlu0 %v3166, 24
    %v3220 = vpop.permute.xlu0 %3219
    %v3223 = vsel %vm340, %v2208, %v3202
    %v3224 = vsel %vm340, %v2213, %v3204
    %v3225 = vsel %vm420, %v3223, %v3210
    %v3226 = vsel %vm420, %v3224, %v3212
    %v3227 = vsel %vm1041, %v3225, %v3218
    %v3228 = vsel %vm1041, %v3226, %v3220
    %v3229 = vld [vmem:[%s9] sm:$0xff]
    %v3230 = vld [vmem:[%s9 + $0x8] sm:$0xff]
    %v3231 = vld [vmem:[%s9 + $0x10] sm:$0xff]
    %v3232 = vld [vmem:[%s9 + $0x18] sm:$0xff]
    %v3233 = vld [vmem:[%s10] sm:$0x1]
    %v3235 = vlaneseq
    %v3236 = vshrl.u32 %v3235, 7
    %v3237 = vsub.s32 0, %v3236
    %v3238 = vrot.slane %v3233, %v3237
    %v3241 = vsel %vm164, %v3197, 0
    %v3244 = vsel %vm164, %v3198, 0
    %v3247 = vsel %vm164, %v3227, 0
    %v3250 = vsel %vm164, %v3228, 0
    %3252 = vmatprep.subr.mxu0 0.0
    %3253 = vmatpush1.msra.mxu0 %v3229
    %3254 = vmatprep.subr.mxu0 0.0
    %3255 = vmatpush1.msra.mxu0 %v3230
    %3256 = vmatprep.subr.mxu0 0.0
    %3257 = vmatpush1.msra.mxu0 %v3231
    %3258 = vmatprep.subr.mxu0 0.0
    %3259 = vmatpush1.msra.mxu0 %v3232
    %3260 = vmatprep.subr.mxu0 0.0
    %3261 = vmatpush1.msra.mxu0 0.0
    %3262 = vmatprep.subr.mxu0 0.0
    %3263 = vmatpush1.msra.mxu0 0.0
    %3264 = vmatprep.subr.mxu0 0.0
    %3265 = vmatpush1.msra.mxu0 0.0
    %3266 = vmatprep.subr.mxu0 0.0
    %3267 = vmatpush1.msra.mxu0 0.0
    %3268 = vmatprep.subr.mxu0 0.0
    %3269 = vmatpush1.msra.mxu0 0.0
    %3270 = vmatprep.subr.mxu0 0.0
    %3271 = vmatpush1.msra.mxu0 0.0
    %3272 = vmatprep.subr.mxu0 0.0
    %3273 = vmatpush1.msra.mxu0 0.0
    %3274 = vmatprep.subr.mxu0 0.0
    %3275 = vmatpush1.msra.mxu0 0.0
    %3276 = vmatprep.subr.mxu0 0.0
    %3277 = vmatpush1.msra.mxu0 0.0
    %3278 = vmatprep.subr.mxu0 0.0
    %3279 = vmatpush1.msra.mxu0 0.0
    %3280 = vmatprep.subr.mxu0 0.0
    %3281 = vmatpush1.msra.mxu0 0.0
    %3282 = vmatprep.subr.mxu0 0.0
    %3283 = vmatpush1.msra.mxu0 0.0
    %3284 = vmatprep.subr.mxu0 0.0
    %3285 = vmatpush1.msra.mxu0 0.0
    %3286 = vmatprep.subr.mxu0 0.0
    %3287 = vmatpush1.msra.mxu0 0.0
    %3288 = vmatprep.subr.mxu0 0.0
    %3289 = vmatpush1.msra.mxu0 0.0
    %3290 = vmatprep.subr.mxu0 0.0
    %3291 = vmatpush1.msra.mxu0 0.0
    %3292 = vmatprep.subr.mxu0 0.0
    %3293 = vmatpush1.msra.mxu0 0.0
    %3294 = vmatprep.subr.mxu0 0.0
    %3295 = vmatpush1.msra.mxu0 0.0
    %3296 = vmatprep.subr.mxu0 0.0
    %3297 = vmatpush1.msra.mxu0 0.0
    %3298 = vmatprep.subr.mxu0 0.0
    %3299 = vmatpush1.msra.mxu0 0.0
    %3300 = vmatprep.subr.mxu0 0.0
    %3301 = vmatpush1.msra.mxu0 0.0
    %3302 = vmatprep.subr.mxu0 0.0
    %3303 = vmatpush1.msra.mxu0 0.0
    %3304 = vmatprep.subr.mxu0 0.0
    %3305 = vmatpush1.msra.mxu0 0.0
    %3306 = vmatprep.subr.mxu0 0.0
    %3307 = vmatpush1.msra.mxu0 0.0
    %3308 = vmatprep.subr.mxu0 0.0
    %3309 = vmatpush1.msra.mxu0 0.0
    %3310 = vmatprep.subr.mxu0 0.0
    %3311 = vmatpush1.msra.mxu0 0.0
    %3312 = vmatprep.subr.mxu0 0.0
    %3313 = vmatpush1.msra.mxu0 0.0
    %3314 = vmatprep.subr.mxu0 0.0
    %3315 = vmatpush1.msra.mxu0 0.0
    %3316 = vmatprep.mubr.f32.mxu0 0.0
    %3317 = vmatmul.mubr.f32.gmra.mrb[0].mxu0 %v3241
    %v3318 = vpop.f32.mrb[0].mxu0
    %v3319 = vadd.f32 %v3238, %v3318
    %v3320 = vpop.f32.mrb[0].mxu0
    %3321 = vmatprep.mubr.f32.mxu0 0.0
    %3322 = vmatmul.mubr.f32.gmra.mrb[0].mxu0 %v3244
    %v3323 = vpop.f32.mrb[0].mxu0
    %v3324 = vadd.f32 %v3238, %v3323
    %v3325 = vpop.f32.mrb[0].mxu0
    %3326 = vmatprep.mubr.f32.mxu0 0.0
    %3327 = vmatmul.mubr.f32.gmra.mrb[0].mxu0 %v3247
    %v3328 = vpop.f32.mrb[0].mxu0
    %v3329 = vadd.f32 %v3238, %v3328
    %v3330 = vpop.f32.mrb[0].mxu0
    %3331 = vmatprep.mubr.f32.mxu0 0.0
    %3332 = vmatmul.mubr.f32.gmra.mrb[0].mxu0 %v3250
    %v3333 = vpop.f32.mrb[0].mxu0
    %v3334 = vadd.f32 %v3238, %v3333
    %v3335 = vpop.f32.mrb[0].mxu0
    %3336 = vdwg.mxu0
    %3337 = vst.msk [vmem:[#allocation2] sm:$0xff] %vm164, %v3319
    %3338 = vst.msk [vmem:[#allocation2 + $0x8] sm:$0xff] %vm164, %v3324
    %3339 = vst.msk [vmem:[#allocation2 + $0x10] sm:$0xff] %vm164, %v3329
    %3340 = vst.msk [vmem:[#allocation2 + $0x18] sm:$0xff] %vm164, %v3334
    // Predicated region
    $region46: #{conv_factor_self_attention.1} parent=1 // pred_check
      _
    $region47: #{conv_factor_self_attention.1} parent=1 // pred_check_branch
      %3342 = sbr.rel (0) target = $region49
    $region48: #{conv_factor_self_attention.1} parent=1 // pred_region
      %s3344 = ssub.s32 512, 512
      %3345 = vsyncadd [#allocation3], %s3344
      %s3346 = sshll.u32 [#allocation2], 4
      %s3347 = int_to_ptr.vmem [resolvable:$true] %s3346
      %3352 = dma.vmem_to_hbm [thread:$0]  %s3347, 512, %s11, [#allocation3], 128, 128, 8
    $region49: #{conv_factor_self_attention.1} parent=1 // pred_fallthru
      _
    // Predicated region
    $region50: #{conv_factor_self_attention.1} parent=1 // pred_check
      _
    $region51: #{conv_factor_self_attention.1} parent=1 // pred_check_branch
      %3354 = sbr.rel (0) target = $region53
    $region52: #{conv_factor_self_attention.1} parent=1 // pred_region
      %3355 = dma.done [#allocation3], 512
    $region53: #{conv_factor_self_attention.1} parent=1 // pred_fallthru
      _
    %3356 = vsyncpa [#allocation3], 1

</llo_original>
